<compile_context>
chip_gen: v5e
topology: v5e:2x2
jax: 0.10.0
libtpu: 0.0.40
codegen_flags: <defaults>
</compile_context>

<pallas_src>
import functools

import jax
import jax.numpy as jnp
import numpy as np
from jax import lax
from jax.experimental import pallas as pl
from jax.experimental.pallas import tpu as pltpu


def _powerful_layer_kernel(*refs, num_layers, n, a, b, k_chunk):
    # refs (order mirrors the wrapper's `inputs` list):
    #   x_ref (1, N*N, a)
    #   [L>=2] w0_ref   (a, 2b)        bf16  fused layer-0 weight [W1_0^T | W2_0^T]
    #   [L>=3] wmid_ref (L-2, 2b, 2b)  bf16  block-diag fused middle weights
    #   [L>=2] bpre_ref (L-1, 1, 2b)   f32   fused biases for layers 0..L-2
    #   wfin_ref (2, in_fin, b)        bf16  zero-padded final per-branch weights
    #   bfin_ref (2, 1, b)             f32
    #   w4_ref   (b + a, b)            bf16  rows: [mult half ; x half] of W4^T
    #   b4_ref   (1, b)                f32
    #   o_ref    (1, N*N, b)
    L = num_layers
    refs = list(refs)
    x_ref = refs.pop(0)
    w0_ref = refs.pop(0) if L >= 2 else None
    wmid_ref = refs.pop(0) if L >= 3 else None
    bpre_ref = refs.pop(0) if L >= 2 else None
    wfin_ref = refs.pop(0)
    bfin_ref = refs.pop(0)
    w4_ref = refs.pop(0)
    b4_ref = refs.pop(0)
    o_ref = refs.pop(0)

    f32, bf16 = jnp.float32, jnp.bfloat16

    x2d = x_ref[0].astype(f32)                                 # (M, a), M = n*n
    x_bf = x2d.astype(bf16)                                    # bf16 MXU operand

    # ---- fused m1 || m2 trunk (ReLU after every layer except the last) ----
    if L >= 2:
        h = jnp.maximum(
            jnp.dot(x_bf, w0_ref[...], preferred_element_type=f32)
            + bpre_ref[0], 0.0)                                # (M, 2b) f32
        for li in range(L - 2):                                # block-diag layers
            h = jnp.maximum(
                jnp.dot(h.astype(bf16), wmid_ref[li],
                        preferred_element_type=f32)
                + bpre_ref[li + 1], 0.0)
        h_b = h.astype(bf16)                                   # (M, 2b)
    else:
        h_b = x_bf                                             # (M, a)

    # ---- final per-branch projections (zero-padded weights absorb the split) --
    h1 = (jnp.dot(h_b, wfin_ref[0], preferred_element_type=f32)
          + bfin_ref[0])                                       # (M, b) f32
    h2 = (jnp.dot(h_b, wfin_ref[1], preferred_element_type=f32)
          + bfin_ref[1])                                       # (M, b) f32

    h1_3d = h1.reshape(n, n, b)                                # leading-dim split
    h2_3d = h2.reshape(n, n, b)

    # ---- channel-wise N x N matmul: mult[i,j,c] = sum_k h1[i,k,c]*h2[k,j,c] ----
    if n >= 64:
        # Large N: channel-major MXU path (2*N^3*b FLOPs on the MXU; the two
        # transposes are amortized over O(N^3) work).
        h1_cm = jnp.transpose(h1_3d, (2, 0, 1)).astype(bf16)   # (b, n, n)
        h2_cm = jnp.transpose(h2_3d, (2, 0, 1)).astype(bf16)
        mult_cm = lax.dot_general(h1_cm, h2_cm,
                                  (((2,), (1,)), ((0,), (0,))),
                                  preferred_element_type=f32)  # (b, n, n)
        mult = jnp.transpose(mult_cm, (1, 2, 0))               # (n, n, b)
    else:
        # Small N: k-chunked VPU accumulation in f32; per-chunk temporary is
        # (n, k_chunk, n, b) instead of the previous (n, n, n, b).
        mult = jnp.zeros((n, n, b), f32)
        for k0 in range(0, n, k_chunk):
            kc = min(k_chunk, n - k0)
            mult = mult + jnp.sum(
                h1_3d[:, k0:k0 + kc, None, :] * h2_3d[None, k0:k0 + kc, :, :],
                axis=1)

    # ---- epilogue: Linear(concat([mult, x])) with split (ref-sliced) weights ----
    mult2d = mult.reshape(n * n, b)
    w4m = w4_ref[:b, :]                                        # (b, b)
    w4x = w4_ref[b:b + a, :]                                   # (a, b)
    out = (jnp.dot(mult2d.astype(bf16), w4m, preferred_element_type=f32)
           + jnp.dot(x_bf, w4x, preferred_element_type=f32)
           + b4_ref[...])                                      # (M, b) f32
    o_ref[...] = out[None].astype(o_ref.dtype)


def powerful_layer(x, m1_params, m2_params, w4, b4, *, k_chunk=8):
    """x: (B, N, N, a). Params mirror the PyTorch module:
    m{1,2}_params: list of (weight (out,in), bias (out,)) per 1x1-conv layer,
    w4: (b, a+b), b4: (b,). Returns (B, N, N, b) in x.dtype."""
    B, N, N2, a = x.shape
    assert N == N2
    L = len(m1_params)
    assert len(m2_params) == L and L >= 1
    bdim = w4.shape[0]
    assert w4.shape == (bdim, a + bdim)

    f32, bf16 = jnp.float32, jnp.bfloat16
    m1_w = [jnp.asarray(w, f32) for w, _ in m1_params]
    m1_b = [jnp.asarray(v, f32) for _, v in m1_params]
    m2_w = [jnp.asarray(w, f32) for w, _ in m2_params]
    m2_b = [jnp.asarray(v, f32) for _, v in m2_params]

    inputs, in_specs = [], []

    def add_full(arr):
        inputs.append(arr)
        shp = arr.shape
        in_specs.append(pl.BlockSpec(shp, lambda bb, _s=shp: (0,) * len(_s)))

    # x: one batch element per grid step, rows flattened so the MLP GEMMs have
    # M = N*N rows (lane padding of the a=4 minor dim is accepted; see header).
    x_flat = x.reshape(B, N * N, a)
    inputs.append(x_flat)
    in_specs.append(pl.BlockSpec((1, N * N, a), lambda bb: (bb, 0, 0)))

    # ---- fused / stacked weight packing (few large DMAs instead of 4L+4) ----
    if L >= 2:
        add_full(jnp.concatenate([m1_w[0].T, m2_w[0].T], axis=1).astype(bf16))
    if L >= 3:
        blocks = []
        for li in range(1, L - 1):
            blk = jnp.zeros((2 * bdim, 2 * bdim), f32)
            blk = blk.at[:bdim, :bdim].set(m1_w[li].T)
            blk = blk.at[bdim:, bdim:].set(m2_w[li].T)
            blocks.append(blk)
        add_full(jnp.stack(blocks).astype(bf16))                   # (L-2, 2b, 2b)
    if L >= 2:
        bpre = jnp.stack([jnp.concatenate([m1_b[li], m2_b[li]])[None, :]
                          for li in range(L - 1)])                 # (L-1, 1, 2b)
        add_full(bpre)

    if L == 1:
        wfin = jnp.stack([m1_w[0].T, m2_w[0].T])                   # (2, a, b)
    else:
        z = jnp.zeros((bdim, bdim), f32)
        wfin = jnp.stack([jnp.concatenate([m1_w[-1].T, z], axis=0),
                          jnp.concatenate([z, m2_w[-1].T], axis=0)])  # (2, 2b, b)
    add_full(wfin.astype(bf16))
    add_full(jnp.stack([m1_b[-1][None, :], m2_b[-1][None, :]]))    # (2, 1, b)

    # W4^T stacked: first b rows act on `mult`, next a rows act on `x`.
    add_full(jnp.asarray(w4, f32).T.astype(bf16))                  # (b+a, b)
    add_full(jnp.asarray(b4, f32).reshape(1, bdim))                # (1, b)

    # ---- per-step VMEM working-set estimate -> generation-aware vmem limit ----
    def rup(v, m):
        return -(-v // m) * m

    lane = 128
    itemsz = x.dtype.itemsize
    M = N * N
    x_blk = M * rup(a, lane) * itemsz
    o_blk = M * rup(bdim, lane) * itemsz
    h_tmp = 3 * M * rup(2 * bdim, lane) * 4
    mult_tmp = M * rup(bdim, lane) * 4
    if N < 64:
        chunk_tmp = N * min(k_chunk, N) * N * rup(bdim, lane) * 4
    else:
        chunk_tmp = 3 * bdim * N * rup(N, lane) * 4
    w_bytes = sum(int(np.prod(arr.shape)) * arr.dtype.itemsize * 2
                  for arr in inputs[1:])
    working = 2 * (x_blk + o_blk) + h_tmp + mult_tmp + chunk_tmp + w_bytes

    cap = 48 * 1024 * 1024                       # v7x-safe default (64 MiB VMEM)
    try:
        if pltpu.get_tpu_info().vmem_capacity_bytes >= 128 * 1024 * 1024:
            cap = 100 * 1024 * 1024              # v5e / v6e: allow larger blocks
    except Exception:
        pass
    vmem_limit = int(min(max(2 * working, 32 * 1024 * 1024), cap))

    # ---- advisory cost estimate for the XLA scheduler ----
    in_fin = a if L == 1 else 2 * bdim
    flops_per_batch = (
        (2 * M * a * 2 * bdim if L >= 2 else 0)
        + 2 * M * (2 * bdim) * (2 * bdim) * max(L - 2, 0)
        + 2 * 2 * M * in_fin * bdim
        + 2 * N * N * N * bdim
        + 2 * M * (bdim + a) * bdim)
    bytes_accessed = (int(x_flat.size) * itemsz + B * M * bdim * itemsz
                      + sum(int(np.prod(arr.shape)) * arr.dtype.itemsize
                            for arr in inputs[1:]))

    kernel = functools.partial(_powerful_layer_kernel, num_layers=L, n=N,
                               a=a, b=bdim, k_chunk=k_chunk)

    out_flat = pl.pallas_call(
        kernel,
        out_shape=jax.ShapeDtypeStruct((B, N * N, bdim), x.dtype),
        grid_spec=pltpu.PrefetchScalarGridSpec(
            num_scalar_prefetch=0,
            grid=(B,),
            in_specs=in_specs,
            out_specs=pl.BlockSpec((1, N * N, bdim), lambda bb: (bb, 0, 0)),
        ),
        compiler_params=pltpu.CompilerParams(
            dimension_semantics=("parallel",),    # megacore sharding over batch
            vmem_limit_bytes=vmem_limit,
        ),
        cost_estimate=pl.CostEstimate(flops=int(B * flops_per_batch),
                                      transcendentals=0,
                                      bytes_accessed=int(bytes_accessed)),
    )(*inputs)

    return out_flat.reshape(B, N, N, bdim)


def powerful_layer_ref(x, m1_params, m2_params, w4, b4):
    """Plain-JAX f32 reference mirroring the PyTorch forward."""
    x = jnp.asarray(x, jnp.float32)

    def mlp(params, h):
        for i, (w, bias) in enumerate(params):
            h = h @ w.T + bias
            if i < len(params) - 1:
                h = jax.nn.relu(h)
        return h

    h1 = mlp(m1_params, x)                                    # (B, N, N, b)
    h2 = mlp(m2_params, x)
    mult = jnp.einsum('bikc,bkjc->bijc', h1, h2,
                      precision=jax.lax.Precision.HIGHEST)
    out = jnp.concatenate([mult, x], axis=-1)
    return out @ w4.T + b4


if __name__ == "__main__":
    B, N, in_feat, out_feat, num_layers = 2, 16, 4, 32, 2
    keys = iter(jax.random.split(jax.random.PRNGKey(0), 12))

    def rnd(shape, scale=0.1):
        return scale * jax.random.normal(next(keys), shape, dtype=jnp.float32)

    x = jax.random.normal(next(keys), (B, N, N, in_feat), dtype=jnp.float32)

    # 1x1 Conv2d == pointwise Linear: weight (out, in), bias (out,)
    m1_params = [(rnd((out_feat, in_feat)), rnd((out_feat,))),
                 (rnd((out_feat, out_feat)), rnd((out_feat,)))]
    m2_params = [(rnd((out_feat, in_feat)), rnd((out_feat,))),
                 (rnd((out_feat, out_feat)), rnd((out_feat,)))]
    w4 = rnd((out_feat, in_feat + out_feat))
    b4 = rnd((out_feat,))

    out = powerful_layer(x, m1_params, m2_params, w4, b4)
    out = jax.block_until_ready(out)

    ref = powerful_layer_ref(x, m1_params, m2_params, w4, b4)
    # bf16 MXU operands with f32 accumulation -> tolerance loosened accordingly.
    np.testing.assert_allclose(np.asarray(out), np.asarray(ref),
                               rtol=2e-2, atol=1e-2)
    print("KERNEL_OK")
</pallas_src>

<mosaic_0001>
module attributes {stable_mosaic.version = 11 : i64} {
  func.func @_powerful_layer_kernel(%arg0: i32, %arg1: memref<1x256x4xf32, #tpu.memory_space<vmem>>, %arg2: memref<4x64xbf16, #tpu.memory_space<vmem>>, %arg3: memref<1x1x64xf32, #tpu.memory_space<vmem>>, %arg4: memref<2x64x32xbf16, #tpu.memory_space<vmem>>, %arg5: memref<2x1x32xf32, #tpu.memory_space<vmem>>, %arg6: memref<36x32xbf16, #tpu.memory_space<vmem>>, %arg7: memref<1x32xf32, #tpu.memory_space<vmem>>, %arg8: memref<1x256x32xf32, #tpu.memory_space<vmem>>) attributes {dimension_semantics = [#tpu.dimension_semantics<parallel>], iteration_bounds = array<i64: 2>, scalar_prefetch = 0 : i64, scratch_operands = 0 : i64, tpu.core_type = #tpu.core_type<tc>, window_params = [{transform_indices = @transform_0, window_bounds = array<i64: 1, 256, 4>}, {pipeline_mode = #tpu.pipeline_mode<synchronous>, transform_indices = @transform_1, window_bounds = array<i64: 4, 64>}, {pipeline_mode = #tpu.pipeline_mode<synchronous>, transform_indices = @transform_2, window_bounds = array<i64: 1, 1, 64>}, {pipeline_mode = #tpu.pipeline_mode<synchronous>, transform_indices = @transform_3, window_bounds = array<i64: 2, 64, 32>}, {pipeline_mode = #tpu.pipeline_mode<synchronous>, transform_indices = @transform_4, window_bounds = array<i64: 2, 1, 32>}, {pipeline_mode = #tpu.pipeline_mode<synchronous>, transform_indices = @transform_5, window_bounds = array<i64: 36, 32>}, {pipeline_mode = #tpu.pipeline_mode<synchronous>, transform_indices = @transform_6, window_bounds = array<i64: 1, 32>}, {transform_indices = @transform_7, window_bounds = array<i64: 1, 256, 32>}]} {
    %c0 = arith.constant 0 : index
    %c0_0 = arith.constant 0 : index
    %c0_1 = arith.constant 0 : index
    %0 = vector.load %arg1[%c0, %c0_0, %c0_1] : memref<1x256x4xf32, #tpu.memory_space<vmem>>, vector<1x256x4xf32>
    %1 = vector.shape_cast %0 : vector<1x256x4xf32> to vector<256x4xf32>
    %2 = arith.truncf %1 : vector<256x4xf32> to vector<256x4xbf16>
    %c0_2 = arith.constant 0 : index
    %c0_3 = arith.constant 0 : index
    %3 = vector.load %arg2[%c0_2, %c0_3] : memref<4x64xbf16, #tpu.memory_space<vmem>>, vector<4x64xbf16>
    %cst = arith.constant dense<0.000000e+00> : vector<256x64xf32>
    %4 = tpu.matmul %2, %3, %cst {dimension_numbers = #tpu.dot_dimension_numbers<[1], [0], [0], [1], [0, 0, 1, 1], [], []>} : vector<256x4xbf16>, vector<4x64xbf16>, vector<256x64xf32> -> vector<256x64xf32>
    %c0_4 = arith.constant 0 : index
    %c0_5 = arith.constant 0 : index
    %c0_6 = arith.constant 0 : index
    %5 = vector.load %arg3[%c0_4, %c0_5, %c0_6] : memref<1x1x64xf32, #tpu.memory_space<vmem>>, vector<1x1x64xf32>
    %6 = vector.shape_cast %5 : vector<1x1x64xf32> to vector<1x64xf32>
    %7 = vector.broadcast %6 : vector<1x64xf32> to vector<256x64xf32>
    %8 = arith.addf %4, %7 : vector<256x64xf32>
    %cst_7 = arith.constant 0.000000e+00 : f32
    %9 = vector.broadcast %cst_7 : f32 to vector<256x64xf32>
    %10 = arith.maximumf %8, %9 : vector<256x64xf32>
    %11 = arith.truncf %10 : vector<256x64xf32> to vector<256x64xbf16>
    %c0_8 = arith.constant 0 : index
    %c0_9 = arith.constant 0 : index
    %c0_10 = arith.constant 0 : index
    %12 = vector.load %arg4[%c0_8, %c0_9, %c0_10] : memref<2x64x32xbf16, #tpu.memory_space<vmem>>, vector<1x64x32xbf16>
    %13 = vector.shape_cast %12 : vector<1x64x32xbf16> to vector<64x32xbf16>
    %cst_11 = arith.constant dense<0.000000e+00> : vector<256x32xf32>
    %14 = tpu.matmul %11, %13, %cst_11 {dimension_numbers = #tpu.dot_dimension_numbers<[1], [0], [0], [1], [0, 0, 1, 1], [], []>} : vector<256x64xbf16>, vector<64x32xbf16>, vector<256x32xf32> -> vector<256x32xf32>
    %c0_12 = arith.constant 0 : index
    %c0_13 = arith.constant 0 : index
    %c0_14 = arith.constant 0 : index
    %15 = vector.load %arg5[%c0_12, %c0_13, %c0_14] : memref<2x1x32xf32, #tpu.memory_space<vmem>>, vector<1x1x32xf32>
    %16 = vector.shape_cast %15 : vector<1x1x32xf32> to vector<1x32xf32>
    %17 = vector.broadcast %16 : vector<1x32xf32> to vector<256x32xf32>
    %18 = arith.addf %14, %17 : vector<256x32xf32>
    %c1 = arith.constant 1 : index
    %c0_15 = arith.constant 0 : index
    %c0_16 = arith.constant 0 : index
    %19 = vector.load %arg4[%c1, %c0_15, %c0_16] : memref<2x64x32xbf16, #tpu.memory_space<vmem>>, vector<1x64x32xbf16>
    %20 = vector.shape_cast %19 : vector<1x64x32xbf16> to vector<64x32xbf16>
    %cst_17 = arith.constant dense<0.000000e+00> : vector<256x32xf32>
    %21 = tpu.matmul %11, %20, %cst_17 {dimension_numbers = #tpu.dot_dimension_numbers<[1], [0], [0], [1], [0, 0, 1, 1], [], []>} : vector<256x64xbf16>, vector<64x32xbf16>, vector<256x32xf32> -> vector<256x32xf32>
    %c1_18 = arith.constant 1 : index
    %c0_19 = arith.constant 0 : index
    %c0_20 = arith.constant 0 : index
    %22 = vector.load %arg5[%c1_18, %c0_19, %c0_20] : memref<2x1x32xf32, #tpu.memory_space<vmem>>, vector<1x1x32xf32>
    %23 = vector.shape_cast %22 : vector<1x1x32xf32> to vector<1x32xf32>
    %24 = vector.broadcast %23 : vector<1x32xf32> to vector<256x32xf32>
    %25 = arith.addf %21, %24 : vector<256x32xf32>
    %26 = vector.shape_cast %18 : vector<256x32xf32> to vector<16x16x32xf32>
    %27 = vector.shape_cast %25 : vector<256x32xf32> to vector<16x16x32xf32>
    %cst_21 = arith.constant 0.000000e+00 : f32
    %28 = vector.broadcast %cst_21 : f32 to vector<16x16x32xf32>
    %29 = vector.extract_strided_slice %26 {offsets = [0, 0, 0], sizes = [16, 8, 32], strides = [1, 1, 1]} : vector<16x16x32xf32> to vector<16x8x32xf32>
    %30 = vector.shape_cast %29 : vector<16x8x32xf32> to vector<16x8x1x32xf32>
    %31 = vector.extract_strided_slice %27 {offsets = [0, 0, 0], sizes = [8, 16, 32], strides = [1, 1, 1]} : vector<16x16x32xf32> to vector<8x16x32xf32>
    %32 = vector.shape_cast %31 : vector<8x16x32xf32> to vector<1x8x16x32xf32>
    %33 = vector.broadcast %30 : vector<16x8x1x32xf32> to vector<16x8x16x32xf32>
    %34 = vector.broadcast %32 : vector<1x8x16x32xf32> to vector<16x8x16x32xf32>
    %35 = arith.mulf %33, %34 : vector<16x8x16x32xf32>
    %cst_22 = arith.constant dense<0.000000e+00> : vector<16x16x32xf32>
    %36 = vector.multi_reduction <add>, %35, %cst_22 [1] : vector<16x8x16x32xf32> to vector<16x16x32xf32>
    %37 = arith.addf %28, %36 : vector<16x16x32xf32>
    %38 = vector.extract_strided_slice %26 {offsets = [0, 8, 0], sizes = [16, 8, 32], strides = [1, 1, 1]} : vector<16x16x32xf32> to vector<16x8x32xf32>
    %39 = vector.shape_cast %38 : vector<16x8x32xf32> to vector<16x8x1x32xf32>
    %40 = vector.extract_strided_slice %27 {offsets = [8, 0, 0], sizes = [8, 16, 32], strides = [1, 1, 1]} : vector<16x16x32xf32> to vector<8x16x32xf32>
    %41 = vector.shape_cast %40 : vector<8x16x32xf32> to vector<1x8x16x32xf32>
    %42 = vector.broadcast %39 : vector<16x8x1x32xf32> to vector<16x8x16x32xf32>
    %43 = vector.broadcast %41 : vector<1x8x16x32xf32> to vector<16x8x16x32xf32>
    %44 = arith.mulf %42, %43 : vector<16x8x16x32xf32>
    %cst_23 = arith.constant dense<0.000000e+00> : vector<16x16x32xf32>
    %45 = vector.multi_reduction <add>, %44, %cst_23 [1] : vector<16x8x16x32xf32> to vector<16x16x32xf32>
    %46 = arith.addf %37, %45 : vector<16x16x32xf32>
    %47 = vector.shape_cast %46 : vector<16x16x32xf32> to vector<256x32xf32>
    %c0_24 = arith.constant 0 : index
    %c0_25 = arith.constant 0 : index
    %48 = vector.load %arg6[%c0_24, %c0_25] : memref<36x32xbf16, #tpu.memory_space<vmem>>, vector<32x32xbf16>
    %c32 = arith.constant 32 : index
    %c0_26 = arith.constant 0 : index
    %49 = vector.load %arg6[%c32, %c0_26] : memref<36x32xbf16, #tpu.memory_space<vmem>>, vector<4x32xbf16>
    %50 = arith.truncf %47 : vector<256x32xf32> to vector<256x32xbf16>
    %cst_27 = arith.constant dense<0.000000e+00> : vector<256x32xf32>
    %51 = tpu.matmul %50, %48, %cst_27 {dimension_numbers = #tpu.dot_dimension_numbers<[1], [0], [0], [1], [0, 0, 1, 1], [], []>} : vector<256x32xbf16>, vector<32x32xbf16>, vector<256x32xf32> -> vector<256x32xf32>
    %cst_28 = arith.constant dense<0.000000e+00> : vector<256x32xf32>
    %52 = tpu.matmul %2, %49, %cst_28 {dimension_numbers = #tpu.dot_dimension_numbers<[1], [0], [0], [1], [0, 0, 1, 1], [], []>} : vector<256x4xbf16>, vector<4x32xbf16>, vector<256x32xf32> -> vector<256x32xf32>
    %53 = arith.addf %51, %52 : vector<256x32xf32>
    %c0_29 = arith.constant 0 : index
    %c0_30 = arith.constant 0 : index
    %54 = vector.load %arg7[%c0_29, %c0_30] : memref<1x32xf32, #tpu.memory_space<vmem>>, vector<1x32xf32>
    %55 = vector.broadcast %54 : vector<1x32xf32> to vector<256x32xf32>
    %56 = arith.addf %53, %55 : vector<256x32xf32>
    %57 = vector.shape_cast %56 : vector<256x32xf32> to vector<1x256x32xf32>
    %c0_31 = arith.constant 0 : index
    %c0_32 = arith.constant 0 : index
    %c0_33 = arith.constant 0 : index
    %58 = vector.load %arg8[%c0_31, %c0_32, %c0_33] : memref<1x256x32xf32, #tpu.memory_space<vmem>>, vector<1x256x32xf32>
    tpu.vector_store %arg8[%c0_31, %c0_32, %c0_33], %57 {strides = array<i32>} : memref<1x256x32xf32, #tpu.memory_space<vmem>>, vector<1x256x32xf32>,
    return
  }
  func.func @transform_0(%arg0: i32) -> (i32, i32, i32) {
    %c0_i32 = arith.constant 0 : i32
    %c0_i32_0 = arith.constant 0 : i32
    %c0_i32_1 = arith.constant 0 : i32
    return %arg0, %c0_i32, %c0_i32_0 : i32, i32, i32
  }
  func.func @transform_1(%arg0: i32) -> (i32, i32) {
    %c0_i32 = arith.constant 0 : i32
    %c0_i32_0 = arith.constant 0 : i32
    %c0_i32_1 = arith.constant 0 : i32
    return %c0_i32, %c0_i32_0 : i32, i32
  }
  func.func @transform_2(%arg0: i32) -> (i32, i32, i32) {
    %c0_i32 = arith.constant 0 : i32
    %c0_i32_0 = arith.constant 0 : i32
    %c0_i32_1 = arith.constant 0 : i32
    %c0_i32_2 = arith.constant 0 : i32
    return %c0_i32, %c0_i32_0, %c0_i32_1 : i32, i32, i32
  }
  func.func @transform_3(%arg0: i32) -> (i32, i32, i32) {
    %c0_i32 = arith.constant 0 : i32
    %c0_i32_0 = arith.constant 0 : i32
    %c0_i32_1 = arith.constant 0 : i32
    %c0_i32_2 = arith.constant 0 : i32
    return %c0_i32, %c0_i32_0, %c0_i32_1 : i32, i32, i32
  }
  func.func @transform_4(%arg0: i32) -> (i32, i32, i32) {
    %c0_i32 = arith.constant 0 : i32
    %c0_i32_0 = arith.constant 0 : i32
    %c0_i32_1 = arith.constant 0 : i32
    %c0_i32_2 = arith.constant 0 : i32
    return %c0_i32, %c0_i32_0, %c0_i32_1 : i32, i32, i32
  }
  func.func @transform_5(%arg0: i32) -> (i32, i32) {
    %c0_i32 = arith.constant 0 : i32
    %c0_i32_0 = arith.constant 0 : i32
    %c0_i32_1 = arith.constant 0 : i32
    return %c0_i32, %c0_i32_0 : i32, i32
  }
  func.func @transform_6(%arg0: i32) -> (i32, i32) {
    %c0_i32 = arith.constant 0 : i32
    %c0_i32_0 = arith.constant 0 : i32
    %c0_i32_1 = arith.constant 0 : i32
    return %c0_i32, %c0_i32_0 : i32, i32
  }
  func.func @transform_7(%arg0: i32) -> (i32, i32, i32) {
    %c0_i32 = arith.constant 0 : i32
    %c0_i32_0 = arith.constant 0 : i32
    %c0_i32_1 = arith.constant 0 : i32
    return %arg0, %c0_i32, %c0_i32_0 : i32, i32, i32
  }
}

</mosaic_0001>

<llo_original>
// kernel: tpu_custom_call.1
$region0: #{tpu_custom_call.1}
  #allocation0 [shape = 'u32[]', space=smem, size = 0x4, offset = 0x4, fixed_abs, tag = 'smem constant byte address 0x4 - core index']
  #allocation1 [shape = 'u32[72,128]{1,0:T(1,128)}', space=vmem, size = 0x9000, scoped, tag = 'internal scratch']
  %s0 = inlined_call_operand.vmem [shape: f32[2,256,4], index: 0, kind: input, shape index: {}]
  %s1 = inlined_call_operand.vmem [shape: bf16[4,64], index: 1, kind: input, shape index: {}]
  %s2 = inlined_call_operand.vmem [shape: f32[1,1,64], index: 2, kind: input, shape index: {}]
  %s3 = inlined_call_operand.vmem [shape: bf16[2,64,32], index: 3, kind: input, shape index: {}]
  %s4 = inlined_call_operand.vmem [shape: f32[2,1,32], index: 4, kind: input, shape index: {}]
  %s5 = inlined_call_operand.vmem [shape: bf16[36,32], index: 5, kind: input, shape index: {}]
  %s6 = inlined_call_operand.vmem [shape: f32[1,32], index: 6, kind: input, shape index: {}]
  %s7 = inlined_call_operand.vmem [shape: f32[2,256,32], index: 7, kind: output, shape index: {}]
  %s8 = sld [smem:[#allocation0]]
  $region61: #{tpu_custom_call.1} parent=0
    _
  %s10 = ssub.s32 1, %s8
  %s11 = scalar_select 0, %s10, %s8
  loop: start=0, step=1, limit=4
  $region2: #{tpu_custom_call.1} parent=0 // loop_pre_header
    _
  $region3: #{tpu_custom_call.1} parent=0 // loop_header
    %s13 = sphi 0, %s17
    %p14 = scmp.ge.s32.totalorder %s13, 4
    %s23 = sphi 0, %s25
    %s26 = sphi 0, %s23
    %s27 = sphi 0, %s26
    %s43 = sphi 0, %s27
    %s47 = sphi 0, %s47
    %s49 = sphi 0, %s47
    %s50 = sphi 0, %s49
    %s64 = sphi 0, %s50
    %s68 = sphi 0, %s68
    %s70 = sphi 0, %s68
    %s71 = sphi 0, %s70
    %s85 = sphi 0, %s71
    %s89 = sphi 0, %s89
    %s91 = sphi 0, %s89
    %s92 = sphi 0, %s91
    %s106 = sphi 0, %s92
    %s110 = sphi 0, %s110
    %s112 = sphi 0, %s110
    %s113 = sphi 0, %s112
    %s127 = sphi 0, %s113
    %s131 = sphi 0, %s131
    %s133 = sphi 0, %s131
    %s134 = sphi 0, %s133
    %s148 = sphi 0, %s134
    %s152 = sphi 0, %s152
    %s154 = sphi 0, %s152
    %s155 = sphi 0, %s154
    %s169 = sphi 0, %s155
    %s175 = sphi 0, %s177
    %s178 = sphi 0, %s175
    %s179 = sphi 0, %s178
    %s195 = sphi 0, %s179
  $region4: #{tpu_custom_call.1} parent=0 // loop_header_branch
    %16 = sbr.rel (%p14) target = $region8
  $region5: #{tpu_custom_call.1} parent=0 // loop_body
    %s18 = ssub.s32 %s13, 1
    %s19 = ssub.s32 %s13, 2
    %s20 = sadd.s32 %s13, 1
    %s21 = ssub.s32 %s13, %s20
    %p22 = scmp.eq.s32.totalorder %s21, 0
    %s24 = sadd.s32 %s23, 1
    %s25 = scalar_select %p22, %s23, %s24
    %p28 = pneg %p22
    %p29 = scmp.eq.s32.totalorder %s13, 1
    %p30 = por %p28, %p29
    %p31 = scmp.ne.s32.totalorder %s23, %s26
    %p32 = scmp.eq.s32.totalorder %s13, 0
    %p33 = por %p31, %p32
    %p34 = scmp.ne.s32.totalorder %s23, %s26
    %p35 = scmp.eq.s32.totalorder %s18, 1
    %p36 = por %p34, %p35
    %p37 = scmp.ne.s32.totalorder %s26, %s27
    %p38 = scmp.eq.s32.totalorder %s18, 0
    %p39 = por %p37, %p38
    %p40 = scmp.ne.s32.totalorder %s26, %s27
    %p41 = scmp.eq.s32.totalorder %s19, 1
    %p42 = por %p40, %p41
    %p44 = scmp.ne.s32.totalorder %s27, %s43
    %p45 = scmp.eq.s32.totalorder %s19, 0
    %p46 = por %p44, %p45
    %s48 = sadd.s32 %s47, 1
    %p51 = scmp.eq.s32.totalorder %s13, 1
    %p52 = scmp.ne.s32.totalorder %s47, %s49
    %p53 = scmp.eq.s32.totalorder %s13, 0
    %p54 = por %p52, %p53
    %p55 = scmp.ne.s32.totalorder %s47, %s49
    %p56 = scmp.eq.s32.totalorder %s18, 1
    %p57 = por %p55, %p56
    %p58 = scmp.ne.s32.totalorder %s49, %s50
    %p59 = scmp.eq.s32.totalorder %s18, 0
    %p60 = por %p58, %p59
    %p61 = scmp.ne.s32.totalorder %s49, %s50
    %p62 = scmp.eq.s32.totalorder %s19, 1
    %p63 = por %p61, %p62
    %p65 = scmp.ne.s32.totalorder %s50, %s64
    %p66 = scmp.eq.s32.totalorder %s19, 0
    %p67 = por %p65, %p66
    %s69 = sadd.s32 %s68, 1
    %p72 = scmp.eq.s32.totalorder %s13, 1
    %p73 = scmp.ne.s32.totalorder %s68, %s70
    %p74 = scmp.eq.s32.totalorder %s13, 0
    %p75 = por %p73, %p74
    %p76 = scmp.ne.s32.totalorder %s68, %s70
    %p77 = scmp.eq.s32.totalorder %s18, 1
    %p78 = por %p76, %p77
    %p79 = scmp.ne.s32.totalorder %s70, %s71
    %p80 = scmp.eq.s32.totalorder %s18, 0
    %p81 = por %p79, %p80
    %p82 = scmp.ne.s32.totalorder %s70, %s71
    %p83 = scmp.eq.s32.totalorder %s19, 1
    %p84 = por %p82, %p83
    %p86 = scmp.ne.s32.totalorder %s71, %s85
    %p87 = scmp.eq.s32.totalorder %s19, 0
    %p88 = por %p86, %p87
    %s90 = sadd.s32 %s89, 1
    %p93 = scmp.eq.s32.totalorder %s13, 1
    %p94 = scmp.ne.s32.totalorder %s89, %s91
    %p95 = scmp.eq.s32.totalorder %s13, 0
    %p96 = por %p94, %p95
    %p97 = scmp.ne.s32.totalorder %s89, %s91
    %p98 = scmp.eq.s32.totalorder %s18, 1
    %p99 = por %p97, %p98
    %p100 = scmp.ne.s32.totalorder %s91, %s92
    %p101 = scmp.eq.s32.totalorder %s18, 0
    %p102 = por %p100, %p101
    %p103 = scmp.ne.s32.totalorder %s91, %s92
    %p104 = scmp.eq.s32.totalorder %s19, 1
    %p105 = por %p103, %p104
    %p107 = scmp.ne.s32.totalorder %s92, %s106
    %p108 = scmp.eq.s32.totalorder %s19, 0
    %p109 = por %p107, %p108
    %s111 = sadd.s32 %s110, 1
    %p114 = scmp.eq.s32.totalorder %s13, 1
    %p115 = scmp.ne.s32.totalorder %s110, %s112
    %p116 = scmp.eq.s32.totalorder %s13, 0
    %p117 = por %p115, %p116
    %p118 = scmp.ne.s32.totalorder %s110, %s112
    %p119 = scmp.eq.s32.totalorder %s18, 1
    %p120 = por %p118, %p119
    %p121 = scmp.ne.s32.totalorder %s112, %s113
    %p122 = scmp.eq.s32.totalorder %s18, 0
    %p123 = por %p121, %p122
    %p124 = scmp.ne.s32.totalorder %s112, %s113
    %p125 = scmp.eq.s32.totalorder %s19, 1
    %p126 = por %p124, %p125
    %p128 = scmp.ne.s32.totalorder %s113, %s127
    %p129 = scmp.eq.s32.totalorder %s19, 0
    %p130 = por %p128, %p129
    %s132 = sadd.s32 %s131, 1
    %p135 = scmp.eq.s32.totalorder %s13, 1
    %p136 = scmp.ne.s32.totalorder %s131, %s133
    %p137 = scmp.eq.s32.totalorder %s13, 0
    %p138 = por %p136, %p137
    %p139 = scmp.ne.s32.totalorder %s131, %s133
    %p140 = scmp.eq.s32.totalorder %s18, 1
    %p141 = por %p139, %p140
    %p142 = scmp.ne.s32.totalorder %s133, %s134
    %p143 = scmp.eq.s32.totalorder %s18, 0
    %p144 = por %p142, %p143
    %p145 = scmp.ne.s32.totalorder %s133, %s134
    %p146 = scmp.eq.s32.totalorder %s19, 1
    %p147 = por %p145, %p146
    %p149 = scmp.ne.s32.totalorder %s134, %s148
    %p150 = scmp.eq.s32.totalorder %s19, 0
    %p151 = por %p149, %p150
    %s153 = sadd.s32 %s152, 1
    %p156 = scmp.eq.s32.totalorder %s13, 1
    %p157 = scmp.ne.s32.totalorder %s152, %s154
    %p158 = scmp.eq.s32.totalorder %s13, 0
    %p159 = por %p157, %p158
    %p160 = scmp.ne.s32.totalorder %s152, %s154
    %p161 = scmp.eq.s32.totalorder %s18, 1
    %p162 = por %p160, %p161
    %p163 = scmp.ne.s32.totalorder %s154, %s155
    %p164 = scmp.eq.s32.totalorder %s18, 0
    %p165 = por %p163, %p164
    %p166 = scmp.ne.s32.totalorder %s154, %s155
    %p167 = scmp.eq.s32.totalorder %s19, 1
    %p168 = por %p166, %p167
    %p170 = scmp.ne.s32.totalorder %s155, %s169
    %p171 = scmp.eq.s32.totalorder %s19, 0
    %p172 = por %p170, %p171
    %s173 = ssub.s32 %s13, %s20
    %p174 = scmp.eq.s32.totalorder %s173, 0
    %s176 = sadd.s32 %s175, 1
    %s177 = scalar_select %p174, %s175, %s176
    %p180 = pneg %p174
    %p181 = scmp.eq.s32.totalorder %s13, 1
    %p182 = por %p180, %p181
    %p183 = scmp.ne.s32.totalorder %s175, %s178
    %p184 = scmp.eq.s32.totalorder %s13, 0
    %p185 = por %p183, %p184
    %p186 = scmp.ne.s32.totalorder %s175, %s178
    %p187 = scmp.eq.s32.totalorder %s18, 1
    %p188 = por %p186, %p187
    %p189 = scmp.ne.s32.totalorder %s178, %s179
    %p190 = scmp.eq.s32.totalorder %s18, 0
    %p191 = por %p189, %p190
    %p192 = scmp.ne.s32.totalorder %s178, %s179
    %p193 = scmp.eq.s32.totalorder %s19, 1
    %p194 = por %p192, %p193
    %p196 = scmp.ne.s32.totalorder %s179, %s195
    %p197 = scmp.eq.s32.totalorder %s19, 0
    %p198 = por %p196, %p197
    %p199 = scmp.le.s32.totalorder 1, %s13
    %p200 = scmp.lt.s32.totalorder %s13, 3
    %p201 = pnand %p199, %p200
    %p202 = pneg %p201
    // Predicated region
    $region9: #{tpu_custom_call.1} parent=5 // pred_check
      _
    $region10: #{tpu_custom_call.1} parent=5 // pred_check_branch
      %204 = sbr.rel (%p201) target = $region12
    $region11: #{tpu_custom_call.1} parent=5 // pred_region
      %s205 = ssub.s32 %s13, 1
      // Predicated region
      $region13: #{tpu_custom_call.1} parent=11 // pred_check
        %p206 = pneg %p60
      $region14: #{tpu_custom_call.1} parent=11 // pred_check_branch
        %208 = sbr.rel (%p206) target = $region16
      $region15: #{tpu_custom_call.1} parent=11 // pred_region
        _
      $region16: #{tpu_custom_call.1} parent=11 // pred_fallthru
        _
      // Predicated region
      $region17: #{tpu_custom_call.1} parent=11 // pred_check
        %p209 = pneg %p81
      $region18: #{tpu_custom_call.1} parent=11 // pred_check_branch
        %211 = sbr.rel (%p209) target = $region20
      $region19: #{tpu_custom_call.1} parent=11 // pred_region
        _
      $region20: #{tpu_custom_call.1} parent=11 // pred_fallthru
        _
      // Predicated region
      $region21: #{tpu_custom_call.1} parent=11 // pred_check
        %p212 = pneg %p102
      $region22: #{tpu_custom_call.1} parent=11 // pred_check_branch
        %214 = sbr.rel (%p212) target = $region24
      $region23: #{tpu_custom_call.1} parent=11 // pred_region
        _
      $region24: #{tpu_custom_call.1} parent=11 // pred_fallthru
        _
      // Predicated region
      $region25: #{tpu_custom_call.1} parent=11 // pred_check
        %p215 = pneg %p123
      $region26: #{tpu_custom_call.1} parent=11 // pred_check_branch
        %217 = sbr.rel (%p215) target = $region28
      $region27: #{tpu_custom_call.1} parent=11 // pred_region
        _
      $region28: #{tpu_custom_call.1} parent=11 // pred_fallthru
        _
      // Predicated region
      $region29: #{tpu_custom_call.1} parent=11 // pred_check
        %p218 = pneg %p144
      $region30: #{tpu_custom_call.1} parent=11 // pred_check_branch
        %220 = sbr.rel (%p218) target = $region32
      $region31: #{tpu_custom_call.1} parent=11 // pred_region
        _
      $region32: #{tpu_custom_call.1} parent=11 // pred_fallthru
        _
      // Predicated region
      $region33: #{tpu_custom_call.1} parent=11 // pred_check
        %p221 = pneg %p165
      $region34: #{tpu_custom_call.1} parent=11 // pred_check_branch
        %223 = sbr.rel (%p221) target = $region36
      $region35: #{tpu_custom_call.1} parent=11 // pred_region
        _
      $region36: #{tpu_custom_call.1} parent=11 // pred_fallthru
        _
    $region12: #{tpu_custom_call.1} parent=5 // pred_fallthru
      _
    %p224 = scmp.lt.s32.totalorder %s13, 2
    // Predicated region
    $region37: #{tpu_custom_call.1} parent=5 // pred_check
      %p225 = pneg %p224
    $region38: #{tpu_custom_call.1} parent=5 // pred_check_branch
      %227 = sbr.rel (%p225) target = $region40
    $region39: #{tpu_custom_call.1} parent=5 // pred_region
      // Predicated region
      $region41: #{tpu_custom_call.1} parent=39 // pred_check
        %p228 = pneg %p33
      $region42: #{tpu_custom_call.1} parent=39 // pred_check_branch
        %230 = sbr.rel (%p228) target = $region44
      $region43: #{tpu_custom_call.1} parent=39 // pred_region
        %p231 = scmp.lt.s32.totalorder %s13, 1
        %s232 = scalar_select %p231, %s13, 1
        %s233 = smul.addr %s232, 32
        %s234 = smul.addr %s233, 8
        %s235 = scalar_lea.vmem %s0, %s234
      $region44: #{tpu_custom_call.1} parent=39 // pred_fallthru
        _
    $region40: #{tpu_custom_call.1} parent=5 // pred_fallthru
      _
    %p236 = scmp.le.s32.totalorder 1, %s13
    %p237 = scmp.lt.s32.totalorder %s13, 3
    %p238 = pnand %p236, %p237
    %p239 = pneg %p238
    // Predicated region
    $region45: #{tpu_custom_call.1} parent=5 // pred_check
      _
    $region46: #{tpu_custom_call.1} parent=5 // pred_check_branch
      %241 = sbr.rel (%p238) target = $region48
    $region47: #{tpu_custom_call.1} parent=5 // pred_region
      %s242 = ssub.s32 %s13, 1
      %p243 = scmp.lt.s32.totalorder %s18, 1
      %s244 = scalar_select %p243, %s18, 1
      %s245 = smul.addr %s244, 32
      %s246 = smul.addr %s245, 8
      %s247 = scalar_lea.vmem %s0, %s246
      %p248 = pneg %p39
      %p249 = pneg %p36
      %p250 = pneg %p60
      %p251 = pneg %p57
      %p252 = pneg %p81
      %p253 = pneg %p78
      %p254 = pneg %p102
      %p255 = pneg %p99
      %p256 = pneg %p123
      %p257 = pneg %p120
      %p258 = pneg %p144
      %p259 = pneg %p141
      %p260 = pneg %p165
      %p261 = pneg %p162
      %p262 = pneg %p191
      %p263 = pneg %p188
      %p264 = scmp.lt.s32.totalorder %s18, 1
      %s265 = scalar_select %p264, %s18, 1
      %s266 = smul.addr %s265, 32
      %s267 = smul.addr %s266, 8
      %s268 = scalar_lea.vmem %s7, %s267
      %p269 = scmp.lt.s32.totalorder %s18, 1
      %s270 = scalar_select %p269, %s18, 1
      %s271 = smul.addr %s270, 32
      %s272 = smul.addr %s271, 8
      %s273 = scalar_lea.vmem %s0, %s272
      %p274 = scmp.lt.s32.totalorder %s18, 1
      %s275 = scalar_select %p274, %s18, 1
      %s276 = smul.addr %s275, 32
      %s277 = smul.addr %s276, 8
      %s278 = scalar_lea.vmem %s7, %s277
      %v280 = vld [vmem:[%s273] sm:$0xff]
      %v281 = vld [vmem:[%s273 + $0x8] sm:$0xff]
      %v282 = vld [vmem:[%s273 + $0x10] sm:$0xff]
      %v283 = vld [vmem:[%s273 + $0x18] sm:$0xff]
      %v284 = vld [vmem:[%s273 + $0x20] sm:$0xff]
      %v285 = vld [vmem:[%s273 + $0x28] sm:$0xff]
      %v286 = vld [vmem:[%s273 + $0x30] sm:$0xff]
      %v287 = vld [vmem:[%s273 + $0x38] sm:$0xff]
      %v288 = vld [vmem:[%s273 + $0x40] sm:$0xff]
      %v289 = vld [vmem:[%s273 + $0x48] sm:$0xff]
      %v290 = vld [vmem:[%s273 + $0x50] sm:$0xff]
      %v291 = vld [vmem:[%s273 + $0x58] sm:$0xff]
      %v292 = vld [vmem:[%s273 + $0x60] sm:$0xff]
      %v293 = vld [vmem:[%s273 + $0x68] sm:$0xff]
      %v294 = vld [vmem:[%s273 + $0x70] sm:$0xff]
      %v295 = vld [vmem:[%s273 + $0x78] sm:$0xff]
      %v296 = vld [vmem:[%s273 + $0x80] sm:$0xff]
      %v297 = vld [vmem:[%s273 + $0x88] sm:$0xff]
      %v298 = vld [vmem:[%s273 + $0x90] sm:$0xff]
      %v299 = vld [vmem:[%s273 + $0x98] sm:$0xff]
      %v300 = vld [vmem:[%s273 + $0xa0] sm:$0xff]
      %v301 = vld [vmem:[%s273 + $0xa8] sm:$0xff]
      %v302 = vld [vmem:[%s273 + $0xb0] sm:$0xff]
      %v303 = vld [vmem:[%s273 + $0xb8] sm:$0xff]
      %v304 = vld [vmem:[%s273 + $0xc0] sm:$0xff]
      %v305 = vld [vmem:[%s273 + $0xc8] sm:$0xff]
      %v306 = vld [vmem:[%s273 + $0xd0] sm:$0xff]
      %v307 = vld [vmem:[%s273 + $0xd8] sm:$0xff]
      %v308 = vld [vmem:[%s273 + $0xe0] sm:$0xff]
      %v309 = vld [vmem:[%s273 + $0xe8] sm:$0xff]
      %v310 = vld [vmem:[%s273 + $0xf0] sm:$0xff]
      %v311 = vld [vmem:[%s273 + $0xf8] sm:$0xff]
      %v312 = vpack.c.bf16 %v281, %v280
      %v313 = vpack.c.bf16 %v283, %v282
      %v314 = vpack.c.bf16 %v285, %v284
      %v315 = vpack.c.bf16 %v287, %v286
      %v316 = vpack.c.bf16 %v289, %v288
      %v317 = vpack.c.bf16 %v291, %v290
      %v318 = vpack.c.bf16 %v293, %v292
      %v319 = vpack.c.bf16 %v295, %v294
      %v320 = vpack.c.bf16 %v297, %v296
      %v321 = vpack.c.bf16 %v299, %v298
      %v322 = vpack.c.bf16 %v301, %v300
      %v323 = vpack.c.bf16 %v303, %v302
      %v324 = vpack.c.bf16 %v305, %v304
      %v325 = vpack.c.bf16 %v307, %v306
      %v326 = vpack.c.bf16 %v309, %v308
      %v327 = vpack.c.bf16 %v311, %v310
      %v328 = vld [vmem:[%s1] sm:$0x3]
      %v329 = vld [vmem:[%s2] sm:$0x1]
      %v331 = vperm.slane %v329, 0
      %vm333 = vcmask 31744
      %v335 = vsel %vm333, %v312, 0
      %v338 = vsel %vm333, %v313, 0
      %v341 = vsel %vm333, %v314, 0
      %v344 = vsel %vm333, %v315, 0
      %v347 = vsel %vm333, %v316, 0
      %v350 = vsel %vm333, %v317, 0
      %v353 = vsel %vm333, %v318, 0
      %v356 = vsel %vm333, %v319, 0
      %v359 = vsel %vm333, %v320, 0
      %v362 = vsel %vm333, %v321, 0
      %v365 = vsel %vm333, %v322, 0
      %v368 = vsel %vm333, %v323, 0
      %v371 = vsel %vm333, %v324, 0
      %v374 = vsel %vm333, %v325, 0
      %v377 = vsel %vm333, %v326, 0
      %v380 = vsel %vm333, %v327, 0
      %vm382 = vcmask 1041408
      %v384 = vsel %vm382, %v328, 0
      %386 = vmatpush.bf16.msra.mxu0 0
      %387 = vmatpush.bf16.msra.mxu0 0
      %388 = vmatpush.bf16.msra.mxu0 0
      %389 = vmatpush.bf16.msra.mxu0 0
      %390 = vmatpush.bf16.msra.mxu0 0
      %391 = vmatpush.bf16.msra.mxu0 0
      %392 = vmatpush.bf16.msra.mxu0 0
      %393 = vmatpush.bf16.msra.mxu0 %v384
      %394 = vmatmul.bf16.gmra.mxu0 %v335
      %v395 = vpop.f32.mrf.mxu0
      %v396 = vadd.f32 %v331, %v395
      %v397 = vpop.f32.mrf.mxu0
      %v398 = vadd.f32 %v331, %v397
      %399 = vmatmul.bf16.gmra.mxu0 %v338
      %v400 = vpop.f32.mrf.mxu0
      %v401 = vadd.f32 %v331, %v400
      %v402 = vpop.f32.mrf.mxu0
      %v403 = vadd.f32 %v331, %v402
      %404 = vmatmul.bf16.gmra.mxu0 %v341
      %v405 = vpop.f32.mrf.mxu0
      %v406 = vadd.f32 %v331, %v405
      %v407 = vpop.f32.mrf.mxu0
      %v408 = vadd.f32 %v331, %v407
      %409 = vmatmul.bf16.gmra.mxu0 %v344
      %v410 = vpop.f32.mrf.mxu0
      %v411 = vadd.f32 %v331, %v410
      %v412 = vpop.f32.mrf.mxu0
      %v413 = vadd.f32 %v331, %v412
      %414 = vmatmul.bf16.gmra.mxu0 %v347
      %v415 = vpop.f32.mrf.mxu0
      %v416 = vadd.f32 %v331, %v415
      %v417 = vpop.f32.mrf.mxu0
      %v418 = vadd.f32 %v331, %v417
      %419 = vmatmul.bf16.gmra.mxu0 %v350
      %v420 = vpop.f32.mrf.mxu0
      %v421 = vadd.f32 %v331, %v420
      %v422 = vpop.f32.mrf.mxu0
      %v423 = vadd.f32 %v331, %v422
      %424 = vmatmul.bf16.gmra.mxu0 %v353
      %v425 = vpop.f32.mrf.mxu0
      %v426 = vadd.f32 %v331, %v425
      %v427 = vpop.f32.mrf.mxu0
      %v428 = vadd.f32 %v331, %v427
      %429 = vmatmul.bf16.gmra.mxu0 %v356
      %v430 = vpop.f32.mrf.mxu0
      %v431 = vadd.f32 %v331, %v430
      %v432 = vpop.f32.mrf.mxu0
      %v433 = vadd.f32 %v331, %v432
      %434 = vmatmul.bf16.gmra.mxu0 %v359
      %v435 = vpop.f32.mrf.mxu0
      %v436 = vadd.f32 %v331, %v435
      %v437 = vpop.f32.mrf.mxu0
      %v438 = vadd.f32 %v331, %v437
      %439 = vmatmul.bf16.gmra.mxu0 %v362
      %v440 = vpop.f32.mrf.mxu0
      %v441 = vadd.f32 %v331, %v440
      %v442 = vpop.f32.mrf.mxu0
      %v443 = vadd.f32 %v331, %v442
      %444 = vmatmul.bf16.gmra.mxu0 %v365
      %v445 = vpop.f32.mrf.mxu0
      %v446 = vadd.f32 %v331, %v445
      %v447 = vpop.f32.mrf.mxu0
      %v448 = vadd.f32 %v331, %v447
      %449 = vmatmul.bf16.gmra.mxu0 %v368
      %v450 = vpop.f32.mrf.mxu0
      %v451 = vadd.f32 %v331, %v450
      %v452 = vpop.f32.mrf.mxu0
      %v453 = vadd.f32 %v331, %v452
      %454 = vmatmul.bf16.gmra.mxu0 %v371
      %v455 = vpop.f32.mrf.mxu0
      %v456 = vadd.f32 %v331, %v455
      %v457 = vpop.f32.mrf.mxu0
      %v458 = vadd.f32 %v331, %v457
      %459 = vmatmul.bf16.gmra.mxu0 %v374
      %v460 = vpop.f32.mrf.mxu0
      %v461 = vadd.f32 %v331, %v460
      %v462 = vpop.f32.mrf.mxu0
      %v463 = vadd.f32 %v331, %v462
      %464 = vmatmul.bf16.gmra.mxu0 %v377
      %v465 = vpop.f32.mrf.mxu0
      %v466 = vadd.f32 %v331, %v465
      %v467 = vpop.f32.mrf.mxu0
      %v468 = vadd.f32 %v331, %v467
      %469 = vmatmul.bf16.gmra.mxu0 %v380
      %v470 = vpop.f32.mrf.mxu0
      %v471 = vadd.f32 %v331, %v470
      %v472 = vpop.f32.mrf.mxu0
      %v473 = vadd.f32 %v331, %v472
      %474 = vdwg.mxu0
      %v475 = vmax.f32 %v396, 0.0
      %v476 = vmax.f32 %v398, 0.0
      %v477 = vmax.f32 %v401, 0.0
      %v478 = vmax.f32 %v403, 0.0
      %v479 = vmax.f32 %v406, 0.0
      %v480 = vmax.f32 %v408, 0.0
      %v481 = vmax.f32 %v411, 0.0
      %v482 = vmax.f32 %v413, 0.0
      %v483 = vmax.f32 %v416, 0.0
      %v484 = vmax.f32 %v418, 0.0
      %v485 = vmax.f32 %v421, 0.0
      %v486 = vmax.f32 %v423, 0.0
      %v487 = vmax.f32 %v426, 0.0
      %v488 = vmax.f32 %v428, 0.0
      %v489 = vmax.f32 %v431, 0.0
      %v490 = vmax.f32 %v433, 0.0
      %v491 = vmax.f32 %v436, 0.0
      %v492 = vmax.f32 %v438, 0.0
      %v493 = vmax.f32 %v441, 0.0
      %v494 = vmax.f32 %v443, 0.0
      %v495 = vmax.f32 %v446, 0.0
      %v496 = vmax.f32 %v448, 0.0
      %v497 = vmax.f32 %v451, 0.0
      %v498 = vmax.f32 %v453, 0.0
      %v499 = vmax.f32 %v456, 0.0
      %v500 = vmax.f32 %v458, 0.0
      %v501 = vmax.f32 %v461, 0.0
      %v502 = vmax.f32 %v463, 0.0
      %v503 = vmax.f32 %v466, 0.0
      %v504 = vmax.f32 %v468, 0.0
      %v505 = vmax.f32 %v471, 0.0
      %v506 = vmax.f32 %v473, 0.0
      %v507 = vpack.c.bf16 %v476, %v475
      %v508 = vpack.c.bf16 %v478, %v477
      %v509 = vpack.c.bf16 %v480, %v479
      %v510 = vpack.c.bf16 %v482, %v481
      %v511 = vpack.c.bf16 %v484, %v483
      %v512 = vpack.c.bf16 %v486, %v485
      %v513 = vpack.c.bf16 %v488, %v487
      %v514 = vpack.c.bf16 %v490, %v489
      %v515 = vpack.c.bf16 %v492, %v491
      %v516 = vpack.c.bf16 %v494, %v493
      %v517 = vpack.c.bf16 %v496, %v495
      %v518 = vpack.c.bf16 %v498, %v497
      %v519 = vpack.c.bf16 %v500, %v499
      %v520 = vpack.c.bf16 %v502, %v501
      %v521 = vpack.c.bf16 %v504, %v503
      %v522 = vpack.c.bf16 %v506, %v505
      %v523 = vld [vmem:[%s3] sm:$0xf]
      %v524 = vld [vmem:[%s3 + $0x4] sm:$0xf]
      %v525 = vld [vmem:[%s3 + $0x8] sm:$0xf]
      %v526 = vld [vmem:[%s3 + $0xc] sm:$0xf]
      %v527 = vld [vmem:[%s3 + $0x10] sm:$0xf]
      %v528 = vld [vmem:[%s3 + $0x14] sm:$0xf]
      %v529 = vld [vmem:[%s3 + $0x18] sm:$0xf]
      %v530 = vld [vmem:[%s3 + $0x1c] sm:$0xf]
      %v531 = vld [vmem:[%s4] sm:$0x1]
      %v533 = vperm.slane %v531, 0
      %v543 = vunpack.c.l.b16 %v523
      %v544 = vunpack.c.l.b16 %v524
      %v545 = vunpack.c.l.b16 %v525
      %v546 = vunpack.c.l.b16 %v526
      %v547 = vunpack.c.l.b16 %v527
      %v548 = vunpack.c.l.b16 %v528
      %v549 = vunpack.c.l.b16 %v529
      %v550 = vunpack.c.l.b16 %v530
      %v551 = vpack.c.b16 %v544, %v543
      %v552 = vpack.c.b16 %v546, %v545
      %v553 = vpack.c.b16 %v548, %v547
      %v554 = vpack.c.b16 %v550, %v549
      %vm559 = vcmask 523264
      %v561 = vsel %vm559, %v507, 0
      %v564 = vsel %vm559, %v508, 0
      %v567 = vsel %vm559, %v509, 0
      %v570 = vsel %vm559, %v510, 0
      %v573 = vsel %vm559, %v511, 0
      %v576 = vsel %vm559, %v512, 0
      %v579 = vsel %vm559, %v513, 0
      %v582 = vsel %vm559, %v514, 0
      %v585 = vsel %vm559, %v515, 0
      %v588 = vsel %vm559, %v516, 0
      %v591 = vsel %vm559, %v517, 0
      %v594 = vsel %vm559, %v518, 0
      %v597 = vsel %vm559, %v519, 0
      %v600 = vsel %vm559, %v520, 0
      %v603 = vsel %vm559, %v521, 0
      %v606 = vsel %vm559, %v522, 0
      %608 = vmatpush.bf16.msra.mxu0 0
      %609 = vmatpush.bf16.msra.mxu0 0
      %610 = vmatpush.bf16.msra.mxu0 0
      %611 = vmatpush.bf16.msra.mxu0 0
      %612 = vmatpush.bf16.msra.mxu0 %v554
      %613 = vmatpush.bf16.msra.mxu0 %v553
      %614 = vmatpush.bf16.msra.mxu0 %v552
      %615 = vmatpush.bf16.msra.mxu0 %v551
      %616 = vmatmul.bf16.gmra.mxu0 %v561
      %v617 = vpop.f32.mrf.mxu0
      %v618 = vadd.f32 %v533, %v617
      %v619 = vpop.f32.mrf.mxu0
      %v620 = vadd.f32 %v533, %v619
      %621 = vmatmul.bf16.gmra.mxu0 %v564
      %v622 = vpop.f32.mrf.mxu0
      %v623 = vadd.f32 %v533, %v622
      %v624 = vpop.f32.mrf.mxu0
      %v625 = vadd.f32 %v533, %v624
      %626 = vmatmul.bf16.gmra.mxu0 %v567
      %v627 = vpop.f32.mrf.mxu0
      %v628 = vadd.f32 %v533, %v627
      %v629 = vpop.f32.mrf.mxu0
      %v630 = vadd.f32 %v533, %v629
      %631 = vmatmul.bf16.gmra.mxu0 %v570
      %v632 = vpop.f32.mrf.mxu0
      %v633 = vadd.f32 %v533, %v632
      %v634 = vpop.f32.mrf.mxu0
      %v635 = vadd.f32 %v533, %v634
      %636 = vmatmul.bf16.gmra.mxu0 %v573
      %v637 = vpop.f32.mrf.mxu0
      %v638 = vadd.f32 %v533, %v637
      %v639 = vpop.f32.mrf.mxu0
      %v640 = vadd.f32 %v533, %v639
      %641 = vmatmul.bf16.gmra.mxu0 %v576
      %v642 = vpop.f32.mrf.mxu0
      %v643 = vadd.f32 %v533, %v642
      %v644 = vpop.f32.mrf.mxu0
      %v645 = vadd.f32 %v533, %v644
      %646 = vmatmul.bf16.gmra.mxu0 %v579
      %v647 = vpop.f32.mrf.mxu0
      %v648 = vadd.f32 %v533, %v647
      %v649 = vpop.f32.mrf.mxu0
      %v650 = vadd.f32 %v533, %v649
      %651 = vmatmul.bf16.gmra.mxu0 %v582
      %v652 = vpop.f32.mrf.mxu0
      %v653 = vadd.f32 %v533, %v652
      %v654 = vpop.f32.mrf.mxu0
      %v655 = vadd.f32 %v533, %v654
      %656 = vmatmul.bf16.gmra.mxu0 %v585
      %v657 = vpop.f32.mrf.mxu0
      %v658 = vadd.f32 %v533, %v657
      %v659 = vpop.f32.mrf.mxu0
      %v660 = vadd.f32 %v533, %v659
      %661 = vmatmul.bf16.gmra.mxu0 %v588
      %v662 = vpop.f32.mrf.mxu0
      %v663 = vadd.f32 %v533, %v662
      %v664 = vpop.f32.mrf.mxu0
      %v665 = vadd.f32 %v533, %v664
      %666 = vmatmul.bf16.gmra.mxu0 %v591
      %v667 = vpop.f32.mrf.mxu0
      %v668 = vadd.f32 %v533, %v667
      %v669 = vpop.f32.mrf.mxu0
      %v670 = vadd.f32 %v533, %v669
      %671 = vmatmul.bf16.gmra.mxu0 %v594
      %v672 = vpop.f32.mrf.mxu0
      %v673 = vadd.f32 %v533, %v672
      %v674 = vpop.f32.mrf.mxu0
      %v675 = vadd.f32 %v533, %v674
      %676 = vmatmul.bf16.gmra.mxu0 %v597
      %v677 = vpop.f32.mrf.mxu0
      %v678 = vadd.f32 %v533, %v677
      %v679 = vpop.f32.mrf.mxu0
      %v680 = vadd.f32 %v533, %v679
      %681 = vmatmul.bf16.gmra.mxu0 %v600
      %v682 = vpop.f32.mrf.mxu0
      %v683 = vadd.f32 %v533, %v682
      %v684 = vpop.f32.mrf.mxu0
      %v685 = vadd.f32 %v533, %v684
      %686 = vmatmul.bf16.gmra.mxu0 %v603
      %v687 = vpop.f32.mrf.mxu0
      %v688 = vadd.f32 %v533, %v687
      %v689 = vpop.f32.mrf.mxu0
      %v690 = vadd.f32 %v533, %v689
      %691 = vmatmul.bf16.gmra.mxu0 %v606
      %v692 = vpop.f32.mrf.mxu0
      %v693 = vadd.f32 %v533, %v692
      %v694 = vpop.f32.mrf.mxu0
      %v695 = vadd.f32 %v533, %v694
      %696 = vdwg.mxu0
      %s697 = scalar_lea.vmem %s3, 32
      %v698 = vld [vmem:[%s697] sm:$0xf]
      %v699 = vld [vmem:[%s697 + $0x4] sm:$0xf]
      %v700 = vld [vmem:[%s697 + $0x8] sm:$0xf]
      %v701 = vld [vmem:[%s697 + $0xc] sm:$0xf]
      %v702 = vld [vmem:[%s697 + $0x10] sm:$0xf]
      %v703 = vld [vmem:[%s697 + $0x14] sm:$0xf]
      %v704 = vld [vmem:[%s697 + $0x18] sm:$0xf]
      %v705 = vld [vmem:[%s697 + $0x1c] sm:$0xf]
      %s706 = scalar_lea.vmem %s4, 1
      %v707 = vld [vmem:[%s706] sm:$0x1]
      %v709 = vperm.slane %v707, 0
      %v719 = vunpack.c.l.b16 %v698
      %v720 = vunpack.c.l.b16 %v699
      %v721 = vunpack.c.l.b16 %v700
      %v722 = vunpack.c.l.b16 %v701
      %v723 = vunpack.c.l.b16 %v702
      %v724 = vunpack.c.l.b16 %v703
      %v725 = vunpack.c.l.b16 %v704
      %v726 = vunpack.c.l.b16 %v705
      %v727 = vpack.c.b16 %v720, %v719
      %v728 = vpack.c.b16 %v722, %v721
      %v729 = vpack.c.b16 %v724, %v723
      %v730 = vpack.c.b16 %v726, %v725
      %735 = vmatpush.bf16.msra.mxu0 0
      %736 = vmatpush.bf16.msra.mxu0 0
      %737 = vmatpush.bf16.msra.mxu0 0
      %738 = vmatpush.bf16.msra.mxu0 0
      %739 = vmatpush.bf16.msra.mxu0 %v730
      %740 = vmatpush.bf16.msra.mxu0 %v729
      %741 = vmatpush.bf16.msra.mxu0 %v728
      %742 = vmatpush.bf16.msra.mxu0 %v727
      %743 = vmatmul.bf16.gmra.mxu0 %v561
      %v744 = vpop.f32.mrf.mxu0
      %v745 = vadd.f32 %v709, %v744
      %v746 = vpop.f32.mrf.mxu0
      %v747 = vadd.f32 %v709, %v746
      %748 = vmatmul.bf16.gmra.mxu0 %v564
      %v749 = vpop.f32.mrf.mxu0
      %v750 = vadd.f32 %v709, %v749
      %v751 = vpop.f32.mrf.mxu0
      %v752 = vadd.f32 %v709, %v751
      %753 = vmatmul.bf16.gmra.mxu0 %v567
      %v754 = vpop.f32.mrf.mxu0
      %v755 = vadd.f32 %v709, %v754
      %v756 = vpop.f32.mrf.mxu0
      %v757 = vadd.f32 %v709, %v756
      %758 = vmatmul.bf16.gmra.mxu0 %v570
      %v759 = vpop.f32.mrf.mxu0
      %v760 = vadd.f32 %v709, %v759
      %v761 = vpop.f32.mrf.mxu0
      %v762 = vadd.f32 %v709, %v761
      %763 = vmatmul.bf16.gmra.mxu0 %v573
      %v764 = vpop.f32.mrf.mxu0
      %v765 = vadd.f32 %v709, %v764
      %v766 = vpop.f32.mrf.mxu0
      %v767 = vadd.f32 %v709, %v766
      %768 = vmatmul.bf16.gmra.mxu0 %v576
      %v769 = vpop.f32.mrf.mxu0
      %v770 = vadd.f32 %v709, %v769
      %v771 = vpop.f32.mrf.mxu0
      %v772 = vadd.f32 %v709, %v771
      %773 = vmatmul.bf16.gmra.mxu0 %v579
      %v774 = vpop.f32.mrf.mxu0
      %v775 = vadd.f32 %v709, %v774
      %v776 = vpop.f32.mrf.mxu0
      %v777 = vadd.f32 %v709, %v776
      %778 = vmatmul.bf16.gmra.mxu0 %v582
      %v779 = vpop.f32.mrf.mxu0
      %v780 = vadd.f32 %v709, %v779
      %v781 = vpop.f32.mrf.mxu0
      %v782 = vadd.f32 %v709, %v781
      %783 = vmatmul.bf16.gmra.mxu0 %v585
      %v784 = vpop.f32.mrf.mxu0
      %v785 = vadd.f32 %v709, %v784
      %v786 = vpop.f32.mrf.mxu0
      %v787 = vadd.f32 %v709, %v786
      %788 = vmatmul.bf16.gmra.mxu0 %v588
      %v789 = vpop.f32.mrf.mxu0
      %v790 = vadd.f32 %v709, %v789
      %v791 = vpop.f32.mrf.mxu0
      %v792 = vadd.f32 %v709, %v791
      %793 = vmatmul.bf16.gmra.mxu0 %v591
      %v794 = vpop.f32.mrf.mxu0
      %v795 = vadd.f32 %v709, %v794
      %v796 = vpop.f32.mrf.mxu0
      %v797 = vadd.f32 %v709, %v796
      %798 = vmatmul.bf16.gmra.mxu0 %v594
      %v799 = vpop.f32.mrf.mxu0
      %v800 = vadd.f32 %v709, %v799
      %v801 = vpop.f32.mrf.mxu0
      %v802 = vadd.f32 %v709, %v801
      %803 = vmatmul.bf16.gmra.mxu0 %v597
      %v804 = vpop.f32.mrf.mxu0
      %v805 = vadd.f32 %v709, %v804
      %v806 = vpop.f32.mrf.mxu0
      %v807 = vadd.f32 %v709, %v806
      %808 = vmatmul.bf16.gmra.mxu0 %v600
      %v809 = vpop.f32.mrf.mxu0
      %v810 = vadd.f32 %v709, %v809
      %v811 = vpop.f32.mrf.mxu0
      %v812 = vadd.f32 %v709, %v811
      %813 = vmatmul.bf16.gmra.mxu0 %v603
      %v814 = vpop.f32.mrf.mxu0
      %v815 = vadd.f32 %v709, %v814
      %v816 = vpop.f32.mrf.mxu0
      %v817 = vadd.f32 %v709, %v816
      %818 = vmatmul.bf16.gmra.mxu0 %v606
      %v819 = vpop.f32.mrf.mxu0
      %v820 = vadd.f32 %v709, %v819
      %v821 = vpop.f32.mrf.mxu0
      %v822 = vadd.f32 %v709, %v821
      %823 = vdwg.mxu0
      %v840 = vrot.slane %v618, 1
      %v841 = vrot.slane %v618, 2
      %v842 = vrot.slane %v618, 3
      %v843 = vrot.slane %v618, 4
      %v844 = vrot.slane %v618, 5
      %v845 = vrot.slane %v618, 6
      %v846 = vrot.slane %v618, 7
      %v847 = vrot.slane %v623, 1
      %v848 = vrot.slane %v623, 2
      %v849 = vrot.slane %v623, 3
      %v850 = vrot.slane %v623, 4
      %v851 = vrot.slane %v623, 5
      %v852 = vrot.slane %v623, 6
      %v853 = vrot.slane %v623, 7
      %v854 = vrot.slane %v628, 1
      %v855 = vrot.slane %v628, 2
      %v856 = vrot.slane %v628, 3
      %v857 = vrot.slane %v628, 4
      %v858 = vrot.slane %v628, 5
      %v859 = vrot.slane %v628, 6
      %v860 = vrot.slane %v628, 7
      %v861 = vrot.slane %v633, 1
      %v862 = vrot.slane %v633, 2
      %v863 = vrot.slane %v633, 3
      %v864 = vrot.slane %v633, 4
      %v865 = vrot.slane %v633, 5
      %v866 = vrot.slane %v633, 6
      %v867 = vrot.slane %v633, 7
      %v868 = vrot.slane %v638, 1
      %v869 = vrot.slane %v638, 2
      %v870 = vrot.slane %v638, 3
      %v871 = vrot.slane %v638, 4
      %v872 = vrot.slane %v638, 5
      %v873 = vrot.slane %v638, 6
      %v874 = vrot.slane %v638, 7
      %v875 = vrot.slane %v643, 1
      %v876 = vrot.slane %v643, 2
      %v877 = vrot.slane %v643, 3
      %v878 = vrot.slane %v643, 4
      %v879 = vrot.slane %v643, 5
      %v880 = vrot.slane %v643, 6
      %v881 = vrot.slane %v643, 7
      %v882 = vrot.slane %v648, 1
      %v883 = vrot.slane %v648, 2
      %v884 = vrot.slane %v648, 3
      %v885 = vrot.slane %v648, 4
      %v886 = vrot.slane %v648, 5
      %v887 = vrot.slane %v648, 6
      %v888 = vrot.slane %v648, 7
      %v889 = vrot.slane %v653, 1
      %v890 = vrot.slane %v653, 2
      %v891 = vrot.slane %v653, 3
      %v892 = vrot.slane %v653, 4
      %v893 = vrot.slane %v653, 5
      %v894 = vrot.slane %v653, 6
      %v895 = vrot.slane %v653, 7
      %v896 = vrot.slane %v658, 1
      %v897 = vrot.slane %v658, 2
      %v898 = vrot.slane %v658, 3
      %v899 = vrot.slane %v658, 4
      %v900 = vrot.slane %v658, 5
      %v901 = vrot.slane %v658, 6
      %v902 = vrot.slane %v658, 7
      %v903 = vrot.slane %v663, 1
      %v904 = vrot.slane %v663, 2
      %v905 = vrot.slane %v663, 3
      %v906 = vrot.slane %v663, 4
      %v907 = vrot.slane %v663, 5
      %v908 = vrot.slane %v663, 6
      %v909 = vrot.slane %v663, 7
      %v910 = vrot.slane %v668, 1
      %v911 = vrot.slane %v668, 2
      %v912 = vrot.slane %v668, 3
      %v913 = vrot.slane %v668, 4
      %v914 = vrot.slane %v668, 5
      %v915 = vrot.slane %v668, 6
      %v916 = vrot.slane %v668, 7
      %v917 = vrot.slane %v673, 1
      %v918 = vrot.slane %v673, 2
      %v919 = vrot.slane %v673, 3
      %v920 = vrot.slane %v673, 4
      %v921 = vrot.slane %v673, 5
      %v922 = vrot.slane %v673, 6
      %v923 = vrot.slane %v673, 7
      %v924 = vrot.slane %v678, 1
      %v925 = vrot.slane %v678, 2
      %v926 = vrot.slane %v678, 3
      %v927 = vrot.slane %v678, 4
      %v928 = vrot.slane %v678, 5
      %v929 = vrot.slane %v678, 6
      %v930 = vrot.slane %v678, 7
      %v931 = vrot.slane %v683, 1
      %v932 = vrot.slane %v683, 2
      %v933 = vrot.slane %v683, 3
      %v934 = vrot.slane %v683, 4
      %v935 = vrot.slane %v683, 5
      %v936 = vrot.slane %v683, 6
      %v937 = vrot.slane %v683, 7
      %v938 = vrot.slane %v688, 1
      %v939 = vrot.slane %v688, 2
      %v940 = vrot.slane %v688, 3
      %v941 = vrot.slane %v688, 4
      %v942 = vrot.slane %v688, 5
      %v943 = vrot.slane %v688, 6
      %v944 = vrot.slane %v688, 7
      %v945 = vrot.slane %v693, 1
      %v946 = vrot.slane %v693, 2
      %v947 = vrot.slane %v693, 3
      %v948 = vrot.slane %v693, 4
      %v949 = vrot.slane %v693, 5
      %v950 = vrot.slane %v693, 6
      %v951 = vrot.slane %v693, 7
      %v952 = vperm.slane %v618, 0
      %v953 = vperm.slane %v840, 0
      %v954 = vperm.slane %v841, 0
      %v955 = vperm.slane %v842, 0
      %v956 = vperm.slane %v843, 0
      %v957 = vperm.slane %v844, 0
      %v958 = vperm.slane %v845, 0
      %v959 = vperm.slane %v846, 0
      %v960 = vperm.slane %v623, 0
      %v961 = vperm.slane %v847, 0
      %v962 = vperm.slane %v848, 0
      %v963 = vperm.slane %v849, 0
      %v964 = vperm.slane %v850, 0
      %v965 = vperm.slane %v851, 0
      %v966 = vperm.slane %v852, 0
      %v967 = vperm.slane %v853, 0
      %v968 = vperm.slane %v628, 0
      %v969 = vperm.slane %v854, 0
      %v970 = vperm.slane %v855, 0
      %v971 = vperm.slane %v856, 0
      %v972 = vperm.slane %v857, 0
      %v973 = vperm.slane %v858, 0
      %v974 = vperm.slane %v859, 0
      %v975 = vperm.slane %v860, 0
      %v976 = vperm.slane %v633, 0
      %v977 = vperm.slane %v861, 0
      %v978 = vperm.slane %v862, 0
      %v979 = vperm.slane %v863, 0
      %v980 = vperm.slane %v864, 0
      %v981 = vperm.slane %v865, 0
      %v982 = vperm.slane %v866, 0
      %v983 = vperm.slane %v867, 0
      %v984 = vperm.slane %v638, 0
      %v985 = vperm.slane %v868, 0
      %v986 = vperm.slane %v869, 0
      %v987 = vperm.slane %v870, 0
      %v988 = vperm.slane %v871, 0
      %v989 = vperm.slane %v872, 0
      %v990 = vperm.slane %v873, 0
      %v991 = vperm.slane %v874, 0
      %v992 = vperm.slane %v643, 0
      %v993 = vperm.slane %v875, 0
      %v994 = vperm.slane %v876, 0
      %v995 = vperm.slane %v877, 0
      %v996 = vperm.slane %v878, 0
      %v997 = vperm.slane %v879, 0
      %v998 = vperm.slane %v880, 0
      %v999 = vperm.slane %v881, 0
      %v1000 = vperm.slane %v648, 0
      %v1001 = vperm.slane %v882, 0
      %v1002 = vperm.slane %v883, 0
      %v1003 = vperm.slane %v884, 0
      %v1004 = vperm.slane %v885, 0
      %v1005 = vperm.slane %v886, 0
      %v1006 = vperm.slane %v887, 0
      %v1007 = vperm.slane %v888, 0
      %v1008 = vperm.slane %v653, 0
      %v1009 = vperm.slane %v889, 0
      %v1010 = vperm.slane %v890, 0
      %v1011 = vperm.slane %v891, 0
      %v1012 = vperm.slane %v892, 0
      %v1013 = vperm.slane %v893, 0
      %v1014 = vperm.slane %v894, 0
      %v1015 = vperm.slane %v895, 0
      %v1016 = vperm.slane %v658, 0
      %v1017 = vperm.slane %v896, 0
      %v1018 = vperm.slane %v897, 0
      %v1019 = vperm.slane %v898, 0
      %v1020 = vperm.slane %v899, 0
      %v1021 = vperm.slane %v900, 0
      %v1022 = vperm.slane %v901, 0
      %v1023 = vperm.slane %v902, 0
      %v1024 = vperm.slane %v663, 0
      %v1025 = vperm.slane %v903, 0
      %v1026 = vperm.slane %v904, 0
      %v1027 = vperm.slane %v905, 0
      %v1028 = vperm.slane %v906, 0
      %v1029 = vperm.slane %v907, 0
      %v1030 = vperm.slane %v908, 0
      %v1031 = vperm.slane %v909, 0
      %v1032 = vperm.slane %v668, 0
      %v1033 = vperm.slane %v910, 0
      %v1034 = vperm.slane %v911, 0
      %v1035 = vperm.slane %v912, 0
      %v1036 = vperm.slane %v913, 0
      %v1037 = vperm.slane %v914, 0
      %v1038 = vperm.slane %v915, 0
      %v1039 = vperm.slane %v916, 0
      %v1040 = vperm.slane %v673, 0
      %v1041 = vperm.slane %v917, 0
      %v1042 = vperm.slane %v918, 0
      %v1043 = vperm.slane %v919, 0
      %v1044 = vperm.slane %v920, 0
      %v1045 = vperm.slane %v921, 0
      %v1046 = vperm.slane %v922, 0
      %v1047 = vperm.slane %v923, 0
      %v1048 = vperm.slane %v678, 0
      %v1049 = vperm.slane %v924, 0
      %v1050 = vperm.slane %v925, 0
      %v1051 = vperm.slane %v926, 0
      %v1052 = vperm.slane %v927, 0
      %v1053 = vperm.slane %v928, 0
      %v1054 = vperm.slane %v929, 0
      %v1055 = vperm.slane %v930, 0
      %v1056 = vperm.slane %v683, 0
      %v1057 = vperm.slane %v931, 0
      %v1058 = vperm.slane %v932, 0
      %v1059 = vperm.slane %v933, 0
      %v1060 = vperm.slane %v934, 0
      %v1061 = vperm.slane %v935, 0
      %v1062 = vperm.slane %v936, 0
      %v1063 = vperm.slane %v937, 0
      %v1064 = vperm.slane %v688, 0
      %v1065 = vperm.slane %v938, 0
      %v1066 = vperm.slane %v939, 0
      %v1067 = vperm.slane %v940, 0
      %v1068 = vperm.slane %v941, 0
      %v1069 = vperm.slane %v942, 0
      %v1070 = vperm.slane %v943, 0
      %v1071 = vperm.slane %v944, 0
      %v1072 = vperm.slane %v693, 0
      %v1073 = vperm.slane %v945, 0
      %v1074 = vperm.slane %v946, 0
      %v1075 = vperm.slane %v947, 0
      %v1076 = vperm.slane %v948, 0
      %v1077 = vperm.slane %v949, 0
      %v1078 = vperm.slane %v950, 0
      %v1079 = vperm.slane %v951, 0
      %v1208 = vmul.f32 %v952, %v745
      %v1209 = vmul.f32 %v952, %v747
      %v1210 = vmul.f32 %v953, %v750
      %v1211 = vmul.f32 %v953, %v752
      %v1212 = vmul.f32 %v954, %v755
      %v1213 = vmul.f32 %v954, %v757
      %v1214 = vmul.f32 %v955, %v760
      %v1215 = vmul.f32 %v955, %v762
      %v1216 = vmul.f32 %v956, %v765
      %v1217 = vmul.f32 %v956, %v767
      %v1218 = vmul.f32 %v957, %v770
      %v1219 = vmul.f32 %v957, %v772
      %v1220 = vmul.f32 %v958, %v775
      %v1221 = vmul.f32 %v958, %v777
      %v1222 = vmul.f32 %v959, %v780
      %v1223 = vmul.f32 %v959, %v782
      %v1224 = vmul.f32 %v960, %v745
      %v1225 = vmul.f32 %v960, %v747
      %v1226 = vmul.f32 %v961, %v750
      %v1227 = vmul.f32 %v961, %v752
      %v1228 = vmul.f32 %v962, %v755
      %v1229 = vmul.f32 %v962, %v757
      %v1230 = vmul.f32 %v963, %v760
      %v1231 = vmul.f32 %v963, %v762
      %v1232 = vmul.f32 %v964, %v765
      %v1233 = vmul.f32 %v964, %v767
      %v1234 = vmul.f32 %v965, %v770
      %v1235 = vmul.f32 %v965, %v772
      %v1236 = vmul.f32 %v966, %v775
      %v1237 = vmul.f32 %v966, %v777
      %v1238 = vmul.f32 %v967, %v780
      %v1239 = vmul.f32 %v967, %v782
      %v1240 = vmul.f32 %v968, %v745
      %v1241 = vmul.f32 %v968, %v747
      %v1242 = vmul.f32 %v969, %v750
      %v1243 = vmul.f32 %v969, %v752
      %v1244 = vmul.f32 %v970, %v755
      %v1245 = vmul.f32 %v970, %v757
      %v1246 = vmul.f32 %v971, %v760
      %v1247 = vmul.f32 %v971, %v762
      %v1248 = vmul.f32 %v972, %v765
      %v1249 = vmul.f32 %v972, %v767
      %v1250 = vmul.f32 %v973, %v770
      %v1251 = vmul.f32 %v973, %v772
      %v1252 = vmul.f32 %v974, %v775
      %v1253 = vmul.f32 %v974, %v777
      %v1254 = vmul.f32 %v975, %v780
      %v1255 = vmul.f32 %v975, %v782
      %v1256 = vmul.f32 %v976, %v745
      %v1257 = vmul.f32 %v976, %v747
      %v1258 = vmul.f32 %v977, %v750
      %v1259 = vmul.f32 %v977, %v752
      %v1260 = vmul.f32 %v978, %v755
      %v1261 = vmul.f32 %v978, %v757
      %v1262 = vmul.f32 %v979, %v760
      %v1263 = vmul.f32 %v979, %v762
      %v1264 = vmul.f32 %v980, %v765
      %v1265 = vmul.f32 %v980, %v767
      %v1266 = vmul.f32 %v981, %v770
      %v1267 = vmul.f32 %v981, %v772
      %v1268 = vmul.f32 %v982, %v775
      %v1269 = vmul.f32 %v982, %v777
      %v1270 = vmul.f32 %v983, %v780
      %v1271 = vmul.f32 %v983, %v782
      %v1272 = vmul.f32 %v984, %v745
      %v1273 = vmul.f32 %v984, %v747
      %v1274 = vmul.f32 %v985, %v750
      %v1275 = vmul.f32 %v985, %v752
      %v1276 = vmul.f32 %v986, %v755
      %v1277 = vmul.f32 %v986, %v757
      %v1278 = vmul.f32 %v987, %v760
      %v1279 = vmul.f32 %v987, %v762
      %v1280 = vmul.f32 %v988, %v765
      %v1281 = vmul.f32 %v988, %v767
      %v1282 = vmul.f32 %v989, %v770
      %v1283 = vmul.f32 %v989, %v772
      %v1284 = vmul.f32 %v990, %v775
      %v1285 = vmul.f32 %v990, %v777
      %v1286 = vmul.f32 %v991, %v780
      %v1287 = vmul.f32 %v991, %v782
      %v1288 = vmul.f32 %v992, %v745
      %v1289 = vmul.f32 %v992, %v747
      %v1290 = vmul.f32 %v993, %v750
      %v1291 = vmul.f32 %v993, %v752
      %v1292 = vmul.f32 %v994, %v755
      %v1293 = vmul.f32 %v994, %v757
      %v1294 = vmul.f32 %v995, %v760
      %v1295 = vmul.f32 %v995, %v762
      %v1296 = vmul.f32 %v996, %v765
      %v1297 = vmul.f32 %v996, %v767
      %v1298 = vmul.f32 %v997, %v770
      %v1299 = vmul.f32 %v997, %v772
      %v1300 = vmul.f32 %v998, %v775
      %v1301 = vmul.f32 %v998, %v777
      %v1302 = vmul.f32 %v999, %v780
      %v1303 = vmul.f32 %v999, %v782
      %v1304 = vmul.f32 %v1000, %v745
      %v1305 = vmul.f32 %v1000, %v747
      %v1306 = vmul.f32 %v1001, %v750
      %v1307 = vmul.f32 %v1001, %v752
      %v1308 = vmul.f32 %v1002, %v755
      %v1309 = vmul.f32 %v1002, %v757
      %v1310 = vmul.f32 %v1003, %v760
      %v1311 = vmul.f32 %v1003, %v762
      %v1312 = vmul.f32 %v1004, %v765
      %v1313 = vmul.f32 %v1004, %v767
      %v1314 = vmul.f32 %v1005, %v770
      %v1315 = vmul.f32 %v1005, %v772
      %v1316 = vmul.f32 %v1006, %v775
      %v1317 = vmul.f32 %v1006, %v777
      %v1318 = vmul.f32 %v1007, %v780
      %v1319 = vmul.f32 %v1007, %v782
      %v1320 = vmul.f32 %v1008, %v745
      %v1321 = vmul.f32 %v1008, %v747
      %v1322 = vmul.f32 %v1009, %v750
      %v1323 = vmul.f32 %v1009, %v752
      %v1324 = vmul.f32 %v1010, %v755
      %v1325 = vmul.f32 %v1010, %v757
      %v1326 = vmul.f32 %v1011, %v760
      %v1327 = vmul.f32 %v1011, %v762
      %v1328 = vmul.f32 %v1012, %v765
      %v1329 = vmul.f32 %v1012, %v767
      %v1330 = vmul.f32 %v1013, %v770
      %v1331 = vmul.f32 %v1013, %v772
      %v1332 = vmul.f32 %v1014, %v775
      %v1333 = vmul.f32 %v1014, %v777
      %v1334 = vmul.f32 %v1015, %v780
      %v1335 = vmul.f32 %v1015, %v782
      %v1336 = vmul.f32 %v1016, %v745
      %v1337 = vmul.f32 %v1016, %v747
      %v1338 = vmul.f32 %v1017, %v750
      %v1339 = vmul.f32 %v1017, %v752
      %v1340 = vmul.f32 %v1018, %v755
      %v1341 = vmul.f32 %v1018, %v757
      %v1342 = vmul.f32 %v1019, %v760
      %v1343 = vmul.f32 %v1019, %v762
      %v1344 = vmul.f32 %v1020, %v765
      %v1345 = vmul.f32 %v1020, %v767
      %v1346 = vmul.f32 %v1021, %v770
      %v1347 = vmul.f32 %v1021, %v772
      %v1348 = vmul.f32 %v1022, %v775
      %v1349 = vmul.f32 %v1022, %v777
      %v1350 = vmul.f32 %v1023, %v780
      %v1351 = vmul.f32 %v1023, %v782
      %v1352 = vmul.f32 %v1024, %v745
      %v1353 = vmul.f32 %v1024, %v747
      %v1354 = vmul.f32 %v1025, %v750
      %v1355 = vmul.f32 %v1025, %v752
      %v1356 = vmul.f32 %v1026, %v755
      %v1357 = vmul.f32 %v1026, %v757
      %v1358 = vmul.f32 %v1027, %v760
      %v1359 = vmul.f32 %v1027, %v762
      %v1360 = vmul.f32 %v1028, %v765
      %v1361 = vmul.f32 %v1028, %v767
      %v1362 = vmul.f32 %v1029, %v770
      %v1363 = vmul.f32 %v1029, %v772
      %v1364 = vmul.f32 %v1030, %v775
      %v1365 = vmul.f32 %v1030, %v777
      %v1366 = vmul.f32 %v1031, %v780
      %v1367 = vmul.f32 %v1031, %v782
      %v1368 = vmul.f32 %v1032, %v745
      %v1369 = vmul.f32 %v1032, %v747
      %v1370 = vmul.f32 %v1033, %v750
      %v1371 = vmul.f32 %v1033, %v752
      %v1372 = vmul.f32 %v1034, %v755
      %v1373 = vmul.f32 %v1034, %v757
      %v1374 = vmul.f32 %v1035, %v760
      %v1375 = vmul.f32 %v1035, %v762
      %v1376 = vmul.f32 %v1036, %v765
      %v1377 = vmul.f32 %v1036, %v767
      %v1378 = vmul.f32 %v1037, %v770
      %v1379 = vmul.f32 %v1037, %v772
      %v1380 = vmul.f32 %v1038, %v775
      %v1381 = vmul.f32 %v1038, %v777
      %v1382 = vmul.f32 %v1039, %v780
      %v1383 = vmul.f32 %v1039, %v782
      %v1384 = vmul.f32 %v1040, %v745
      %v1385 = vmul.f32 %v1040, %v747
      %v1386 = vmul.f32 %v1041, %v750
      %v1387 = vmul.f32 %v1041, %v752
      %v1388 = vmul.f32 %v1042, %v755
      %v1389 = vmul.f32 %v1042, %v757
      %v1390 = vmul.f32 %v1043, %v760
      %v1391 = vmul.f32 %v1043, %v762
      %v1392 = vmul.f32 %v1044, %v765
      %v1393 = vmul.f32 %v1044, %v767
      %v1394 = vmul.f32 %v1045, %v770
      %v1395 = vmul.f32 %v1045, %v772
      %v1396 = vmul.f32 %v1046, %v775
      %v1397 = vmul.f32 %v1046, %v777
      %v1398 = vmul.f32 %v1047, %v780
      %v1399 = vmul.f32 %v1047, %v782
      %v1400 = vmul.f32 %v1048, %v745
      %v1401 = vmul.f32 %v1048, %v747
      %v1402 = vmul.f32 %v1049, %v750
      %v1403 = vmul.f32 %v1049, %v752
      %v1404 = vmul.f32 %v1050, %v755
      %v1405 = vmul.f32 %v1050, %v757
      %v1406 = vmul.f32 %v1051, %v760
      %v1407 = vmul.f32 %v1051, %v762
      %v1408 = vmul.f32 %v1052, %v765
      %v1409 = vmul.f32 %v1052, %v767
      %v1410 = vmul.f32 %v1053, %v770
      %v1411 = vmul.f32 %v1053, %v772
      %v1412 = vmul.f32 %v1054, %v775
      %v1413 = vmul.f32 %v1054, %v777
      %v1414 = vmul.f32 %v1055, %v780
      %v1415 = vmul.f32 %v1055, %v782
      %v1416 = vmul.f32 %v1056, %v745
      %v1417 = vmul.f32 %v1056, %v747
      %v1418 = vmul.f32 %v1057, %v750
      %v1419 = vmul.f32 %v1057, %v752
      %v1420 = vmul.f32 %v1058, %v755
      %v1421 = vmul.f32 %v1058, %v757
      %v1422 = vmul.f32 %v1059, %v760
      %v1423 = vmul.f32 %v1059, %v762
      %v1424 = vmul.f32 %v1060, %v765
      %v1425 = vmul.f32 %v1060, %v767
      %v1426 = vmul.f32 %v1061, %v770
      %v1427 = vmul.f32 %v1061, %v772
      %v1428 = vmul.f32 %v1062, %v775
      %v1429 = vmul.f32 %v1062, %v777
      %v1430 = vmul.f32 %v1063, %v780
      %v1431 = vmul.f32 %v1063, %v782
      %v1432 = vmul.f32 %v1064, %v745
      %v1433 = vmul.f32 %v1064, %v747
      %v1434 = vmul.f32 %v1065, %v750
      %v1435 = vmul.f32 %v1065, %v752
      %v1436 = vmul.f32 %v1066, %v755
      %v1437 = vmul.f32 %v1066, %v757
      %v1438 = vmul.f32 %v1067, %v760
      %v1439 = vmul.f32 %v1067, %v762
      %v1440 = vmul.f32 %v1068, %v765
      %v1441 = vmul.f32 %v1068, %v767
      %v1442 = vmul.f32 %v1069, %v770
      %v1443 = vmul.f32 %v1069, %v772
      %v1444 = vmul.f32 %v1070, %v775
      %v1445 = vmul.f32 %v1070, %v777
      %v1446 = vmul.f32 %v1071, %v780
      %v1447 = vmul.f32 %v1071, %v782
      %v1448 = vmul.f32 %v1072, %v745
      %v1449 = vmul.f32 %v1072, %v747
      %v1450 = vmul.f32 %v1073, %v750
      %v1451 = vmul.f32 %v1073, %v752
      %v1452 = vmul.f32 %v1074, %v755
      %v1453 = vmul.f32 %v1074, %v757
      %v1454 = vmul.f32 %v1075, %v760
      %v1455 = vmul.f32 %v1075, %v762
      %v1456 = vmul.f32 %v1076, %v765
      %v1457 = vmul.f32 %v1076, %v767
      %v1458 = vmul.f32 %v1077, %v770
      %v1459 = vmul.f32 %v1077, %v772
      %v1460 = vmul.f32 %v1078, %v775
      %v1461 = vmul.f32 %v1078, %v777
      %v1462 = vmul.f32 %v1079, %v780
      %v1463 = vmul.f32 %v1079, %v782
      %vm1464 = vcmask 261120
      %v1465 = vsel %vm1464, %v1208, 0.0
      %v1466 = vsel %vm1464, %v1210, 0.0
      %v1467 = vadd.f32 %v1465, %v1466
      %v1468 = vsel %vm1464, %v1212, 0.0
      %v1469 = vadd.f32 %v1467, %v1468
      %v1470 = vsel %vm1464, %v1214, 0.0
      %v1471 = vadd.f32 %v1469, %v1470
      %v1472 = vsel %vm1464, %v1216, 0.0
      %v1473 = vadd.f32 %v1471, %v1472
      %v1474 = vsel %vm1464, %v1218, 0.0
      %v1475 = vadd.f32 %v1473, %v1474
      %v1476 = vsel %vm1464, %v1220, 0.0
      %v1477 = vadd.f32 %v1475, %v1476
      %v1478 = vsel %vm1464, %v1222, 0.0
      %v1479 = vadd.f32 %v1477, %v1478
      %v1480 = vsel %vm1464, %v1209, 0.0
      %v1481 = vsel %vm1464, %v1211, 0.0
      %v1482 = vadd.f32 %v1480, %v1481
      %v1483 = vsel %vm1464, %v1213, 0.0
      %v1484 = vadd.f32 %v1482, %v1483
      %v1485 = vsel %vm1464, %v1215, 0.0
      %v1486 = vadd.f32 %v1484, %v1485
      %v1487 = vsel %vm1464, %v1217, 0.0
      %v1488 = vadd.f32 %v1486, %v1487
      %v1489 = vsel %vm1464, %v1219, 0.0
      %v1490 = vadd.f32 %v1488, %v1489
      %v1491 = vsel %vm1464, %v1221, 0.0
      %v1492 = vadd.f32 %v1490, %v1491
      %v1493 = vsel %vm1464, %v1223, 0.0
      %v1494 = vadd.f32 %v1492, %v1493
      %v1495 = vsel %vm1464, %v1224, 0.0
      %v1496 = vsel %vm1464, %v1226, 0.0
      %v1497 = vadd.f32 %v1495, %v1496
      %v1498 = vsel %vm1464, %v1228, 0.0
      %v1499 = vadd.f32 %v1497, %v1498
      %v1500 = vsel %vm1464, %v1230, 0.0
      %v1501 = vadd.f32 %v1499, %v1500
      %v1502 = vsel %vm1464, %v1232, 0.0
      %v1503 = vadd.f32 %v1501, %v1502
      %v1504 = vsel %vm1464, %v1234, 0.0
      %v1505 = vadd.f32 %v1503, %v1504
      %v1506 = vsel %vm1464, %v1236, 0.0
      %v1507 = vadd.f32 %v1505, %v1506
      %v1508 = vsel %vm1464, %v1238, 0.0
      %v1509 = vadd.f32 %v1507, %v1508
      %v1510 = vsel %vm1464, %v1225, 0.0
      %v1511 = vsel %vm1464, %v1227, 0.0
      %v1512 = vadd.f32 %v1510, %v1511
      %v1513 = vsel %vm1464, %v1229, 0.0
      %v1514 = vadd.f32 %v1512, %v1513
      %v1515 = vsel %vm1464, %v1231, 0.0
      %v1516 = vadd.f32 %v1514, %v1515
      %v1517 = vsel %vm1464, %v1233, 0.0
      %v1518 = vadd.f32 %v1516, %v1517
      %v1519 = vsel %vm1464, %v1235, 0.0
      %v1520 = vadd.f32 %v1518, %v1519
      %v1521 = vsel %vm1464, %v1237, 0.0
      %v1522 = vadd.f32 %v1520, %v1521
      %v1523 = vsel %vm1464, %v1239, 0.0
      %v1524 = vadd.f32 %v1522, %v1523
      %v1525 = vsel %vm1464, %v1240, 0.0
      %v1526 = vsel %vm1464, %v1242, 0.0
      %v1527 = vadd.f32 %v1525, %v1526
      %v1528 = vsel %vm1464, %v1244, 0.0
      %v1529 = vadd.f32 %v1527, %v1528
      %v1530 = vsel %vm1464, %v1246, 0.0
      %v1531 = vadd.f32 %v1529, %v1530
      %v1532 = vsel %vm1464, %v1248, 0.0
      %v1533 = vadd.f32 %v1531, %v1532
      %v1534 = vsel %vm1464, %v1250, 0.0
      %v1535 = vadd.f32 %v1533, %v1534
      %v1536 = vsel %vm1464, %v1252, 0.0
      %v1537 = vadd.f32 %v1535, %v1536
      %v1538 = vsel %vm1464, %v1254, 0.0
      %v1539 = vadd.f32 %v1537, %v1538
      %v1540 = vsel %vm1464, %v1241, 0.0
      %v1541 = vsel %vm1464, %v1243, 0.0
      %v1542 = vadd.f32 %v1540, %v1541
      %v1543 = vsel %vm1464, %v1245, 0.0
      %v1544 = vadd.f32 %v1542, %v1543
      %v1545 = vsel %vm1464, %v1247, 0.0
      %v1546 = vadd.f32 %v1544, %v1545
      %v1547 = vsel %vm1464, %v1249, 0.0
      %v1548 = vadd.f32 %v1546, %v1547
      %v1549 = vsel %vm1464, %v1251, 0.0
      %v1550 = vadd.f32 %v1548, %v1549
      %v1551 = vsel %vm1464, %v1253, 0.0
      %v1552 = vadd.f32 %v1550, %v1551
      %v1553 = vsel %vm1464, %v1255, 0.0
      %v1554 = vadd.f32 %v1552, %v1553
      %v1555 = vsel %vm1464, %v1256, 0.0
      %v1556 = vsel %vm1464, %v1258, 0.0
      %v1557 = vadd.f32 %v1555, %v1556
      %v1558 = vsel %vm1464, %v1260, 0.0
      %v1559 = vadd.f32 %v1557, %v1558
      %v1560 = vsel %vm1464, %v1262, 0.0
      %v1561 = vadd.f32 %v1559, %v1560
      %v1562 = vsel %vm1464, %v1264, 0.0
      %v1563 = vadd.f32 %v1561, %v1562
      %v1564 = vsel %vm1464, %v1266, 0.0
      %v1565 = vadd.f32 %v1563, %v1564
      %v1566 = vsel %vm1464, %v1268, 0.0
      %v1567 = vadd.f32 %v1565, %v1566
      %v1568 = vsel %vm1464, %v1270, 0.0
      %v1569 = vadd.f32 %v1567, %v1568
      %v1570 = vsel %vm1464, %v1257, 0.0
      %v1571 = vsel %vm1464, %v1259, 0.0
      %v1572 = vadd.f32 %v1570, %v1571
      %v1573 = vsel %vm1464, %v1261, 0.0
      %v1574 = vadd.f32 %v1572, %v1573
      %v1575 = vsel %vm1464, %v1263, 0.0
      %v1576 = vadd.f32 %v1574, %v1575
      %v1577 = vsel %vm1464, %v1265, 0.0
      %v1578 = vadd.f32 %v1576, %v1577
      %v1579 = vsel %vm1464, %v1267, 0.0
      %v1580 = vadd.f32 %v1578, %v1579
      %v1581 = vsel %vm1464, %v1269, 0.0
      %v1582 = vadd.f32 %v1580, %v1581
      %v1583 = vsel %vm1464, %v1271, 0.0
      %v1584 = vadd.f32 %v1582, %v1583
      %v1585 = vsel %vm1464, %v1272, 0.0
      %v1586 = vsel %vm1464, %v1274, 0.0
      %v1587 = vadd.f32 %v1585, %v1586
      %v1588 = vsel %vm1464, %v1276, 0.0
      %v1589 = vadd.f32 %v1587, %v1588
      %v1590 = vsel %vm1464, %v1278, 0.0
      %v1591 = vadd.f32 %v1589, %v1590
      %v1592 = vsel %vm1464, %v1280, 0.0
      %v1593 = vadd.f32 %v1591, %v1592
      %v1594 = vsel %vm1464, %v1282, 0.0
      %v1595 = vadd.f32 %v1593, %v1594
      %v1596 = vsel %vm1464, %v1284, 0.0
      %v1597 = vadd.f32 %v1595, %v1596
      %v1598 = vsel %vm1464, %v1286, 0.0
      %v1599 = vadd.f32 %v1597, %v1598
      %v1600 = vsel %vm1464, %v1273, 0.0
      %v1601 = vsel %vm1464, %v1275, 0.0
      %v1602 = vadd.f32 %v1600, %v1601
      %v1603 = vsel %vm1464, %v1277, 0.0
      %v1604 = vadd.f32 %v1602, %v1603
      %v1605 = vsel %vm1464, %v1279, 0.0
      %v1606 = vadd.f32 %v1604, %v1605
      %v1607 = vsel %vm1464, %v1281, 0.0
      %v1608 = vadd.f32 %v1606, %v1607
      %v1609 = vsel %vm1464, %v1283, 0.0
      %v1610 = vadd.f32 %v1608, %v1609
      %v1611 = vsel %vm1464, %v1285, 0.0
      %v1612 = vadd.f32 %v1610, %v1611
      %v1613 = vsel %vm1464, %v1287, 0.0
      %v1614 = vadd.f32 %v1612, %v1613
      %v1615 = vsel %vm1464, %v1288, 0.0
      %v1616 = vsel %vm1464, %v1290, 0.0
      %v1617 = vadd.f32 %v1615, %v1616
      %v1618 = vsel %vm1464, %v1292, 0.0
      %v1619 = vadd.f32 %v1617, %v1618
      %v1620 = vsel %vm1464, %v1294, 0.0
      %v1621 = vadd.f32 %v1619, %v1620
      %v1622 = vsel %vm1464, %v1296, 0.0
      %v1623 = vadd.f32 %v1621, %v1622
      %v1624 = vsel %vm1464, %v1298, 0.0
      %v1625 = vadd.f32 %v1623, %v1624
      %v1626 = vsel %vm1464, %v1300, 0.0
      %v1627 = vadd.f32 %v1625, %v1626
      %v1628 = vsel %vm1464, %v1302, 0.0
      %v1629 = vadd.f32 %v1627, %v1628
      %v1630 = vsel %vm1464, %v1289, 0.0
      %v1631 = vsel %vm1464, %v1291, 0.0
      %v1632 = vadd.f32 %v1630, %v1631
      %v1633 = vsel %vm1464, %v1293, 0.0
      %v1634 = vadd.f32 %v1632, %v1633
      %v1635 = vsel %vm1464, %v1295, 0.0
      %v1636 = vadd.f32 %v1634, %v1635
      %v1637 = vsel %vm1464, %v1297, 0.0
      %v1638 = vadd.f32 %v1636, %v1637
      %v1639 = vsel %vm1464, %v1299, 0.0
      %v1640 = vadd.f32 %v1638, %v1639
      %v1641 = vsel %vm1464, %v1301, 0.0
      %v1642 = vadd.f32 %v1640, %v1641
      %v1643 = vsel %vm1464, %v1303, 0.0
      %v1644 = vadd.f32 %v1642, %v1643
      %v1645 = vsel %vm1464, %v1304, 0.0
      %v1646 = vsel %vm1464, %v1306, 0.0
      %v1647 = vadd.f32 %v1645, %v1646
      %v1648 = vsel %vm1464, %v1308, 0.0
      %v1649 = vadd.f32 %v1647, %v1648
      %v1650 = vsel %vm1464, %v1310, 0.0
      %v1651 = vadd.f32 %v1649, %v1650
      %v1652 = vsel %vm1464, %v1312, 0.0
      %v1653 = vadd.f32 %v1651, %v1652
      %v1654 = vsel %vm1464, %v1314, 0.0
      %v1655 = vadd.f32 %v1653, %v1654
      %v1656 = vsel %vm1464, %v1316, 0.0
      %v1657 = vadd.f32 %v1655, %v1656
      %v1658 = vsel %vm1464, %v1318, 0.0
      %v1659 = vadd.f32 %v1657, %v1658
      %v1660 = vsel %vm1464, %v1305, 0.0
      %v1661 = vsel %vm1464, %v1307, 0.0
      %v1662 = vadd.f32 %v1660, %v1661
      %v1663 = vsel %vm1464, %v1309, 0.0
      %v1664 = vadd.f32 %v1662, %v1663
      %v1665 = vsel %vm1464, %v1311, 0.0
      %v1666 = vadd.f32 %v1664, %v1665
      %v1667 = vsel %vm1464, %v1313, 0.0
      %v1668 = vadd.f32 %v1666, %v1667
      %v1669 = vsel %vm1464, %v1315, 0.0
      %v1670 = vadd.f32 %v1668, %v1669
      %v1671 = vsel %vm1464, %v1317, 0.0
      %v1672 = vadd.f32 %v1670, %v1671
      %v1673 = vsel %vm1464, %v1319, 0.0
      %v1674 = vadd.f32 %v1672, %v1673
      %v1675 = vsel %vm1464, %v1320, 0.0
      %v1676 = vsel %vm1464, %v1322, 0.0
      %v1677 = vadd.f32 %v1675, %v1676
      %v1678 = vsel %vm1464, %v1324, 0.0
      %v1679 = vadd.f32 %v1677, %v1678
      %v1680 = vsel %vm1464, %v1326, 0.0
      %v1681 = vadd.f32 %v1679, %v1680
      %v1682 = vsel %vm1464, %v1328, 0.0
      %v1683 = vadd.f32 %v1681, %v1682
      %v1684 = vsel %vm1464, %v1330, 0.0
      %v1685 = vadd.f32 %v1683, %v1684
      %v1686 = vsel %vm1464, %v1332, 0.0
      %v1687 = vadd.f32 %v1685, %v1686
      %v1688 = vsel %vm1464, %v1334, 0.0
      %v1689 = vadd.f32 %v1687, %v1688
      %v1690 = vsel %vm1464, %v1321, 0.0
      %v1691 = vsel %vm1464, %v1323, 0.0
      %v1692 = vadd.f32 %v1690, %v1691
      %v1693 = vsel %vm1464, %v1325, 0.0
      %v1694 = vadd.f32 %v1692, %v1693
      %v1695 = vsel %vm1464, %v1327, 0.0
      %v1696 = vadd.f32 %v1694, %v1695
      %v1697 = vsel %vm1464, %v1329, 0.0
      %v1698 = vadd.f32 %v1696, %v1697
      %v1699 = vsel %vm1464, %v1331, 0.0
      %v1700 = vadd.f32 %v1698, %v1699
      %v1701 = vsel %vm1464, %v1333, 0.0
      %v1702 = vadd.f32 %v1700, %v1701
      %v1703 = vsel %vm1464, %v1335, 0.0
      %v1704 = vadd.f32 %v1702, %v1703
      %v1705 = vsel %vm1464, %v1336, 0.0
      %v1706 = vsel %vm1464, %v1338, 0.0
      %v1707 = vadd.f32 %v1705, %v1706
      %v1708 = vsel %vm1464, %v1340, 0.0
      %v1709 = vadd.f32 %v1707, %v1708
      %v1710 = vsel %vm1464, %v1342, 0.0
      %v1711 = vadd.f32 %v1709, %v1710
      %v1712 = vsel %vm1464, %v1344, 0.0
      %v1713 = vadd.f32 %v1711, %v1712
      %v1714 = vsel %vm1464, %v1346, 0.0
      %v1715 = vadd.f32 %v1713, %v1714
      %v1716 = vsel %vm1464, %v1348, 0.0
      %v1717 = vadd.f32 %v1715, %v1716
      %v1718 = vsel %vm1464, %v1350, 0.0
      %v1719 = vadd.f32 %v1717, %v1718
      %v1720 = vsel %vm1464, %v1337, 0.0
      %v1721 = vsel %vm1464, %v1339, 0.0
      %v1722 = vadd.f32 %v1720, %v1721
      %v1723 = vsel %vm1464, %v1341, 0.0
      %v1724 = vadd.f32 %v1722, %v1723
      %v1725 = vsel %vm1464, %v1343, 0.0
      %v1726 = vadd.f32 %v1724, %v1725
      %v1727 = vsel %vm1464, %v1345, 0.0
      %v1728 = vadd.f32 %v1726, %v1727
      %v1729 = vsel %vm1464, %v1347, 0.0
      %v1730 = vadd.f32 %v1728, %v1729
      %v1731 = vsel %vm1464, %v1349, 0.0
      %v1732 = vadd.f32 %v1730, %v1731
      %v1733 = vsel %vm1464, %v1351, 0.0
      %v1734 = vadd.f32 %v1732, %v1733
      %v1735 = vsel %vm1464, %v1352, 0.0
      %v1736 = vsel %vm1464, %v1354, 0.0
      %v1737 = vadd.f32 %v1735, %v1736
      %v1738 = vsel %vm1464, %v1356, 0.0
      %v1739 = vadd.f32 %v1737, %v1738
      %v1740 = vsel %vm1464, %v1358, 0.0
      %v1741 = vadd.f32 %v1739, %v1740
      %v1742 = vsel %vm1464, %v1360, 0.0
      %v1743 = vadd.f32 %v1741, %v1742
      %v1744 = vsel %vm1464, %v1362, 0.0
      %v1745 = vadd.f32 %v1743, %v1744
      %v1746 = vsel %vm1464, %v1364, 0.0
      %v1747 = vadd.f32 %v1745, %v1746
      %v1748 = vsel %vm1464, %v1366, 0.0
      %v1749 = vadd.f32 %v1747, %v1748
      %v1750 = vsel %vm1464, %v1353, 0.0
      %v1751 = vsel %vm1464, %v1355, 0.0
      %v1752 = vadd.f32 %v1750, %v1751
      %v1753 = vsel %vm1464, %v1357, 0.0
      %v1754 = vadd.f32 %v1752, %v1753
      %v1755 = vsel %vm1464, %v1359, 0.0
      %v1756 = vadd.f32 %v1754, %v1755
      %v1757 = vsel %vm1464, %v1361, 0.0
      %v1758 = vadd.f32 %v1756, %v1757
      %v1759 = vsel %vm1464, %v1363, 0.0
      %v1760 = vadd.f32 %v1758, %v1759
      %v1761 = vsel %vm1464, %v1365, 0.0
      %v1762 = vadd.f32 %v1760, %v1761
      %v1763 = vsel %vm1464, %v1367, 0.0
      %v1764 = vadd.f32 %v1762, %v1763
      %v1765 = vsel %vm1464, %v1368, 0.0
      %v1766 = vsel %vm1464, %v1370, 0.0
      %v1767 = vadd.f32 %v1765, %v1766
      %v1768 = vsel %vm1464, %v1372, 0.0
      %v1769 = vadd.f32 %v1767, %v1768
      %v1770 = vsel %vm1464, %v1374, 0.0
      %v1771 = vadd.f32 %v1769, %v1770
      %v1772 = vsel %vm1464, %v1376, 0.0
      %v1773 = vadd.f32 %v1771, %v1772
      %v1774 = vsel %vm1464, %v1378, 0.0
      %v1775 = vadd.f32 %v1773, %v1774
      %v1776 = vsel %vm1464, %v1380, 0.0
      %v1777 = vadd.f32 %v1775, %v1776
      %v1778 = vsel %vm1464, %v1382, 0.0
      %v1779 = vadd.f32 %v1777, %v1778
      %v1780 = vsel %vm1464, %v1369, 0.0
      %v1781 = vsel %vm1464, %v1371, 0.0
      %v1782 = vadd.f32 %v1780, %v1781
      %v1783 = vsel %vm1464, %v1373, 0.0
      %v1784 = vadd.f32 %v1782, %v1783
      %v1785 = vsel %vm1464, %v1375, 0.0
      %v1786 = vadd.f32 %v1784, %v1785
      %v1787 = vsel %vm1464, %v1377, 0.0
      %v1788 = vadd.f32 %v1786, %v1787
      %v1789 = vsel %vm1464, %v1379, 0.0
      %v1790 = vadd.f32 %v1788, %v1789
      %v1791 = vsel %vm1464, %v1381, 0.0
      %v1792 = vadd.f32 %v1790, %v1791
      %v1793 = vsel %vm1464, %v1383, 0.0
      %v1794 = vadd.f32 %v1792, %v1793
      %v1795 = vsel %vm1464, %v1384, 0.0
      %v1796 = vsel %vm1464, %v1386, 0.0
      %v1797 = vadd.f32 %v1795, %v1796
      %v1798 = vsel %vm1464, %v1388, 0.0
      %v1799 = vadd.f32 %v1797, %v1798
      %v1800 = vsel %vm1464, %v1390, 0.0
      %v1801 = vadd.f32 %v1799, %v1800
      %v1802 = vsel %vm1464, %v1392, 0.0
      %v1803 = vadd.f32 %v1801, %v1802
      %v1804 = vsel %vm1464, %v1394, 0.0
      %v1805 = vadd.f32 %v1803, %v1804
      %v1806 = vsel %vm1464, %v1396, 0.0
      %v1807 = vadd.f32 %v1805, %v1806
      %v1808 = vsel %vm1464, %v1398, 0.0
      %v1809 = vadd.f32 %v1807, %v1808
      %v1810 = vsel %vm1464, %v1385, 0.0
      %v1811 = vsel %vm1464, %v1387, 0.0
      %v1812 = vadd.f32 %v1810, %v1811
      %v1813 = vsel %vm1464, %v1389, 0.0
      %v1814 = vadd.f32 %v1812, %v1813
      %v1815 = vsel %vm1464, %v1391, 0.0
      %v1816 = vadd.f32 %v1814, %v1815
      %v1817 = vsel %vm1464, %v1393, 0.0
      %v1818 = vadd.f32 %v1816, %v1817
      %v1819 = vsel %vm1464, %v1395, 0.0
      %v1820 = vadd.f32 %v1818, %v1819
      %v1821 = vsel %vm1464, %v1397, 0.0
      %v1822 = vadd.f32 %v1820, %v1821
      %v1823 = vsel %vm1464, %v1399, 0.0
      %v1824 = vadd.f32 %v1822, %v1823
      %v1825 = vsel %vm1464, %v1400, 0.0
      %v1826 = vsel %vm1464, %v1402, 0.0
      %v1827 = vadd.f32 %v1825, %v1826
      %v1828 = vsel %vm1464, %v1404, 0.0
      %v1829 = vadd.f32 %v1827, %v1828
      %v1830 = vsel %vm1464, %v1406, 0.0
      %v1831 = vadd.f32 %v1829, %v1830
      %v1832 = vsel %vm1464, %v1408, 0.0
      %v1833 = vadd.f32 %v1831, %v1832
      %v1834 = vsel %vm1464, %v1410, 0.0
      %v1835 = vadd.f32 %v1833, %v1834
      %v1836 = vsel %vm1464, %v1412, 0.0
      %v1837 = vadd.f32 %v1835, %v1836
      %v1838 = vsel %vm1464, %v1414, 0.0
      %v1839 = vadd.f32 %v1837, %v1838
      %v1840 = vsel %vm1464, %v1401, 0.0
      %v1841 = vsel %vm1464, %v1403, 0.0
      %v1842 = vadd.f32 %v1840, %v1841
      %v1843 = vsel %vm1464, %v1405, 0.0
      %v1844 = vadd.f32 %v1842, %v1843
      %v1845 = vsel %vm1464, %v1407, 0.0
      %v1846 = vadd.f32 %v1844, %v1845
      %v1847 = vsel %vm1464, %v1409, 0.0
      %v1848 = vadd.f32 %v1846, %v1847
      %v1849 = vsel %vm1464, %v1411, 0.0
      %v1850 = vadd.f32 %v1848, %v1849
      %v1851 = vsel %vm1464, %v1413, 0.0
      %v1852 = vadd.f32 %v1850, %v1851
      %v1853 = vsel %vm1464, %v1415, 0.0
      %v1854 = vadd.f32 %v1852, %v1853
      %v1855 = vsel %vm1464, %v1416, 0.0
      %v1856 = vsel %vm1464, %v1418, 0.0
      %v1857 = vadd.f32 %v1855, %v1856
      %v1858 = vsel %vm1464, %v1420, 0.0
      %v1859 = vadd.f32 %v1857, %v1858
      %v1860 = vsel %vm1464, %v1422, 0.0
      %v1861 = vadd.f32 %v1859, %v1860
      %v1862 = vsel %vm1464, %v1424, 0.0
      %v1863 = vadd.f32 %v1861, %v1862
      %v1864 = vsel %vm1464, %v1426, 0.0
      %v1865 = vadd.f32 %v1863, %v1864
      %v1866 = vsel %vm1464, %v1428, 0.0
      %v1867 = vadd.f32 %v1865, %v1866
      %v1868 = vsel %vm1464, %v1430, 0.0
      %v1869 = vadd.f32 %v1867, %v1868
      %v1870 = vsel %vm1464, %v1417, 0.0
      %v1871 = vsel %vm1464, %v1419, 0.0
      %v1872 = vadd.f32 %v1870, %v1871
      %v1873 = vsel %vm1464, %v1421, 0.0
      %v1874 = vadd.f32 %v1872, %v1873
      %v1875 = vsel %vm1464, %v1423, 0.0
      %v1876 = vadd.f32 %v1874, %v1875
      %v1877 = vsel %vm1464, %v1425, 0.0
      %v1878 = vadd.f32 %v1876, %v1877
      %v1879 = vsel %vm1464, %v1427, 0.0
      %v1880 = vadd.f32 %v1878, %v1879
      %v1881 = vsel %vm1464, %v1429, 0.0
      %v1882 = vadd.f32 %v1880, %v1881
      %v1883 = vsel %vm1464, %v1431, 0.0
      %v1884 = vadd.f32 %v1882, %v1883
      %v1885 = vsel %vm1464, %v1432, 0.0
      %v1886 = vsel %vm1464, %v1434, 0.0
      %v1887 = vadd.f32 %v1885, %v1886
      %v1888 = vsel %vm1464, %v1436, 0.0
      %v1889 = vadd.f32 %v1887, %v1888
      %v1890 = vsel %vm1464, %v1438, 0.0
      %v1891 = vadd.f32 %v1889, %v1890
      %v1892 = vsel %vm1464, %v1440, 0.0
      %v1893 = vadd.f32 %v1891, %v1892
      %v1894 = vsel %vm1464, %v1442, 0.0
      %v1895 = vadd.f32 %v1893, %v1894
      %v1896 = vsel %vm1464, %v1444, 0.0
      %v1897 = vadd.f32 %v1895, %v1896
      %v1898 = vsel %vm1464, %v1446, 0.0
      %v1899 = vadd.f32 %v1897, %v1898
      %v1900 = vsel %vm1464, %v1433, 0.0
      %v1901 = vsel %vm1464, %v1435, 0.0
      %v1902 = vadd.f32 %v1900, %v1901
      %v1903 = vsel %vm1464, %v1437, 0.0
      %v1904 = vadd.f32 %v1902, %v1903
      %v1905 = vsel %vm1464, %v1439, 0.0
      %v1906 = vadd.f32 %v1904, %v1905
      %v1907 = vsel %vm1464, %v1441, 0.0
      %v1908 = vadd.f32 %v1906, %v1907
      %v1909 = vsel %vm1464, %v1443, 0.0
      %v1910 = vadd.f32 %v1908, %v1909
      %v1911 = vsel %vm1464, %v1445, 0.0
      %v1912 = vadd.f32 %v1910, %v1911
      %v1913 = vsel %vm1464, %v1447, 0.0
      %v1914 = vadd.f32 %v1912, %v1913
      %v1915 = vsel %vm1464, %v1448, 0.0
      %v1916 = vsel %vm1464, %v1450, 0.0
      %v1917 = vadd.f32 %v1915, %v1916
      %v1918 = vsel %vm1464, %v1452, 0.0
      %v1919 = vadd.f32 %v1917, %v1918
      %v1920 = vsel %vm1464, %v1454, 0.0
      %v1921 = vadd.f32 %v1919, %v1920
      %v1922 = vsel %vm1464, %v1456, 0.0
      %v1923 = vadd.f32 %v1921, %v1922
      %v1924 = vsel %vm1464, %v1458, 0.0
      %v1925 = vadd.f32 %v1923, %v1924
      %v1926 = vsel %vm1464, %v1460, 0.0
      %v1927 = vadd.f32 %v1925, %v1926
      %v1928 = vsel %vm1464, %v1462, 0.0
      %v1929 = vadd.f32 %v1927, %v1928
      %v1930 = vsel %vm1464, %v1449, 0.0
      %v1931 = vsel %vm1464, %v1451, 0.0
      %v1932 = vadd.f32 %v1930, %v1931
      %v1933 = vsel %vm1464, %v1453, 0.0
      %v1934 = vadd.f32 %v1932, %v1933
      %v1935 = vsel %vm1464, %v1455, 0.0
      %v1936 = vadd.f32 %v1934, %v1935
      %v1937 = vsel %vm1464, %v1457, 0.0
      %v1938 = vadd.f32 %v1936, %v1937
      %v1939 = vsel %vm1464, %v1459, 0.0
      %v1940 = vadd.f32 %v1938, %v1939
      %v1941 = vsel %vm1464, %v1461, 0.0
      %v1942 = vadd.f32 %v1940, %v1941
      %v1943 = vsel %vm1464, %v1463, 0.0
      %v1944 = vadd.f32 %v1942, %v1943
      %v1945 = vadd.f32 %v1479, 0.0
      %v1946 = vadd.f32 %v1494, 0.0
      %v1947 = vadd.f32 %v1509, 0.0
      %v1948 = vadd.f32 %v1524, 0.0
      %v1949 = vadd.f32 %v1539, 0.0
      %v1950 = vadd.f32 %v1554, 0.0
      %v1951 = vadd.f32 %v1569, 0.0
      %v1952 = vadd.f32 %v1584, 0.0
      %v1953 = vadd.f32 %v1599, 0.0
      %v1954 = vadd.f32 %v1614, 0.0
      %v1955 = vadd.f32 %v1629, 0.0
      %v1956 = vadd.f32 %v1644, 0.0
      %v1957 = vadd.f32 %v1659, 0.0
      %v1958 = vadd.f32 %v1674, 0.0
      %v1959 = vadd.f32 %v1689, 0.0
      %v1960 = vadd.f32 %v1704, 0.0
      %v1961 = vadd.f32 %v1719, 0.0
      %v1962 = vadd.f32 %v1734, 0.0
      %v1963 = vadd.f32 %v1749, 0.0
      %v1964 = vadd.f32 %v1764, 0.0
      %v1965 = vadd.f32 %v1779, 0.0
      %v1966 = vadd.f32 %v1794, 0.0
      %v1967 = vadd.f32 %v1809, 0.0
      %v1968 = vadd.f32 %v1824, 0.0
      %v1969 = vadd.f32 %v1839, 0.0
      %v1970 = vadd.f32 %v1854, 0.0
      %v1971 = vadd.f32 %v1869, 0.0
      %v1972 = vadd.f32 %v1884, 0.0
      %v1973 = vadd.f32 %v1899, 0.0
      %v1974 = vadd.f32 %v1914, 0.0
      %v1975 = vadd.f32 %v1929, 0.0
      %v1976 = vadd.f32 %v1944, 0.0
      %v1993 = vrot.slane %v620, 1
      %v1994 = vrot.slane %v620, 2
      %v1995 = vrot.slane %v620, 3
      %v1996 = vrot.slane %v620, 4
      %v1997 = vrot.slane %v620, 5
      %v1998 = vrot.slane %v620, 6
      %v1999 = vrot.slane %v620, 7
      %v2000 = vrot.slane %v625, 1
      %v2001 = vrot.slane %v625, 2
      %v2002 = vrot.slane %v625, 3
      %v2003 = vrot.slane %v625, 4
      %v2004 = vrot.slane %v625, 5
      %v2005 = vrot.slane %v625, 6
      %v2006 = vrot.slane %v625, 7
      %v2007 = vrot.slane %v630, 1
      %v2008 = vrot.slane %v630, 2
      %v2009 = vrot.slane %v630, 3
      %v2010 = vrot.slane %v630, 4
      %v2011 = vrot.slane %v630, 5
      %v2012 = vrot.slane %v630, 6
      %v2013 = vrot.slane %v630, 7
      %v2014 = vrot.slane %v635, 1
      %v2015 = vrot.slane %v635, 2
      %v2016 = vrot.slane %v635, 3
      %v2017 = vrot.slane %v635, 4
      %v2018 = vrot.slane %v635, 5
      %v2019 = vrot.slane %v635, 6
      %v2020 = vrot.slane %v635, 7
      %v2021 = vrot.slane %v640, 1
      %v2022 = vrot.slane %v640, 2
      %v2023 = vrot.slane %v640, 3
      %v2024 = vrot.slane %v640, 4
      %v2025 = vrot.slane %v640, 5
      %v2026 = vrot.slane %v640, 6
      %v2027 = vrot.slane %v640, 7
      %v2028 = vrot.slane %v645, 1
      %v2029 = vrot.slane %v645, 2
      %v2030 = vrot.slane %v645, 3
      %v2031 = vrot.slane %v645, 4
      %v2032 = vrot.slane %v645, 5
      %v2033 = vrot.slane %v645, 6
      %v2034 = vrot.slane %v645, 7
      %v2035 = vrot.slane %v650, 1
      %v2036 = vrot.slane %v650, 2
      %v2037 = vrot.slane %v650, 3
      %v2038 = vrot.slane %v650, 4
      %v2039 = vrot.slane %v650, 5
      %v2040 = vrot.slane %v650, 6
      %v2041 = vrot.slane %v650, 7
      %v2042 = vrot.slane %v655, 1
      %v2043 = vrot.slane %v655, 2
      %v2044 = vrot.slane %v655, 3
      %v2045 = vrot.slane %v655, 4
      %v2046 = vrot.slane %v655, 5
      %v2047 = vrot.slane %v655, 6
      %v2048 = vrot.slane %v655, 7
      %v2049 = vrot.slane %v660, 1
      %v2050 = vrot.slane %v660, 2
      %v2051 = vrot.slane %v660, 3
      %v2052 = vrot.slane %v660, 4
      %v2053 = vrot.slane %v660, 5
      %v2054 = vrot.slane %v660, 6
      %v2055 = vrot.slane %v660, 7
      %v2056 = vrot.slane %v665, 1
      %v2057 = vrot.slane %v665, 2
      %v2058 = vrot.slane %v665, 3
      %v2059 = vrot.slane %v665, 4
      %v2060 = vrot.slane %v665, 5
      %v2061 = vrot.slane %v665, 6
      %v2062 = vrot.slane %v665, 7
      %v2063 = vrot.slane %v670, 1
      %v2064 = vrot.slane %v670, 2
      %v2065 = vrot.slane %v670, 3
      %v2066 = vrot.slane %v670, 4
      %v2067 = vrot.slane %v670, 5
      %v2068 = vrot.slane %v670, 6
      %v2069 = vrot.slane %v670, 7
      %v2070 = vrot.slane %v675, 1
      %v2071 = vrot.slane %v675, 2
      %v2072 = vrot.slane %v675, 3
      %v2073 = vrot.slane %v675, 4
      %v2074 = vrot.slane %v675, 5
      %v2075 = vrot.slane %v675, 6
      %v2076 = vrot.slane %v675, 7
      %v2077 = vrot.slane %v680, 1
      %v2078 = vrot.slane %v680, 2
      %v2079 = vrot.slane %v680, 3
      %v2080 = vrot.slane %v680, 4
      %v2081 = vrot.slane %v680, 5
      %v2082 = vrot.slane %v680, 6
      %v2083 = vrot.slane %v680, 7
      %v2084 = vrot.slane %v685, 1
      %v2085 = vrot.slane %v685, 2
      %v2086 = vrot.slane %v685, 3
      %v2087 = vrot.slane %v685, 4
      %v2088 = vrot.slane %v685, 5
      %v2089 = vrot.slane %v685, 6
      %v2090 = vrot.slane %v685, 7
      %v2091 = vrot.slane %v690, 1
      %v2092 = vrot.slane %v690, 2
      %v2093 = vrot.slane %v690, 3
      %v2094 = vrot.slane %v690, 4
      %v2095 = vrot.slane %v690, 5
      %v2096 = vrot.slane %v690, 6
      %v2097 = vrot.slane %v690, 7
      %v2098 = vrot.slane %v695, 1
      %v2099 = vrot.slane %v695, 2
      %v2100 = vrot.slane %v695, 3
      %v2101 = vrot.slane %v695, 4
      %v2102 = vrot.slane %v695, 5
      %v2103 = vrot.slane %v695, 6
      %v2104 = vrot.slane %v695, 7
      %v2105 = vperm.slane %v620, 0
      %v2106 = vperm.slane %v1993, 0
      %v2107 = vperm.slane %v1994, 0
      %v2108 = vperm.slane %v1995, 0
      %v2109 = vperm.slane %v1996, 0
      %v2110 = vperm.slane %v1997, 0
      %v2111 = vperm.slane %v1998, 0
      %v2112 = vperm.slane %v1999, 0
      %v2113 = vperm.slane %v625, 0
      %v2114 = vperm.slane %v2000, 0
      %v2115 = vperm.slane %v2001, 0
      %v2116 = vperm.slane %v2002, 0
      %v2117 = vperm.slane %v2003, 0
      %v2118 = vperm.slane %v2004, 0
      %v2119 = vperm.slane %v2005, 0
      %v2120 = vperm.slane %v2006, 0
      %v2121 = vperm.slane %v630, 0
      %v2122 = vperm.slane %v2007, 0
      %v2123 = vperm.slane %v2008, 0
      %v2124 = vperm.slane %v2009, 0
      %v2125 = vperm.slane %v2010, 0
      %v2126 = vperm.slane %v2011, 0
      %v2127 = vperm.slane %v2012, 0
      %v2128 = vperm.slane %v2013, 0
      %v2129 = vperm.slane %v635, 0
      %v2130 = vperm.slane %v2014, 0
      %v2131 = vperm.slane %v2015, 0
      %v2132 = vperm.slane %v2016, 0
      %v2133 = vperm.slane %v2017, 0
      %v2134 = vperm.slane %v2018, 0
      %v2135 = vperm.slane %v2019, 0
      %v2136 = vperm.slane %v2020, 0
      %v2137 = vperm.slane %v640, 0
      %v2138 = vperm.slane %v2021, 0
      %v2139 = vperm.slane %v2022, 0
      %v2140 = vperm.slane %v2023, 0
      %v2141 = vperm.slane %v2024, 0
      %v2142 = vperm.slane %v2025, 0
      %v2143 = vperm.slane %v2026, 0
      %v2144 = vperm.slane %v2027, 0
      %v2145 = vperm.slane %v645, 0
      %v2146 = vperm.slane %v2028, 0
      %v2147 = vperm.slane %v2029, 0
      %v2148 = vperm.slane %v2030, 0
      %v2149 = vperm.slane %v2031, 0
      %v2150 = vperm.slane %v2032, 0
      %v2151 = vperm.slane %v2033, 0
      %v2152 = vperm.slane %v2034, 0
      %v2153 = vperm.slane %v650, 0
      %v2154 = vperm.slane %v2035, 0
      %v2155 = vperm.slane %v2036, 0
      %v2156 = vperm.slane %v2037, 0
      %v2157 = vperm.slane %v2038, 0
      %v2158 = vperm.slane %v2039, 0
      %v2159 = vperm.slane %v2040, 0
      %v2160 = vperm.slane %v2041, 0
      %v2161 = vperm.slane %v655, 0
      %v2162 = vperm.slane %v2042, 0
      %v2163 = vperm.slane %v2043, 0
      %v2164 = vperm.slane %v2044, 0
      %v2165 = vperm.slane %v2045, 0
      %v2166 = vperm.slane %v2046, 0
      %v2167 = vperm.slane %v2047, 0
      %v2168 = vperm.slane %v2048, 0
      %v2169 = vperm.slane %v660, 0
      %v2170 = vperm.slane %v2049, 0
      %v2171 = vperm.slane %v2050, 0
      %v2172 = vperm.slane %v2051, 0
      %v2173 = vperm.slane %v2052, 0
      %v2174 = vperm.slane %v2053, 0
      %v2175 = vperm.slane %v2054, 0
      %v2176 = vperm.slane %v2055, 0
      %v2177 = vperm.slane %v665, 0
      %v2178 = vperm.slane %v2056, 0
      %v2179 = vperm.slane %v2057, 0
      %v2180 = vperm.slane %v2058, 0
      %v2181 = vperm.slane %v2059, 0
      %v2182 = vperm.slane %v2060, 0
      %v2183 = vperm.slane %v2061, 0
      %v2184 = vperm.slane %v2062, 0
      %v2185 = vperm.slane %v670, 0
      %v2186 = vperm.slane %v2063, 0
      %v2187 = vperm.slane %v2064, 0
      %v2188 = vperm.slane %v2065, 0
      %v2189 = vperm.slane %v2066, 0
      %v2190 = vperm.slane %v2067, 0
      %v2191 = vperm.slane %v2068, 0
      %v2192 = vperm.slane %v2069, 0
      %v2193 = vperm.slane %v675, 0
      %v2194 = vperm.slane %v2070, 0
      %v2195 = vperm.slane %v2071, 0
      %v2196 = vperm.slane %v2072, 0
      %v2197 = vperm.slane %v2073, 0
      %v2198 = vperm.slane %v2074, 0
      %v2199 = vperm.slane %v2075, 0
      %v2200 = vperm.slane %v2076, 0
      %v2201 = vperm.slane %v680, 0
      %v2202 = vperm.slane %v2077, 0
      %v2203 = vperm.slane %v2078, 0
      %v2204 = vperm.slane %v2079, 0
      %v2205 = vperm.slane %v2080, 0
      %v2206 = vperm.slane %v2081, 0
      %v2207 = vperm.slane %v2082, 0
      %v2208 = vperm.slane %v2083, 0
      %v2209 = vperm.slane %v685, 0
      %v2210 = vperm.slane %v2084, 0
      %v2211 = vperm.slane %v2085, 0
      %v2212 = vperm.slane %v2086, 0
      %v2213 = vperm.slane %v2087, 0
      %v2214 = vperm.slane %v2088, 0
      %v2215 = vperm.slane %v2089, 0
      %v2216 = vperm.slane %v2090, 0
      %v2217 = vperm.slane %v690, 0
      %v2218 = vperm.slane %v2091, 0
      %v2219 = vperm.slane %v2092, 0
      %v2220 = vperm.slane %v2093, 0
      %v2221 = vperm.slane %v2094, 0
      %v2222 = vperm.slane %v2095, 0
      %v2223 = vperm.slane %v2096, 0
      %v2224 = vperm.slane %v2097, 0
      %v2225 = vperm.slane %v695, 0
      %v2226 = vperm.slane %v2098, 0
      %v2227 = vperm.slane %v2099, 0
      %v2228 = vperm.slane %v2100, 0
      %v2229 = vperm.slane %v2101, 0
      %v2230 = vperm.slane %v2102, 0
      %v2231 = vperm.slane %v2103, 0
      %v2232 = vperm.slane %v2104, 0
      %v2361 = vmul.f32 %v2105, %v785
      %v2362 = vmul.f32 %v2105, %v787
      %v2363 = vmul.f32 %v2106, %v790
      %v2364 = vmul.f32 %v2106, %v792
      %v2365 = vmul.f32 %v2107, %v795
      %v2366 = vmul.f32 %v2107, %v797
      %v2367 = vmul.f32 %v2108, %v800
      %v2368 = vmul.f32 %v2108, %v802
      %v2369 = vmul.f32 %v2109, %v805
      %v2370 = vmul.f32 %v2109, %v807
      %v2371 = vmul.f32 %v2110, %v810
      %v2372 = vmul.f32 %v2110, %v812
      %v2373 = vmul.f32 %v2111, %v815
      %v2374 = vmul.f32 %v2111, %v817
      %v2375 = vmul.f32 %v2112, %v820
      %v2376 = vmul.f32 %v2112, %v822
      %v2377 = vmul.f32 %v2113, %v785
      %v2378 = vmul.f32 %v2113, %v787
      %v2379 = vmul.f32 %v2114, %v790
      %v2380 = vmul.f32 %v2114, %v792
      %v2381 = vmul.f32 %v2115, %v795
      %v2382 = vmul.f32 %v2115, %v797
      %v2383 = vmul.f32 %v2116, %v800
      %v2384 = vmul.f32 %v2116, %v802
      %v2385 = vmul.f32 %v2117, %v805
      %v2386 = vmul.f32 %v2117, %v807
      %v2387 = vmul.f32 %v2118, %v810
      %v2388 = vmul.f32 %v2118, %v812
      %v2389 = vmul.f32 %v2119, %v815
      %v2390 = vmul.f32 %v2119, %v817
      %v2391 = vmul.f32 %v2120, %v820
      %v2392 = vmul.f32 %v2120, %v822
      %v2393 = vmul.f32 %v2121, %v785
      %v2394 = vmul.f32 %v2121, %v787
      %v2395 = vmul.f32 %v2122, %v790
      %v2396 = vmul.f32 %v2122, %v792
      %v2397 = vmul.f32 %v2123, %v795
      %v2398 = vmul.f32 %v2123, %v797
      %v2399 = vmul.f32 %v2124, %v800
      %v2400 = vmul.f32 %v2124, %v802
      %v2401 = vmul.f32 %v2125, %v805
      %v2402 = vmul.f32 %v2125, %v807
      %v2403 = vmul.f32 %v2126, %v810
      %v2404 = vmul.f32 %v2126, %v812
      %v2405 = vmul.f32 %v2127, %v815
      %v2406 = vmul.f32 %v2127, %v817
      %v2407 = vmul.f32 %v2128, %v820
      %v2408 = vmul.f32 %v2128, %v822
      %v2409 = vmul.f32 %v2129, %v785
      %v2410 = vmul.f32 %v2129, %v787
      %v2411 = vmul.f32 %v2130, %v790
      %v2412 = vmul.f32 %v2130, %v792
      %v2413 = vmul.f32 %v2131, %v795
      %v2414 = vmul.f32 %v2131, %v797
      %v2415 = vmul.f32 %v2132, %v800
      %v2416 = vmul.f32 %v2132, %v802
      %v2417 = vmul.f32 %v2133, %v805
      %v2418 = vmul.f32 %v2133, %v807
      %v2419 = vmul.f32 %v2134, %v810
      %v2420 = vmul.f32 %v2134, %v812
      %v2421 = vmul.f32 %v2135, %v815
      %v2422 = vmul.f32 %v2135, %v817
      %v2423 = vmul.f32 %v2136, %v820
      %v2424 = vmul.f32 %v2136, %v822
      %v2425 = vmul.f32 %v2137, %v785
      %v2426 = vmul.f32 %v2137, %v787
      %v2427 = vmul.f32 %v2138, %v790
      %v2428 = vmul.f32 %v2138, %v792
      %v2429 = vmul.f32 %v2139, %v795
      %v2430 = vmul.f32 %v2139, %v797
      %v2431 = vmul.f32 %v2140, %v800
      %v2432 = vmul.f32 %v2140, %v802
      %v2433 = vmul.f32 %v2141, %v805
      %v2434 = vmul.f32 %v2141, %v807
      %v2435 = vmul.f32 %v2142, %v810
      %v2436 = vmul.f32 %v2142, %v812
      %v2437 = vmul.f32 %v2143, %v815
      %v2438 = vmul.f32 %v2143, %v817
      %v2439 = vmul.f32 %v2144, %v820
      %v2440 = vmul.f32 %v2144, %v822
      %v2441 = vmul.f32 %v2145, %v785
      %v2442 = vmul.f32 %v2145, %v787
      %v2443 = vmul.f32 %v2146, %v790
      %v2444 = vmul.f32 %v2146, %v792
      %v2445 = vmul.f32 %v2147, %v795
      %v2446 = vmul.f32 %v2147, %v797
      %v2447 = vmul.f32 %v2148, %v800
      %v2448 = vmul.f32 %v2148, %v802
      %v2449 = vmul.f32 %v2149, %v805
      %v2450 = vmul.f32 %v2149, %v807
      %v2451 = vmul.f32 %v2150, %v810
      %v2452 = vmul.f32 %v2150, %v812
      %v2453 = vmul.f32 %v2151, %v815
      %v2454 = vmul.f32 %v2151, %v817
      %v2455 = vmul.f32 %v2152, %v820
      %v2456 = vmul.f32 %v2152, %v822
      %v2457 = vmul.f32 %v2153, %v785
      %v2458 = vmul.f32 %v2153, %v787
      %v2459 = vmul.f32 %v2154, %v790
      %v2460 = vmul.f32 %v2154, %v792
      %v2461 = vmul.f32 %v2155, %v795
      %v2462 = vmul.f32 %v2155, %v797
      %v2463 = vmul.f32 %v2156, %v800
      %v2464 = vmul.f32 %v2156, %v802
      %v2465 = vmul.f32 %v2157, %v805
      %v2466 = vmul.f32 %v2157, %v807
      %v2467 = vmul.f32 %v2158, %v810
      %v2468 = vmul.f32 %v2158, %v812
      %v2469 = vmul.f32 %v2159, %v815
      %v2470 = vmul.f32 %v2159, %v817
      %v2471 = vmul.f32 %v2160, %v820
      %v2472 = vmul.f32 %v2160, %v822
      %v2473 = vmul.f32 %v2161, %v785
      %v2474 = vmul.f32 %v2161, %v787
      %v2475 = vmul.f32 %v2162, %v790
      %v2476 = vmul.f32 %v2162, %v792
      %v2477 = vmul.f32 %v2163, %v795
      %v2478 = vmul.f32 %v2163, %v797
      %v2479 = vmul.f32 %v2164, %v800
      %v2480 = vmul.f32 %v2164, %v802
      %v2481 = vmul.f32 %v2165, %v805
      %v2482 = vmul.f32 %v2165, %v807
      %v2483 = vmul.f32 %v2166, %v810
      %v2484 = vmul.f32 %v2166, %v812
      %v2485 = vmul.f32 %v2167, %v815
      %v2486 = vmul.f32 %v2167, %v817
      %v2487 = vmul.f32 %v2168, %v820
      %v2488 = vmul.f32 %v2168, %v822
      %v2489 = vmul.f32 %v2169, %v785
      %v2490 = vmul.f32 %v2169, %v787
      %v2491 = vmul.f32 %v2170, %v790
      %v2492 = vmul.f32 %v2170, %v792
      %v2493 = vmul.f32 %v2171, %v795
      %v2494 = vmul.f32 %v2171, %v797
      %v2495 = vmul.f32 %v2172, %v800
      %v2496 = vmul.f32 %v2172, %v802
      %v2497 = vmul.f32 %v2173, %v805
      %v2498 = vmul.f32 %v2173, %v807
      %v2499 = vmul.f32 %v2174, %v810
      %v2500 = vmul.f32 %v2174, %v812
      %v2501 = vmul.f32 %v2175, %v815
      %v2502 = vmul.f32 %v2175, %v817
      %v2503 = vmul.f32 %v2176, %v820
      %v2504 = vmul.f32 %v2176, %v822
      %v2505 = vmul.f32 %v2177, %v785
      %v2506 = vmul.f32 %v2177, %v787
      %v2507 = vmul.f32 %v2178, %v790
      %v2508 = vmul.f32 %v2178, %v792
      %v2509 = vmul.f32 %v2179, %v795
      %v2510 = vmul.f32 %v2179, %v797
      %v2511 = vmul.f32 %v2180, %v800
      %v2512 = vmul.f32 %v2180, %v802
      %v2513 = vmul.f32 %v2181, %v805
      %v2514 = vmul.f32 %v2181, %v807
      %v2515 = vmul.f32 %v2182, %v810
      %v2516 = vmul.f32 %v2182, %v812
      %v2517 = vmul.f32 %v2183, %v815
      %v2518 = vmul.f32 %v2183, %v817
      %v2519 = vmul.f32 %v2184, %v820
      %v2520 = vmul.f32 %v2184, %v822
      %v2521 = vmul.f32 %v2185, %v785
      %v2522 = vmul.f32 %v2185, %v787
      %v2523 = vmul.f32 %v2186, %v790
      %v2524 = vmul.f32 %v2186, %v792
      %v2525 = vmul.f32 %v2187, %v795
      %v2526 = vmul.f32 %v2187, %v797
      %v2527 = vmul.f32 %v2188, %v800
      %v2528 = vmul.f32 %v2188, %v802
      %v2529 = vmul.f32 %v2189, %v805
      %v2530 = vmul.f32 %v2189, %v807
      %v2531 = vmul.f32 %v2190, %v810
      %v2532 = vmul.f32 %v2190, %v812
      %v2533 = vmul.f32 %v2191, %v815
      %v2534 = vmul.f32 %v2191, %v817
      %v2535 = vmul.f32 %v2192, %v820
      %v2536 = vmul.f32 %v2192, %v822
      %v2537 = vmul.f32 %v2193, %v785
      %v2538 = vmul.f32 %v2193, %v787
      %v2539 = vmul.f32 %v2194, %v790
      %v2540 = vmul.f32 %v2194, %v792
      %v2541 = vmul.f32 %v2195, %v795
      %v2542 = vmul.f32 %v2195, %v797
      %v2543 = vmul.f32 %v2196, %v800
      %v2544 = vmul.f32 %v2196, %v802
      %v2545 = vmul.f32 %v2197, %v805
      %v2546 = vmul.f32 %v2197, %v807
      %v2547 = vmul.f32 %v2198, %v810
      %v2548 = vmul.f32 %v2198, %v812
      %v2549 = vmul.f32 %v2199, %v815
      %v2550 = vmul.f32 %v2199, %v817
      %v2551 = vmul.f32 %v2200, %v820
      %v2552 = vmul.f32 %v2200, %v822
      %v2553 = vmul.f32 %v2201, %v785
      %v2554 = vmul.f32 %v2201, %v787
      %v2555 = vmul.f32 %v2202, %v790
      %v2556 = vmul.f32 %v2202, %v792
      %v2557 = vmul.f32 %v2203, %v795
      %v2558 = vmul.f32 %v2203, %v797
      %v2559 = vmul.f32 %v2204, %v800
      %v2560 = vmul.f32 %v2204, %v802
      %v2561 = vmul.f32 %v2205, %v805
      %v2562 = vmul.f32 %v2205, %v807
      %v2563 = vmul.f32 %v2206, %v810
      %v2564 = vmul.f32 %v2206, %v812
      %v2565 = vmul.f32 %v2207, %v815
      %v2566 = vmul.f32 %v2207, %v817
      %v2567 = vmul.f32 %v2208, %v820
      %v2568 = vmul.f32 %v2208, %v822
      %v2569 = vmul.f32 %v2209, %v785
      %v2570 = vmul.f32 %v2209, %v787
      %v2571 = vmul.f32 %v2210, %v790
      %v2572 = vmul.f32 %v2210, %v792
      %v2573 = vmul.f32 %v2211, %v795
      %v2574 = vmul.f32 %v2211, %v797
      %v2575 = vmul.f32 %v2212, %v800
      %v2576 = vmul.f32 %v2212, %v802
      %v2577 = vmul.f32 %v2213, %v805
      %v2578 = vmul.f32 %v2213, %v807
      %v2579 = vmul.f32 %v2214, %v810
      %v2580 = vmul.f32 %v2214, %v812
      %v2581 = vmul.f32 %v2215, %v815
      %v2582 = vmul.f32 %v2215, %v817
      %v2583 = vmul.f32 %v2216, %v820
      %v2584 = vmul.f32 %v2216, %v822
      %v2585 = vmul.f32 %v2217, %v785
      %v2586 = vmul.f32 %v2217, %v787
      %v2587 = vmul.f32 %v2218, %v790
      %v2588 = vmul.f32 %v2218, %v792
      %v2589 = vmul.f32 %v2219, %v795
      %v2590 = vmul.f32 %v2219, %v797
      %v2591 = vmul.f32 %v2220, %v800
      %v2592 = vmul.f32 %v2220, %v802
      %v2593 = vmul.f32 %v2221, %v805
      %v2594 = vmul.f32 %v2221, %v807
      %v2595 = vmul.f32 %v2222, %v810
      %v2596 = vmul.f32 %v2222, %v812
      %v2597 = vmul.f32 %v2223, %v815
      %v2598 = vmul.f32 %v2223, %v817
      %v2599 = vmul.f32 %v2224, %v820
      %v2600 = vmul.f32 %v2224, %v822
      %v2601 = vmul.f32 %v2225, %v785
      %v2602 = vmul.f32 %v2225, %v787
      %v2603 = vmul.f32 %v2226, %v790
      %v2604 = vmul.f32 %v2226, %v792
      %v2605 = vmul.f32 %v2227, %v795
      %v2606 = vmul.f32 %v2227, %v797
      %v2607 = vmul.f32 %v2228, %v800
      %v2608 = vmul.f32 %v2228, %v802
      %v2609 = vmul.f32 %v2229, %v805
      %v2610 = vmul.f32 %v2229, %v807
      %v2611 = vmul.f32 %v2230, %v810
      %v2612 = vmul.f32 %v2230, %v812
      %v2613 = vmul.f32 %v2231, %v815
      %v2614 = vmul.f32 %v2231, %v817
      %v2615 = vmul.f32 %v2232, %v820
      %v2616 = vmul.f32 %v2232, %v822
      %v2617 = vsel %vm1464, %v2361, 0.0
      %v2618 = vsel %vm1464, %v2363, 0.0
      %v2619 = vadd.f32 %v2617, %v2618
      %v2620 = vsel %vm1464, %v2365, 0.0
      %v2621 = vadd.f32 %v2619, %v2620
      %v2622 = vsel %vm1464, %v2367, 0.0
      %v2623 = vadd.f32 %v2621, %v2622
      %v2624 = vsel %vm1464, %v2369, 0.0
      %v2625 = vadd.f32 %v2623, %v2624
      %v2626 = vsel %vm1464, %v2371, 0.0
      %v2627 = vadd.f32 %v2625, %v2626
      %v2628 = vsel %vm1464, %v2373, 0.0
      %v2629 = vadd.f32 %v2627, %v2628
      %v2630 = vsel %vm1464, %v2375, 0.0
      %v2631 = vadd.f32 %v2629, %v2630
      %v2632 = vsel %vm1464, %v2362, 0.0
      %v2633 = vsel %vm1464, %v2364, 0.0
      %v2634 = vadd.f32 %v2632, %v2633
      %v2635 = vsel %vm1464, %v2366, 0.0
      %v2636 = vadd.f32 %v2634, %v2635
      %v2637 = vsel %vm1464, %v2368, 0.0
      %v2638 = vadd.f32 %v2636, %v2637
      %v2639 = vsel %vm1464, %v2370, 0.0
      %v2640 = vadd.f32 %v2638, %v2639
      %v2641 = vsel %vm1464, %v2372, 0.0
      %v2642 = vadd.f32 %v2640, %v2641
      %v2643 = vsel %vm1464, %v2374, 0.0
      %v2644 = vadd.f32 %v2642, %v2643
      %v2645 = vsel %vm1464, %v2376, 0.0
      %v2646 = vadd.f32 %v2644, %v2645
      %v2647 = vsel %vm1464, %v2377, 0.0
      %v2648 = vsel %vm1464, %v2379, 0.0
      %v2649 = vadd.f32 %v2647, %v2648
      %v2650 = vsel %vm1464, %v2381, 0.0
      %v2651 = vadd.f32 %v2649, %v2650
      %v2652 = vsel %vm1464, %v2383, 0.0
      %v2653 = vadd.f32 %v2651, %v2652
      %v2654 = vsel %vm1464, %v2385, 0.0
      %v2655 = vadd.f32 %v2653, %v2654
      %v2656 = vsel %vm1464, %v2387, 0.0
      %v2657 = vadd.f32 %v2655, %v2656
      %v2658 = vsel %vm1464, %v2389, 0.0
      %v2659 = vadd.f32 %v2657, %v2658
      %v2660 = vsel %vm1464, %v2391, 0.0
      %v2661 = vadd.f32 %v2659, %v2660
      %v2662 = vsel %vm1464, %v2378, 0.0
      %v2663 = vsel %vm1464, %v2380, 0.0
      %v2664 = vadd.f32 %v2662, %v2663
      %v2665 = vsel %vm1464, %v2382, 0.0
      %v2666 = vadd.f32 %v2664, %v2665
      %v2667 = vsel %vm1464, %v2384, 0.0
      %v2668 = vadd.f32 %v2666, %v2667
      %v2669 = vsel %vm1464, %v2386, 0.0
      %v2670 = vadd.f32 %v2668, %v2669
      %v2671 = vsel %vm1464, %v2388, 0.0
      %v2672 = vadd.f32 %v2670, %v2671
      %v2673 = vsel %vm1464, %v2390, 0.0
      %v2674 = vadd.f32 %v2672, %v2673
      %v2675 = vsel %vm1464, %v2392, 0.0
      %v2676 = vadd.f32 %v2674, %v2675
      %v2677 = vsel %vm1464, %v2393, 0.0
      %v2678 = vsel %vm1464, %v2395, 0.0
      %v2679 = vadd.f32 %v2677, %v2678
      %v2680 = vsel %vm1464, %v2397, 0.0
      %v2681 = vadd.f32 %v2679, %v2680
      %v2682 = vsel %vm1464, %v2399, 0.0
      %v2683 = vadd.f32 %v2681, %v2682
      %v2684 = vsel %vm1464, %v2401, 0.0
      %v2685 = vadd.f32 %v2683, %v2684
      %v2686 = vsel %vm1464, %v2403, 0.0
      %v2687 = vadd.f32 %v2685, %v2686
      %v2688 = vsel %vm1464, %v2405, 0.0
      %v2689 = vadd.f32 %v2687, %v2688
      %v2690 = vsel %vm1464, %v2407, 0.0
      %v2691 = vadd.f32 %v2689, %v2690
      %v2692 = vsel %vm1464, %v2394, 0.0
      %v2693 = vsel %vm1464, %v2396, 0.0
      %v2694 = vadd.f32 %v2692, %v2693
      %v2695 = vsel %vm1464, %v2398, 0.0
      %v2696 = vadd.f32 %v2694, %v2695
      %v2697 = vsel %vm1464, %v2400, 0.0
      %v2698 = vadd.f32 %v2696, %v2697
      %v2699 = vsel %vm1464, %v2402, 0.0
      %v2700 = vadd.f32 %v2698, %v2699
      %v2701 = vsel %vm1464, %v2404, 0.0
      %v2702 = vadd.f32 %v2700, %v2701
      %v2703 = vsel %vm1464, %v2406, 0.0
      %v2704 = vadd.f32 %v2702, %v2703
      %v2705 = vsel %vm1464, %v2408, 0.0
      %v2706 = vadd.f32 %v2704, %v2705
      %v2707 = vsel %vm1464, %v2409, 0.0
      %v2708 = vsel %vm1464, %v2411, 0.0
      %v2709 = vadd.f32 %v2707, %v2708
      %v2710 = vsel %vm1464, %v2413, 0.0
      %v2711 = vadd.f32 %v2709, %v2710
      %v2712 = vsel %vm1464, %v2415, 0.0
      %v2713 = vadd.f32 %v2711, %v2712
      %v2714 = vsel %vm1464, %v2417, 0.0
      %v2715 = vadd.f32 %v2713, %v2714
      %v2716 = vsel %vm1464, %v2419, 0.0
      %v2717 = vadd.f32 %v2715, %v2716
      %v2718 = vsel %vm1464, %v2421, 0.0
      %v2719 = vadd.f32 %v2717, %v2718
      %v2720 = vsel %vm1464, %v2423, 0.0
      %v2721 = vadd.f32 %v2719, %v2720
      %v2722 = vsel %vm1464, %v2410, 0.0
      %v2723 = vsel %vm1464, %v2412, 0.0
      %v2724 = vadd.f32 %v2722, %v2723
      %v2725 = vsel %vm1464, %v2414, 0.0
      %v2726 = vadd.f32 %v2724, %v2725
      %v2727 = vsel %vm1464, %v2416, 0.0
      %v2728 = vadd.f32 %v2726, %v2727
      %v2729 = vsel %vm1464, %v2418, 0.0
      %v2730 = vadd.f32 %v2728, %v2729
      %v2731 = vsel %vm1464, %v2420, 0.0
      %v2732 = vadd.f32 %v2730, %v2731
      %v2733 = vsel %vm1464, %v2422, 0.0
      %v2734 = vadd.f32 %v2732, %v2733
      %v2735 = vsel %vm1464, %v2424, 0.0
      %v2736 = vadd.f32 %v2734, %v2735
      %v2737 = vsel %vm1464, %v2425, 0.0
      %v2738 = vsel %vm1464, %v2427, 0.0
      %v2739 = vadd.f32 %v2737, %v2738
      %v2740 = vsel %vm1464, %v2429, 0.0
      %v2741 = vadd.f32 %v2739, %v2740
      %v2742 = vsel %vm1464, %v2431, 0.0
      %v2743 = vadd.f32 %v2741, %v2742
      %v2744 = vsel %vm1464, %v2433, 0.0
      %v2745 = vadd.f32 %v2743, %v2744
      %v2746 = vsel %vm1464, %v2435, 0.0
      %v2747 = vadd.f32 %v2745, %v2746
      %v2748 = vsel %vm1464, %v2437, 0.0
      %v2749 = vadd.f32 %v2747, %v2748
      %v2750 = vsel %vm1464, %v2439, 0.0
      %v2751 = vadd.f32 %v2749, %v2750
      %v2752 = vsel %vm1464, %v2426, 0.0
      %v2753 = vsel %vm1464, %v2428, 0.0
      %v2754 = vadd.f32 %v2752, %v2753
      %v2755 = vsel %vm1464, %v2430, 0.0
      %v2756 = vadd.f32 %v2754, %v2755
      %v2757 = vsel %vm1464, %v2432, 0.0
      %v2758 = vadd.f32 %v2756, %v2757
      %v2759 = vsel %vm1464, %v2434, 0.0
      %v2760 = vadd.f32 %v2758, %v2759
      %v2761 = vsel %vm1464, %v2436, 0.0
      %v2762 = vadd.f32 %v2760, %v2761
      %v2763 = vsel %vm1464, %v2438, 0.0
      %v2764 = vadd.f32 %v2762, %v2763
      %v2765 = vsel %vm1464, %v2440, 0.0
      %v2766 = vadd.f32 %v2764, %v2765
      %v2767 = vsel %vm1464, %v2441, 0.0
      %v2768 = vsel %vm1464, %v2443, 0.0
      %v2769 = vadd.f32 %v2767, %v2768
      %v2770 = vsel %vm1464, %v2445, 0.0
      %v2771 = vadd.f32 %v2769, %v2770
      %v2772 = vsel %vm1464, %v2447, 0.0
      %v2773 = vadd.f32 %v2771, %v2772
      %v2774 = vsel %vm1464, %v2449, 0.0
      %v2775 = vadd.f32 %v2773, %v2774
      %v2776 = vsel %vm1464, %v2451, 0.0
      %v2777 = vadd.f32 %v2775, %v2776
      %v2778 = vsel %vm1464, %v2453, 0.0
      %v2779 = vadd.f32 %v2777, %v2778
      %v2780 = vsel %vm1464, %v2455, 0.0
      %v2781 = vadd.f32 %v2779, %v2780
      %v2782 = vsel %vm1464, %v2442, 0.0
      %v2783 = vsel %vm1464, %v2444, 0.0
      %v2784 = vadd.f32 %v2782, %v2783
      %v2785 = vsel %vm1464, %v2446, 0.0
      %v2786 = vadd.f32 %v2784, %v2785
      %v2787 = vsel %vm1464, %v2448, 0.0
      %v2788 = vadd.f32 %v2786, %v2787
      %v2789 = vsel %vm1464, %v2450, 0.0
      %v2790 = vadd.f32 %v2788, %v2789
      %v2791 = vsel %vm1464, %v2452, 0.0
      %v2792 = vadd.f32 %v2790, %v2791
      %v2793 = vsel %vm1464, %v2454, 0.0
      %v2794 = vadd.f32 %v2792, %v2793
      %v2795 = vsel %vm1464, %v2456, 0.0
      %v2796 = vadd.f32 %v2794, %v2795
      %v2797 = vsel %vm1464, %v2457, 0.0
      %v2798 = vsel %vm1464, %v2459, 0.0
      %v2799 = vadd.f32 %v2797, %v2798
      %v2800 = vsel %vm1464, %v2461, 0.0
      %v2801 = vadd.f32 %v2799, %v2800
      %v2802 = vsel %vm1464, %v2463, 0.0
      %v2803 = vadd.f32 %v2801, %v2802
      %v2804 = vsel %vm1464, %v2465, 0.0
      %v2805 = vadd.f32 %v2803, %v2804
      %v2806 = vsel %vm1464, %v2467, 0.0
      %v2807 = vadd.f32 %v2805, %v2806
      %v2808 = vsel %vm1464, %v2469, 0.0
      %v2809 = vadd.f32 %v2807, %v2808
      %v2810 = vsel %vm1464, %v2471, 0.0
      %v2811 = vadd.f32 %v2809, %v2810
      %v2812 = vsel %vm1464, %v2458, 0.0
      %v2813 = vsel %vm1464, %v2460, 0.0
      %v2814 = vadd.f32 %v2812, %v2813
      %v2815 = vsel %vm1464, %v2462, 0.0
      %v2816 = vadd.f32 %v2814, %v2815
      %v2817 = vsel %vm1464, %v2464, 0.0
      %v2818 = vadd.f32 %v2816, %v2817
      %v2819 = vsel %vm1464, %v2466, 0.0
      %v2820 = vadd.f32 %v2818, %v2819
      %v2821 = vsel %vm1464, %v2468, 0.0
      %v2822 = vadd.f32 %v2820, %v2821
      %v2823 = vsel %vm1464, %v2470, 0.0
      %v2824 = vadd.f32 %v2822, %v2823
      %v2825 = vsel %vm1464, %v2472, 0.0
      %v2826 = vadd.f32 %v2824, %v2825
      %v2827 = vsel %vm1464, %v2473, 0.0
      %v2828 = vsel %vm1464, %v2475, 0.0
      %v2829 = vadd.f32 %v2827, %v2828
      %v2830 = vsel %vm1464, %v2477, 0.0
      %v2831 = vadd.f32 %v2829, %v2830
      %v2832 = vsel %vm1464, %v2479, 0.0
      %v2833 = vadd.f32 %v2831, %v2832
      %v2834 = vsel %vm1464, %v2481, 0.0
      %v2835 = vadd.f32 %v2833, %v2834
      %v2836 = vsel %vm1464, %v2483, 0.0
      %v2837 = vadd.f32 %v2835, %v2836
      %v2838 = vsel %vm1464, %v2485, 0.0
      %v2839 = vadd.f32 %v2837, %v2838
      %v2840 = vsel %vm1464, %v2487, 0.0
      %v2841 = vadd.f32 %v2839, %v2840
      %v2842 = vsel %vm1464, %v2474, 0.0
      %v2843 = vsel %vm1464, %v2476, 0.0
      %v2844 = vadd.f32 %v2842, %v2843
      %v2845 = vsel %vm1464, %v2478, 0.0
      %v2846 = vadd.f32 %v2844, %v2845
      %v2847 = vsel %vm1464, %v2480, 0.0
      %v2848 = vadd.f32 %v2846, %v2847
      %v2849 = vsel %vm1464, %v2482, 0.0
      %v2850 = vadd.f32 %v2848, %v2849
      %v2851 = vsel %vm1464, %v2484, 0.0
      %v2852 = vadd.f32 %v2850, %v2851
      %v2853 = vsel %vm1464, %v2486, 0.0
      %v2854 = vadd.f32 %v2852, %v2853
      %v2855 = vsel %vm1464, %v2488, 0.0
      %v2856 = vadd.f32 %v2854, %v2855
      %v2857 = vsel %vm1464, %v2489, 0.0
      %v2858 = vsel %vm1464, %v2491, 0.0
      %v2859 = vadd.f32 %v2857, %v2858
      %v2860 = vsel %vm1464, %v2493, 0.0
      %v2861 = vadd.f32 %v2859, %v2860
      %v2862 = vsel %vm1464, %v2495, 0.0
      %v2863 = vadd.f32 %v2861, %v2862
      %v2864 = vsel %vm1464, %v2497, 0.0
      %v2865 = vadd.f32 %v2863, %v2864
      %v2866 = vsel %vm1464, %v2499, 0.0
      %v2867 = vadd.f32 %v2865, %v2866
      %v2868 = vsel %vm1464, %v2501, 0.0
      %v2869 = vadd.f32 %v2867, %v2868
      %v2870 = vsel %vm1464, %v2503, 0.0
      %v2871 = vadd.f32 %v2869, %v2870
      %v2872 = vsel %vm1464, %v2490, 0.0
      %v2873 = vsel %vm1464, %v2492, 0.0
      %v2874 = vadd.f32 %v2872, %v2873
      %v2875 = vsel %vm1464, %v2494, 0.0
      %v2876 = vadd.f32 %v2874, %v2875
      %v2877 = vsel %vm1464, %v2496, 0.0
      %v2878 = vadd.f32 %v2876, %v2877
      %v2879 = vsel %vm1464, %v2498, 0.0
      %v2880 = vadd.f32 %v2878, %v2879
      %v2881 = vsel %vm1464, %v2500, 0.0
      %v2882 = vadd.f32 %v2880, %v2881
      %v2883 = vsel %vm1464, %v2502, 0.0
      %v2884 = vadd.f32 %v2882, %v2883
      %v2885 = vsel %vm1464, %v2504, 0.0
      %v2886 = vadd.f32 %v2884, %v2885
      %v2887 = vsel %vm1464, %v2505, 0.0
      %v2888 = vsel %vm1464, %v2507, 0.0
      %v2889 = vadd.f32 %v2887, %v2888
      %v2890 = vsel %vm1464, %v2509, 0.0
      %v2891 = vadd.f32 %v2889, %v2890
      %v2892 = vsel %vm1464, %v2511, 0.0
      %v2893 = vadd.f32 %v2891, %v2892
      %v2894 = vsel %vm1464, %v2513, 0.0
      %v2895 = vadd.f32 %v2893, %v2894
      %v2896 = vsel %vm1464, %v2515, 0.0
      %v2897 = vadd.f32 %v2895, %v2896
      %v2898 = vsel %vm1464, %v2517, 0.0
      %v2899 = vadd.f32 %v2897, %v2898
      %v2900 = vsel %vm1464, %v2519, 0.0
      %v2901 = vadd.f32 %v2899, %v2900
      %v2902 = vsel %vm1464, %v2506, 0.0
      %v2903 = vsel %vm1464, %v2508, 0.0
      %v2904 = vadd.f32 %v2902, %v2903
      %v2905 = vsel %vm1464, %v2510, 0.0
      %v2906 = vadd.f32 %v2904, %v2905
      %v2907 = vsel %vm1464, %v2512, 0.0
      %v2908 = vadd.f32 %v2906, %v2907
      %v2909 = vsel %vm1464, %v2514, 0.0
      %v2910 = vadd.f32 %v2908, %v2909
      %v2911 = vsel %vm1464, %v2516, 0.0
      %v2912 = vadd.f32 %v2910, %v2911
      %v2913 = vsel %vm1464, %v2518, 0.0
      %v2914 = vadd.f32 %v2912, %v2913
      %v2915 = vsel %vm1464, %v2520, 0.0
      %v2916 = vadd.f32 %v2914, %v2915
      %v2917 = vsel %vm1464, %v2521, 0.0
      %v2918 = vsel %vm1464, %v2523, 0.0
      %v2919 = vadd.f32 %v2917, %v2918
      %v2920 = vsel %vm1464, %v2525, 0.0
      %v2921 = vadd.f32 %v2919, %v2920
      %v2922 = vsel %vm1464, %v2527, 0.0
      %v2923 = vadd.f32 %v2921, %v2922
      %v2924 = vsel %vm1464, %v2529, 0.0
      %v2925 = vadd.f32 %v2923, %v2924
      %v2926 = vsel %vm1464, %v2531, 0.0
      %v2927 = vadd.f32 %v2925, %v2926
      %v2928 = vsel %vm1464, %v2533, 0.0
      %v2929 = vadd.f32 %v2927, %v2928
      %v2930 = vsel %vm1464, %v2535, 0.0
      %v2931 = vadd.f32 %v2929, %v2930
      %v2932 = vsel %vm1464, %v2522, 0.0
      %v2933 = vsel %vm1464, %v2524, 0.0
      %v2934 = vadd.f32 %v2932, %v2933
      %v2935 = vsel %vm1464, %v2526, 0.0
      %v2936 = vadd.f32 %v2934, %v2935
      %v2937 = vsel %vm1464, %v2528, 0.0
      %v2938 = vadd.f32 %v2936, %v2937
      %v2939 = vsel %vm1464, %v2530, 0.0
      %v2940 = vadd.f32 %v2938, %v2939
      %v2941 = vsel %vm1464, %v2532, 0.0
      %v2942 = vadd.f32 %v2940, %v2941
      %v2943 = vsel %vm1464, %v2534, 0.0
      %v2944 = vadd.f32 %v2942, %v2943
      %v2945 = vsel %vm1464, %v2536, 0.0
      %v2946 = vadd.f32 %v2944, %v2945
      %v2947 = vsel %vm1464, %v2537, 0.0
      %v2948 = vsel %vm1464, %v2539, 0.0
      %v2949 = vadd.f32 %v2947, %v2948
      %v2950 = vsel %vm1464, %v2541, 0.0
      %v2951 = vadd.f32 %v2949, %v2950
      %v2952 = vsel %vm1464, %v2543, 0.0
      %v2953 = vadd.f32 %v2951, %v2952
      %v2954 = vsel %vm1464, %v2545, 0.0
      %v2955 = vadd.f32 %v2953, %v2954
      %v2956 = vsel %vm1464, %v2547, 0.0
      %v2957 = vadd.f32 %v2955, %v2956
      %v2958 = vsel %vm1464, %v2549, 0.0
      %v2959 = vadd.f32 %v2957, %v2958
      %v2960 = vsel %vm1464, %v2551, 0.0
      %v2961 = vadd.f32 %v2959, %v2960
      %v2962 = vsel %vm1464, %v2538, 0.0
      %v2963 = vsel %vm1464, %v2540, 0.0
      %v2964 = vadd.f32 %v2962, %v2963
      %v2965 = vsel %vm1464, %v2542, 0.0
      %v2966 = vadd.f32 %v2964, %v2965
      %v2967 = vsel %vm1464, %v2544, 0.0
      %v2968 = vadd.f32 %v2966, %v2967
      %v2969 = vsel %vm1464, %v2546, 0.0
      %v2970 = vadd.f32 %v2968, %v2969
      %v2971 = vsel %vm1464, %v2548, 0.0
      %v2972 = vadd.f32 %v2970, %v2971
      %v2973 = vsel %vm1464, %v2550, 0.0
      %v2974 = vadd.f32 %v2972, %v2973
      %v2975 = vsel %vm1464, %v2552, 0.0
      %v2976 = vadd.f32 %v2974, %v2975
      %v2977 = vsel %vm1464, %v2553, 0.0
      %v2978 = vsel %vm1464, %v2555, 0.0
      %v2979 = vadd.f32 %v2977, %v2978
      %v2980 = vsel %vm1464, %v2557, 0.0
      %v2981 = vadd.f32 %v2979, %v2980
      %v2982 = vsel %vm1464, %v2559, 0.0
      %v2983 = vadd.f32 %v2981, %v2982
      %v2984 = vsel %vm1464, %v2561, 0.0
      %v2985 = vadd.f32 %v2983, %v2984
      %v2986 = vsel %vm1464, %v2563, 0.0
      %v2987 = vadd.f32 %v2985, %v2986
      %v2988 = vsel %vm1464, %v2565, 0.0
      %v2989 = vadd.f32 %v2987, %v2988
      %v2990 = vsel %vm1464, %v2567, 0.0
      %v2991 = vadd.f32 %v2989, %v2990
      %v2992 = vsel %vm1464, %v2554, 0.0
      %v2993 = vsel %vm1464, %v2556, 0.0
      %v2994 = vadd.f32 %v2992, %v2993
      %v2995 = vsel %vm1464, %v2558, 0.0
      %v2996 = vadd.f32 %v2994, %v2995
      %v2997 = vsel %vm1464, %v2560, 0.0
      %v2998 = vadd.f32 %v2996, %v2997
      %v2999 = vsel %vm1464, %v2562, 0.0
      %v3000 = vadd.f32 %v2998, %v2999
      %v3001 = vsel %vm1464, %v2564, 0.0
      %v3002 = vadd.f32 %v3000, %v3001
      %v3003 = vsel %vm1464, %v2566, 0.0
      %v3004 = vadd.f32 %v3002, %v3003
      %v3005 = vsel %vm1464, %v2568, 0.0
      %v3006 = vadd.f32 %v3004, %v3005
      %v3007 = vsel %vm1464, %v2569, 0.0
      %v3008 = vsel %vm1464, %v2571, 0.0
      %v3009 = vadd.f32 %v3007, %v3008
      %v3010 = vsel %vm1464, %v2573, 0.0
      %v3011 = vadd.f32 %v3009, %v3010
      %v3012 = vsel %vm1464, %v2575, 0.0
      %v3013 = vadd.f32 %v3011, %v3012
      %v3014 = vsel %vm1464, %v2577, 0.0
      %v3015 = vadd.f32 %v3013, %v3014
      %v3016 = vsel %vm1464, %v2579, 0.0
      %v3017 = vadd.f32 %v3015, %v3016
      %v3018 = vsel %vm1464, %v2581, 0.0
      %v3019 = vadd.f32 %v3017, %v3018
      %v3020 = vsel %vm1464, %v2583, 0.0
      %v3021 = vadd.f32 %v3019, %v3020
      %v3022 = vsel %vm1464, %v2570, 0.0
      %v3023 = vsel %vm1464, %v2572, 0.0
      %v3024 = vadd.f32 %v3022, %v3023
      %v3025 = vsel %vm1464, %v2574, 0.0
      %v3026 = vadd.f32 %v3024, %v3025
      %v3027 = vsel %vm1464, %v2576, 0.0
      %v3028 = vadd.f32 %v3026, %v3027
      %v3029 = vsel %vm1464, %v2578, 0.0
      %v3030 = vadd.f32 %v3028, %v3029
      %v3031 = vsel %vm1464, %v2580, 0.0
      %v3032 = vadd.f32 %v3030, %v3031
      %v3033 = vsel %vm1464, %v2582, 0.0
      %v3034 = vadd.f32 %v3032, %v3033
      %v3035 = vsel %vm1464, %v2584, 0.0
      %v3036 = vadd.f32 %v3034, %v3035
      %v3037 = vsel %vm1464, %v2585, 0.0
      %v3038 = vsel %vm1464, %v2587, 0.0
      %v3039 = vadd.f32 %v3037, %v3038
      %v3040 = vsel %vm1464, %v2589, 0.0
      %v3041 = vadd.f32 %v3039, %v3040
      %v3042 = vsel %vm1464, %v2591, 0.0
      %v3043 = vadd.f32 %v3041, %v3042
      %v3044 = vsel %vm1464, %v2593, 0.0
      %v3045 = vadd.f32 %v3043, %v3044
      %v3046 = vsel %vm1464, %v2595, 0.0
      %v3047 = vadd.f32 %v3045, %v3046
      %v3048 = vsel %vm1464, %v2597, 0.0
      %v3049 = vadd.f32 %v3047, %v3048
      %v3050 = vsel %vm1464, %v2599, 0.0
      %v3051 = vadd.f32 %v3049, %v3050
      %v3052 = vsel %vm1464, %v2586, 0.0
      %v3053 = vsel %vm1464, %v2588, 0.0
      %v3054 = vadd.f32 %v3052, %v3053
      %v3055 = vsel %vm1464, %v2590, 0.0
      %v3056 = vadd.f32 %v3054, %v3055
      %v3057 = vsel %vm1464, %v2592, 0.0
      %v3058 = vadd.f32 %v3056, %v3057
      %v3059 = vsel %vm1464, %v2594, 0.0
      %v3060 = vadd.f32 %v3058, %v3059
      %v3061 = vsel %vm1464, %v2596, 0.0
      %v3062 = vadd.f32 %v3060, %v3061
      %v3063 = vsel %vm1464, %v2598, 0.0
      %v3064 = vadd.f32 %v3062, %v3063
      %v3065 = vsel %vm1464, %v2600, 0.0
      %v3066 = vadd.f32 %v3064, %v3065
      %v3067 = vsel %vm1464, %v2601, 0.0
      %v3068 = vsel %vm1464, %v2603, 0.0
      %v3069 = vadd.f32 %v3067, %v3068
      %v3070 = vsel %vm1464, %v2605, 0.0
      %v3071 = vadd.f32 %v3069, %v3070
      %v3072 = vsel %vm1464, %v2607, 0.0
      %v3073 = vadd.f32 %v3071, %v3072
      %v3074 = vsel %vm1464, %v2609, 0.0
      %v3075 = vadd.f32 %v3073, %v3074
      %v3076 = vsel %vm1464, %v2611, 0.0
      %v3077 = vadd.f32 %v3075, %v3076
      %v3078 = vsel %vm1464, %v2613, 0.0
      %v3079 = vadd.f32 %v3077, %v3078
      %v3080 = vsel %vm1464, %v2615, 0.0
      %v3081 = vadd.f32 %v3079, %v3080
      %v3082 = vsel %vm1464, %v2602, 0.0
      %v3083 = vsel %vm1464, %v2604, 0.0
      %v3084 = vadd.f32 %v3082, %v3083
      %v3085 = vsel %vm1464, %v2606, 0.0
      %v3086 = vadd.f32 %v3084, %v3085
      %v3087 = vsel %vm1464, %v2608, 0.0
      %v3088 = vadd.f32 %v3086, %v3087
      %v3089 = vsel %vm1464, %v2610, 0.0
      %v3090 = vadd.f32 %v3088, %v3089
      %v3091 = vsel %vm1464, %v2612, 0.0
      %v3092 = vadd.f32 %v3090, %v3091
      %v3093 = vsel %vm1464, %v2614, 0.0
      %v3094 = vadd.f32 %v3092, %v3093
      %v3095 = vsel %vm1464, %v2616, 0.0
      %v3096 = vadd.f32 %v3094, %v3095
      %v3097 = vadd.f32 %v1945, %v2631
      %v3098 = vadd.f32 %v1946, %v2646
      %v3099 = vadd.f32 %v1947, %v2661
      %v3100 = vadd.f32 %v1948, %v2676
      %v3101 = vadd.f32 %v1949, %v2691
      %v3102 = vadd.f32 %v1950, %v2706
      %v3103 = vadd.f32 %v1951, %v2721
      %v3104 = vadd.f32 %v1952, %v2736
      %v3105 = vadd.f32 %v1953, %v2751
      %v3106 = vadd.f32 %v1954, %v2766
      %v3107 = vadd.f32 %v1955, %v2781
      %v3108 = vadd.f32 %v1956, %v2796
      %v3109 = vadd.f32 %v1957, %v2811
      %v3110 = vadd.f32 %v1958, %v2826
      %v3111 = vadd.f32 %v1959, %v2841
      %v3112 = vadd.f32 %v1960, %v2856
      %v3113 = vadd.f32 %v1961, %v2871
      %v3114 = vadd.f32 %v1962, %v2886
      %v3115 = vadd.f32 %v1963, %v2901
      %v3116 = vadd.f32 %v1964, %v2916
      %v3117 = vadd.f32 %v1965, %v2931
      %v3118 = vadd.f32 %v1966, %v2946
      %v3119 = vadd.f32 %v1967, %v2961
      %v3120 = vadd.f32 %v1968, %v2976
      %v3121 = vadd.f32 %v1969, %v2991
      %v3122 = vadd.f32 %v1970, %v3006
      %v3123 = vadd.f32 %v1971, %v3021
      %v3124 = vadd.f32 %v1972, %v3036
      %v3125 = vadd.f32 %v1973, %v3051
      %v3126 = vadd.f32 %v1974, %v3066
      %v3127 = vadd.f32 %v1975, %v3081
      %v3128 = vadd.f32 %v1976, %v3096
      %v3129 = vld [vmem:[%s5] sm:$0xf]
      %v3130 = vld [vmem:[%s5 + $0x4] sm:$0xf]
      %v3131 = vld [vmem:[%s5 + $0x8] sm:$0xf]
      %v3132 = vld [vmem:[%s5 + $0xc] sm:$0xf]
      %v3133 = vld [vmem:[%s5 + $0x10] sm:$0x3]
      %v3134 = vpack.c.bf16 %v3098, %v3097
      %v3135 = vpack.c.bf16 %v3100, %v3099
      %v3136 = vpack.c.bf16 %v3102, %v3101
      %v3137 = vpack.c.bf16 %v3104, %v3103
      %v3138 = vpack.c.bf16 %v3106, %v3105
      %v3139 = vpack.c.bf16 %v3108, %v3107
      %v3140 = vpack.c.bf16 %v3110, %v3109
      %v3141 = vpack.c.bf16 %v3112, %v3111
      %v3142 = vpack.c.bf16 %v3114, %v3113
      %v3143 = vpack.c.bf16 %v3116, %v3115
      %v3144 = vpack.c.bf16 %v3118, %v3117
      %v3145 = vpack.c.bf16 %v3120, %v3119
      %v3146 = vpack.c.bf16 %v3122, %v3121
      %v3147 = vpack.c.bf16 %v3124, %v3123
      %v3148 = vpack.c.bf16 %v3126, %v3125
      %v3149 = vpack.c.bf16 %v3128, %v3127
      %v3151 = vsel %vm382, %v3133, 0
      %3153 = vmatpush.bf16.msra.mxu0 0
      %3154 = vmatpush.bf16.msra.mxu0 0
      %3155 = vmatpush.bf16.msra.mxu0 0
      %3156 = vmatpush.bf16.msra.mxu0 0
      %3157 = vmatpush.bf16.msra.mxu0 0
      %3158 = vmatpush.bf16.msra.mxu0 0
      %3159 = vmatpush.bf16.msra.mxu0 0
      %3160 = vmatpush.bf16.msra.mxu0 %v3151
      %3161 = vmatmul.bf16.gmra.mxu0 %v335
      %v3162 = vpop.f32.mrf.mxu0
      %v3163 = vadd.f32 0.0, %v3162
      %v3164 = vpop.f32.mrf.mxu0
      %v3165 = vadd.f32 0.0, %v3164
      %3166 = vmatmul.bf16.gmra.mxu0 %v338
      %v3167 = vpop.f32.mrf.mxu0
      %v3168 = vadd.f32 0.0, %v3167
      %v3169 = vpop.f32.mrf.mxu0
      %v3170 = vadd.f32 0.0, %v3169
      %3171 = vmatmul.bf16.gmra.mxu0 %v341
      %v3172 = vpop.f32.mrf.mxu0
      %v3173 = vadd.f32 0.0, %v3172
      %v3174 = vpop.f32.mrf.mxu0
      %v3175 = vadd.f32 0.0, %v3174
      %3176 = vmatmul.bf16.gmra.mxu0 %v344
      %v3177 = vpop.f32.mrf.mxu0
      %v3178 = vadd.f32 0.0, %v3177
      %v3179 = vpop.f32.mrf.mxu0
      %v3180 = vadd.f32 0.0, %v3179
      %3181 = vmatmul.bf16.gmra.mxu0 %v347
      %v3182 = vpop.f32.mrf.mxu0
      %v3183 = vadd.f32 0.0, %v3182
      %v3184 = vpop.f32.mrf.mxu0
      %v3185 = vadd.f32 0.0, %v3184
      %3186 = vmatmul.bf16.gmra.mxu0 %v350
      %v3187 = vpop.f32.mrf.mxu0
      %v3188 = vadd.f32 0.0, %v3187
      %v3189 = vpop.f32.mrf.mxu0
      %v3190 = vadd.f32 0.0, %v3189
      %3191 = vmatmul.bf16.gmra.mxu0 %v353
      %v3192 = vpop.f32.mrf.mxu0
      %v3193 = vadd.f32 0.0, %v3192
      %v3194 = vpop.f32.mrf.mxu0
      %v3195 = vadd.f32 0.0, %v3194
      %3196 = vmatmul.bf16.gmra.mxu0 %v356
      %v3197 = vpop.f32.mrf.mxu0
      %v3198 = vadd.f32 0.0, %v3197
      %v3199 = vpop.f32.mrf.mxu0
      %v3200 = vadd.f32 0.0, %v3199
      %3201 = vmatmul.bf16.gmra.mxu0 %v359
      %v3202 = vpop.f32.mrf.mxu0
      %v3203 = vadd.f32 0.0, %v3202
      %v3204 = vpop.f32.mrf.mxu0
      %v3205 = vadd.f32 0.0, %v3204
      %3206 = vmatmul.bf16.gmra.mxu0 %v362
      %v3207 = vpop.f32.mrf.mxu0
      %v3208 = vadd.f32 0.0, %v3207
      %v3209 = vpop.f32.mrf.mxu0
      %v3210 = vadd.f32 0.0, %v3209
      %3211 = vmatmul.bf16.gmra.mxu0 %v365
      %v3212 = vpop.f32.mrf.mxu0
      %v3213 = vadd.f32 0.0, %v3212
      %v3214 = vpop.f32.mrf.mxu0
      %v3215 = vadd.f32 0.0, %v3214
      %3216 = vmatmul.bf16.gmra.mxu0 %v368
      %v3217 = vpop.f32.mrf.mxu0
      %v3218 = vadd.f32 0.0, %v3217
      %v3219 = vpop.f32.mrf.mxu0
      %v3220 = vadd.f32 0.0, %v3219
      %3221 = vmatmul.bf16.gmra.mxu0 %v371
      %v3222 = vpop.f32.mrf.mxu0
      %v3223 = vadd.f32 0.0, %v3222
      %v3224 = vpop.f32.mrf.mxu0
      %v3225 = vadd.f32 0.0, %v3224
      %3226 = vmatmul.bf16.gmra.mxu0 %v374
      %v3227 = vpop.f32.mrf.mxu0
      %v3228 = vadd.f32 0.0, %v3227
      %v3229 = vpop.f32.mrf.mxu0
      %v3230 = vadd.f32 0.0, %v3229
      %3231 = vmatmul.bf16.gmra.mxu0 %v377
      %v3232 = vpop.f32.mrf.mxu0
      %v3233 = vadd.f32 0.0, %v3232
      %v3234 = vpop.f32.mrf.mxu0
      %v3235 = vadd.f32 0.0, %v3234
      %3236 = vmatmul.bf16.gmra.mxu0 %v380
      %v3237 = vpop.f32.mrf.mxu0
      %v3238 = vadd.f32 0.0, %v3237
      %v3239 = vpop.f32.mrf.mxu0
      %v3240 = vadd.f32 0.0, %v3239
      %3241 = vdwg.mxu0
      %v3246 = vunpack.c.l.b16 %v3129
      %v3247 = vunpack.c.l.b16 %v3130
      %v3248 = vunpack.c.l.b16 %v3131
      %v3249 = vunpack.c.l.b16 %v3132
      %v3250 = vpack.c.b16 %v3247, %v3246
      %v3251 = vpack.c.b16 %v3249, %v3248
      %v3255 = vsel %vm1464, %v3134, 0
      %v3258 = vsel %vm1464, %v3135, 0
      %v3261 = vsel %vm1464, %v3136, 0
      %v3264 = vsel %vm1464, %v3137, 0
      %v3267 = vsel %vm1464, %v3138, 0
      %v3270 = vsel %vm1464, %v3139, 0
      %v3273 = vsel %vm1464, %v3140, 0
      %v3276 = vsel %vm1464, %v3141, 0
      %v3279 = vsel %vm1464, %v3142, 0
      %v3282 = vsel %vm1464, %v3143, 0
      %v3285 = vsel %vm1464, %v3144, 0
      %v3288 = vsel %vm1464, %v3145, 0
      %v3291 = vsel %vm1464, %v3146, 0
      %v3294 = vsel %vm1464, %v3147, 0
      %v3297 = vsel %vm1464, %v3148, 0
      %v3300 = vsel %vm1464, %v3149, 0
      %3302 = vmatpush.bf16.msra.mxu0 0
      %3303 = vmatpush.bf16.msra.mxu0 0
      %3304 = vmatpush.bf16.msra.mxu0 0
      %3305 = vmatpush.bf16.msra.mxu0 0
      %3306 = vmatpush.bf16.msra.mxu0 0
      %3307 = vmatpush.bf16.msra.mxu0 0
      %3308 = vmatpush.bf16.msra.mxu0 %v3251
      %3309 = vmatpush.bf16.msra.mxu0 %v3250
      %3310 = vmatmul.bf16.gmra.mxu0 %v3255
      %v3311 = vpop.f32.mrf.mxu0
      %v3312 = vadd.f32 %v3163, %v3311
      %v3313 = vpop.f32.mrf.mxu0
      %v3314 = vadd.f32 %v3165, %v3313
      %3315 = vmatmul.bf16.gmra.mxu0 %v3258
      %v3316 = vpop.f32.mrf.mxu0
      %v3317 = vadd.f32 %v3168, %v3316
      %v3318 = vpop.f32.mrf.mxu0
      %v3319 = vadd.f32 %v3170, %v3318
      %3320 = vmatmul.bf16.gmra.mxu0 %v3261
      %v3321 = vpop.f32.mrf.mxu0
      %v3322 = vadd.f32 %v3173, %v3321
      %v3323 = vpop.f32.mrf.mxu0
      %v3324 = vadd.f32 %v3175, %v3323
      %3325 = vmatmul.bf16.gmra.mxu0 %v3264
      %v3326 = vpop.f32.mrf.mxu0
      %v3327 = vadd.f32 %v3178, %v3326
      %v3328 = vpop.f32.mrf.mxu0
      %v3329 = vadd.f32 %v3180, %v3328
      %3330 = vmatmul.bf16.gmra.mxu0 %v3267
      %v3331 = vpop.f32.mrf.mxu0
      %v3332 = vadd.f32 %v3183, %v3331
      %v3333 = vpop.f32.mrf.mxu0
      %v3334 = vadd.f32 %v3185, %v3333
      %3335 = vmatmul.bf16.gmra.mxu0 %v3270
      %v3336 = vpop.f32.mrf.mxu0
      %v3337 = vadd.f32 %v3188, %v3336
      %v3338 = vpop.f32.mrf.mxu0
      %v3339 = vadd.f32 %v3190, %v3338
      %3340 = vmatmul.bf16.gmra.mxu0 %v3273
      %v3341 = vpop.f32.mrf.mxu0
      %v3342 = vadd.f32 %v3193, %v3341
      %v3343 = vpop.f32.mrf.mxu0
      %v3344 = vadd.f32 %v3195, %v3343
      %3345 = vmatmul.bf16.gmra.mxu0 %v3276
      %v3346 = vpop.f32.mrf.mxu0
      %v3347 = vadd.f32 %v3198, %v3346
      %v3348 = vpop.f32.mrf.mxu0
      %v3349 = vadd.f32 %v3200, %v3348
      %3350 = vmatmul.bf16.gmra.mxu0 %v3279
      %v3351 = vpop.f32.mrf.mxu0
      %v3352 = vadd.f32 %v3203, %v3351
      %v3353 = vpop.f32.mrf.mxu0
      %v3354 = vadd.f32 %v3205, %v3353
      %3355 = vmatmul.bf16.gmra.mxu0 %v3282
      %v3356 = vpop.f32.mrf.mxu0
      %v3357 = vadd.f32 %v3208, %v3356
      %v3358 = vpop.f32.mrf.mxu0
      %v3359 = vadd.f32 %v3210, %v3358
      %3360 = vmatmul.bf16.gmra.mxu0 %v3285
      %v3361 = vpop.f32.mrf.mxu0
      %v3362 = vadd.f32 %v3213, %v3361
      %v3363 = vpop.f32.mrf.mxu0
      %v3364 = vadd.f32 %v3215, %v3363
      %3365 = vmatmul.bf16.gmra.mxu0 %v3288
      %v3366 = vpop.f32.mrf.mxu0
      %v3367 = vadd.f32 %v3218, %v3366
      %v3368 = vpop.f32.mrf.mxu0
      %v3369 = vadd.f32 %v3220, %v3368
      %3370 = vmatmul.bf16.gmra.mxu0 %v3291
      %v3371 = vpop.f32.mrf.mxu0
      %v3372 = vadd.f32 %v3223, %v3371
      %v3373 = vpop.f32.mrf.mxu0
      %v3374 = vadd.f32 %v3225, %v3373
      %3375 = vmatmul.bf16.gmra.mxu0 %v3294
      %v3376 = vpop.f32.mrf.mxu0
      %v3377 = vadd.f32 %v3228, %v3376
      %v3378 = vpop.f32.mrf.mxu0
      %v3379 = vadd.f32 %v3230, %v3378
      %3380 = vmatmul.bf16.gmra.mxu0 %v3297
      %v3381 = vpop.f32.mrf.mxu0
      %v3382 = vadd.f32 %v3233, %v3381
      %v3383 = vpop.f32.mrf.mxu0
      %v3384 = vadd.f32 %v3235, %v3383
      %3385 = vmatmul.bf16.gmra.mxu0 %v3300
      %v3386 = vpop.f32.mrf.mxu0
      %v3387 = vadd.f32 %v3238, %v3386
      %v3388 = vpop.f32.mrf.mxu0
      %v3389 = vadd.f32 %v3240, %v3388
      %3390 = vdwg.mxu0
      %v3391 = vld [vmem:[%s6] sm:$0x1]
      %v3393 = vperm.slane %v3391, 0
      %v3395 = vadd.f32 %v3312, %v3393
      %v3396 = vadd.f32 %v3314, %v3393
      %v3397 = vadd.f32 %v3317, %v3393
      %v3398 = vadd.f32 %v3319, %v3393
      %v3399 = vadd.f32 %v3322, %v3393
      %v3400 = vadd.f32 %v3324, %v3393
      %v3401 = vadd.f32 %v3327, %v3393
      %v3402 = vadd.f32 %v3329, %v3393
      %v3403 = vadd.f32 %v3332, %v3393
      %v3404 = vadd.f32 %v3334, %v3393
      %v3405 = vadd.f32 %v3337, %v3393
      %v3406 = vadd.f32 %v3339, %v3393
      %v3407 = vadd.f32 %v3342, %v3393
      %v3408 = vadd.f32 %v3344, %v3393
      %v3409 = vadd.f32 %v3347, %v3393
      %v3410 = vadd.f32 %v3349, %v3393
      %v3411 = vadd.f32 %v3352, %v3393
      %v3412 = vadd.f32 %v3354, %v3393
      %v3413 = vadd.f32 %v3357, %v3393
      %v3414 = vadd.f32 %v3359, %v3393
      %v3415 = vadd.f32 %v3362, %v3393
      %v3416 = vadd.f32 %v3364, %v3393
      %v3417 = vadd.f32 %v3367, %v3393
      %v3418 = vadd.f32 %v3369, %v3393
      %v3419 = vadd.f32 %v3372, %v3393
      %v3420 = vadd.f32 %v3374, %v3393
      %v3421 = vadd.f32 %v3377, %v3393
      %v3422 = vadd.f32 %v3379, %v3393
      %v3423 = vadd.f32 %v3382, %v3393
      %v3424 = vadd.f32 %v3384, %v3393
      %v3425 = vadd.f32 %v3387, %v3393
      %v3426 = vadd.f32 %v3389, %v3393
      %3427 = vst.msk [vmem:[%s278] sm:$0xff] %vm1464, %v3395
      %3428 = vst.msk [vmem:[%s278 + $0x8] sm:$0xff] %vm1464, %v3396
      %3429 = vst.msk [vmem:[%s278 + $0x10] sm:$0xff] %vm1464, %v3397
      %3430 = vst.msk [vmem:[%s278 + $0x18] sm:$0xff] %vm1464, %v3398
      %3431 = vst.msk [vmem:[%s278 + $0x20] sm:$0xff] %vm1464, %v3399
      %3432 = vst.msk [vmem:[%s278 + $0x28] sm:$0xff] %vm1464, %v3400
      %3433 = vst.msk [vmem:[%s278 + $0x30] sm:$0xff] %vm1464, %v3401
      %3434 = vst.msk [vmem:[%s278 + $0x38] sm:$0xff] %vm1464, %v3402
      %3435 = vst.msk [vmem:[%s278 + $0x40] sm:$0xff] %vm1464, %v3403
      %3436 = vst.msk [vmem:[%s278 + $0x48] sm:$0xff] %vm1464, %v3404
      %3437 = vst.msk [vmem:[%s278 + $0x50] sm:$0xff] %vm1464, %v3405
      %3438 = vst.msk [vmem:[%s278 + $0x58] sm:$0xff] %vm1464, %v3406
      %3439 = vst.msk [vmem:[%s278 + $0x60] sm:$0xff] %vm1464, %v3407
      %3440 = vst.msk [vmem:[%s278 + $0x68] sm:$0xff] %vm1464, %v3408
      %3441 = vst.msk [vmem:[%s278 + $0x70] sm:$0xff] %vm1464, %v3409
      %3442 = vst.msk [vmem:[%s278 + $0x78] sm:$0xff] %vm1464, %v3410
      %3443 = vst.msk [vmem:[%s278 + $0x80] sm:$0xff] %vm1464, %v3411
      %3444 = vst.msk [vmem:[%s278 + $0x88] sm:$0xff] %vm1464, %v3412
      %3445 = vst.msk [vmem:[%s278 + $0x90] sm:$0xff] %vm1464, %v3413
      %3446 = vst.msk [vmem:[%s278 + $0x98] sm:$0xff] %vm1464, %v3414
      %3447 = vst.msk [vmem:[%s278 + $0xa0] sm:$0xff] %vm1464, %v3415
      %3448 = vst.msk [vmem:[%s278 + $0xa8] sm:$0xff] %vm1464, %v3416
      %3449 = vst.msk [vmem:[%s278 + $0xb0] sm:$0xff] %vm1464, %v3417
      %3450 = vst.msk [vmem:[%s278 + $0xb8] sm:$0xff] %vm1464, %v3418
      %3451 = vst.msk [vmem:[%s278 + $0xc0] sm:$0xff] %vm1464, %v3419
      %3452 = vst.msk [vmem:[%s278 + $0xc8] sm:$0xff] %vm1464, %v3420
      %3453 = vst.msk [vmem:[%s278 + $0xd0] sm:$0xff] %vm1464, %v3421
      %3454 = vst.msk [vmem:[%s278 + $0xd8] sm:$0xff] %vm1464, %v3422
      %3455 = vst.msk [vmem:[%s278 + $0xe0] sm:$0xff] %vm1464, %v3423
      %3456 = vst.msk [vmem:[%s278 + $0xe8] sm:$0xff] %vm1464, %v3424
      %3457 = vst.msk [vmem:[%s278 + $0xf0] sm:$0xff] %vm1464, %v3425
      %3458 = vst.msk [vmem:[%s278 + $0xf8] sm:$0xff] %vm1464, %v3426
      %p3459 = scmp.lt.s32.totalorder %s18, 1
      %s3460 = scalar_select %p3459, %s18, 1
      %s3461 = smul.addr %s3460, 32
      %s3462 = smul.addr %s3461, 8
      %s3463 = scalar_lea.vmem %s7, %s3462
      // Predicated region
      $region49: #{tpu_custom_call.1} parent=47 // pred_check
        %p3464 = pneg %p188
      $region50: #{tpu_custom_call.1} parent=47 // pred_check_branch
        %3466 = sbr.rel (%p3464) target = $region52
      $region51: #{tpu_custom_call.1} parent=47 // pred_region
        _
      $region52: #{tpu_custom_call.1} parent=47 // pred_fallthru
        _
    $region48: #{tpu_custom_call.1} parent=5 // pred_fallthru
      _
    %p3467 = scmp.le.s32.totalorder 2, %s13
    // Predicated region
    $region53: #{tpu_custom_call.1} parent=5 // pred_check
      %p3468 = pneg %p3467
    $region54: #{tpu_custom_call.1} parent=5 // pred_check_branch
      %3470 = sbr.rel (%p3468) target = $region56
    $region55: #{tpu_custom_call.1} parent=5 // pred_region
      %s3471 = ssub.s32 %s13, 2
      // Predicated region
      $region57: #{tpu_custom_call.1} parent=55 // pred_check
        %p3472 = pneg %p194
      $region58: #{tpu_custom_call.1} parent=55 // pred_check_branch
        %3474 = sbr.rel (%p3472) target = $region60
      $region59: #{tpu_custom_call.1} parent=55 // pred_region
        %p3475 = scmp.lt.s32.totalorder %s19, 1
        %s3476 = scalar_select %p3475, %s19, 1
        %s3477 = smul.addr %s3476, 32
        %s3478 = smul.addr %s3477, 8
        %s3479 = scalar_lea.vmem %s7, %s3478
      $region60: #{tpu_custom_call.1} parent=55 // pred_fallthru
        _
    $region56: #{tpu_custom_call.1} parent=5 // pred_fallthru
      _
  $region6: #{tpu_custom_call.1} parent=0 // loop_footer
    %s17 = sadd.s32 1, %s13
  $region7: #{tpu_custom_call.1} parent=0 // loop_footer_branch
    %12 = sbr.rel target = $region3
  $region8: #{tpu_custom_call.1} parent=0 // loop_exit
    _

</llo_original>
